<compile_context>
chip_gen: v6e
topology: v6e:2x2x1
jax: 0.10.0
libtpu: 0.0.40
codegen_flags: <defaults>
</compile_context>

<pallas_src>
import functools
import math

import numpy as np
import jax
import jax.numpy as jnp
from jax import lax
from jax.experimental import pallas as pl
from jax.experimental.pallas import tpu as pltpu


_VMEM_LIMIT = 32 * 1024 * 1024   # explicit scoped-VMEM limit; safe on v5e/v6e/v7x


def _cparams(sem):
    return pltpu.CompilerParams(dimension_semantics=sem,
                                vmem_limit_bytes=_VMEM_LIMIT)


def _tile(dim, pref, align):
    """Largest multiple of `align` that divides `dim` and is <= pref, else full dim."""
    if dim <= pref:
        return dim
    t = (pref // align) * align
    while t >= align:
        if dim % t == 0:
            return t
        t -= align
    return dim


# ----------------------------------------------------------------------------
# Pallas kernels
# ----------------------------------------------------------------------------

def _ln_math(x, g, b, eps):
    mu = jnp.mean(x, axis=-1, keepdims=True)
    var = jnp.mean((x - mu) ** 2, axis=-1, keepdims=True)
    return (x - mu) * lax.rsqrt(var + eps) * g + b


def _matmul_bias_kernel(x_ref, w_ref, b_ref, o_ref, acc_ref, *, activation):
    # Tiled y = x @ W + b, k-axis reduction with f32 VMEM accumulator.
    @pl.when(pl.program_id(2) == 0)
    def _():
        acc_ref[...] = jnp.zeros_like(acc_ref)

    acc_ref[...] += jnp.dot(x_ref[...], w_ref[...],
                            preferred_element_type=jnp.float32)

    @pl.when(pl.program_id(2) == pl.num_programs(2) - 1)
    def _():
        y = acc_ref[...] + b_ref[...]
        if activation == "relu":
            y = jnp.maximum(y, 0.0)
        o_ref[...] = y.astype(o_ref.dtype)


def _proj_residual_ln_kernel(a_ref, w_ref, b_ref, r_ref, g_ref, bb_ref, o_ref,
                             *, eps):
    # LayerNorm(residual + (a @ Wo + bo))  — attention output proj fused with LN.
    y = (jnp.dot(a_ref[...], w_ref[...], preferred_element_type=jnp.float32)
         + b_ref[...])
    o_ref[...] = _ln_math(y + r_ref[...], g_ref[...], bb_ref[...], eps)


def _ffn_residual_ln_kernel(x_ref, w1_ref, b1_ref, w2_ref, b2_ref,
                            g_ref, bb_ref, o_ref, *, eps):
    # LayerNorm(x + W2 @ relu(W1 @ x + b1) + b2)  — whole FFN fused with LN.
    x = x_ref[...]
    h = jnp.maximum(
        jnp.dot(x, w1_ref[...], preferred_element_type=jnp.float32) + b1_ref[...],
        0.0)
    y = jnp.dot(h, w2_ref[...], preferred_element_type=jnp.float32) + b2_ref[...]
    o_ref[...] = _ln_math(x + y, g_ref[...], bb_ref[...], eps)


def _layernorm_kernel(x_ref, g_ref, b_ref, o_ref, *, eps):
    o_ref[...] = _ln_math(x_ref[...], g_ref[...], b_ref[...], eps)


def _mha_kernel(q_ref, k_ref, v_ref, m_ref, o_ref, *, nhead, scale):
    # One batch row per grid step; heads are contiguous Dh-wide lane slices of E,
    # so no host-side head transposes are needed and all blocks stay lane-dense.
    q = q_ref[0]              # (Sq, E)
    k = k_ref[0]              # (Sk, E)
    v = v_ref[0]              # (Sk, E)
    mask = m_ref[...]         # (Sq, Sk) additive
    dh = q.shape[-1] // nhead
    outs = []
    for h in range(nhead):
        sl = slice(h * dh, (h + 1) * dh)
        qh = q[:, sl] * scale                             # scale folded into Q
        s = lax.dot_general(qh, k[:, sl],                 # no K transpose
                            (((1,), (1,)), ((), ())),
                            preferred_element_type=jnp.float32) + mask
        s = s - jnp.max(s, axis=-1, keepdims=True)
        p = jnp.exp(s)
        inv = 1.0 / jnp.sum(p, axis=-1, keepdims=True)    # (pl.reciprocal(approx=True) on HW)
        p = p * inv
        outs.append(jnp.dot(p, v[:, sl], preferred_element_type=jnp.float32))
    o_ref[0] = jnp.concatenate(outs, axis=-1)


def _generator_kernel(x_ref, w_ref, b_ref, o_ref):
    # logits = x @ W + b  ->  log_softmax (vocab padded to a multiple of 128;
    # padded columns carry bias -1e9 so they contribute ~0 to the logsumexp).
    logits = (jnp.dot(x_ref[...], w_ref[...], preferred_element_type=jnp.float32)
              + b_ref[...])
    z = logits - jnp.max(logits, axis=-1, keepdims=True)
    o_ref[...] = z - jnp.log(jnp.sum(jnp.exp(z), axis=-1, keepdims=True))


# ----------------------------------------------------------------------------
# Pallas wrappers
# ----------------------------------------------------------------------------

def tiled_linear(x, w, b, *, activation=None,
                 tm_pref=256, tn_pref=256, tk_pref=512):
    M, K = x.shape
    N = w.shape[1]
    tm = _tile(M, tm_pref, 8)
    tn = _tile(N, tn_pref, 128)
    tk = _tile(K, tk_pref, 128)
    kern = functools.partial(_matmul_bias_kernel, activation=activation)
    return pl.pallas_call(
        kern,
        out_shape=jax.ShapeDtypeStruct((M, N), jnp.float32),
        grid=(M // tm, N // tn, K // tk),
        in_specs=[pl.BlockSpec((tm, tk), lambda i, j, k: (i, k)),
                  pl.BlockSpec((tk, tn), lambda i, j, k: (k, j)),
                  pl.BlockSpec((1, tn), lambda i, j, k: (0, j))],
        out_specs=pl.BlockSpec((tm, tn), lambda i, j, k: (i, j)),
        scratch_shapes=[pltpu.VMEM((tm, tn), jnp.float32)],
        compiler_params=_cparams(("parallel", "parallel", "arbitrary")),
    )(x, w, b.reshape(1, N))


def proj_residual_ln(a, w, b, resid, ln, *, eps=1e-5, tm_pref=256):
    M, E = a.shape
    tm = _tile(M, tm_pref, 8)
    kern = functools.partial(_proj_residual_ln_kernel, eps=eps)
    return pl.pallas_call(
        kern,
        out_shape=jax.ShapeDtypeStruct((M, E), jnp.float32),
        grid=(M // tm,),
        in_specs=[pl.BlockSpec((tm, E), lambda i: (i, 0)),
                  pl.BlockSpec((E, E), lambda i: (0, 0)),
                  pl.BlockSpec((1, E), lambda i: (0, 0)),
                  pl.BlockSpec((tm, E), lambda i: (i, 0)),
                  pl.BlockSpec((1, E), lambda i: (0, 0)),
                  pl.BlockSpec((1, E), lambda i: (0, 0))],
        out_specs=pl.BlockSpec((tm, E), lambda i: (i, 0)),
        compiler_params=_cparams(("parallel",)),
    )(a, w, b.reshape(1, E), resid, ln["g"].reshape(1, E), ln["b"].reshape(1, E))


def ffn_residual_ln(x, w1, b1, w2, b2, ln, *, eps=1e-5, tm_pref=256):
    M, E = x.shape
    F = w1.shape[1]
    tm = _tile(M, tm_pref, 8)
    kern = functools.partial(_ffn_residual_ln_kernel, eps=eps)
    # TODO(synk): tile the F (dff) contraction inside the kernel for very large dff.
    return pl.pallas_call(
        kern,
        out_shape=jax.ShapeDtypeStruct((M, E), jnp.float32),
        grid=(M // tm,),
        in_specs=[pl.BlockSpec((tm, E), lambda i: (i, 0)),
                  pl.BlockSpec((E, F), lambda i: (0, 0)),
                  pl.BlockSpec((1, F), lambda i: (0, 0)),
                  pl.BlockSpec((F, E), lambda i: (0, 0)),
                  pl.BlockSpec((1, E), lambda i: (0, 0)),
                  pl.BlockSpec((1, E), lambda i: (0, 0)),
                  pl.BlockSpec((1, E), lambda i: (0, 0))],
        out_specs=pl.BlockSpec((tm, E), lambda i: (i, 0)),
        compiler_params=_cparams(("parallel",)),
    )(x, w1, b1.reshape(1, F), w2, b2.reshape(1, E),
      ln["g"].reshape(1, E), ln["b"].reshape(1, E))


def layernorm(x, ln, *, eps=1e-5, tm_pref=256):
    B, S, E = x.shape
    M = B * S
    tm = _tile(M, tm_pref, 8)
    kern = functools.partial(_layernorm_kernel, eps=eps)
    y = pl.pallas_call(
        kern,
        out_shape=jax.ShapeDtypeStruct((M, E), jnp.float32),
        grid=(M // tm,),
        in_specs=[pl.BlockSpec((tm, E), lambda i: (i, 0)),
                  pl.BlockSpec((1, E), lambda i: (0, 0)),
                  pl.BlockSpec((1, E), lambda i: (0, 0))],
        out_specs=pl.BlockSpec((tm, E), lambda i: (i, 0)),
        compiler_params=_cparams(("parallel",)),
    )(x.reshape(M, E), ln["g"].reshape(1, E), ln["b"].reshape(1, E))
    return y.reshape(B, S, E)


def attention(q, k, v, mask, nhead):
    B, Sq, E = q.shape
    Sk = k.shape[1]
    assert E % nhead == 0
    scale = 1.0 / math.sqrt(E // nhead)
    kern = functools.partial(_mha_kernel, nhead=nhead, scale=scale)
    return pl.pallas_call(
        kern,
        out_shape=jax.ShapeDtypeStruct((B, Sq, E), jnp.float32),
        grid=(B,),
        in_specs=[pl.BlockSpec((1, Sq, E), lambda b: (b, 0, 0)),
                  pl.BlockSpec((1, Sk, E), lambda b: (b, 0, 0)),
                  pl.BlockSpec((1, Sk, E), lambda b: (b, 0, 0)),
                  pl.BlockSpec((Sq, Sk), lambda b: (0, 0))],
        out_specs=pl.BlockSpec((1, Sq, E), lambda b: (b, 0, 0)),
        compiler_params=_cparams(("parallel",)),
    )(q, k, v, mask)


def generator(x, w, b, *, tm_pref=256):
    B, S, E = x.shape
    M = B * S
    V = w.shape[1]
    Vp = ((V + 127) // 128) * 128
    if Vp != V:
        # pad to lane-dense width; padded columns get bias -1e9 (ignored by softmax)
        w = jnp.pad(w, ((0, 0), (0, Vp - V)))
        b = jnp.pad(b, (0, Vp - V), constant_values=-1e9)
    tm = _tile(M, tm_pref, 8)
    y = pl.pallas_call(
        _generator_kernel,
        out_shape=jax.ShapeDtypeStruct((M, Vp), jnp.float32),
        grid=(M // tm,),
        in_specs=[pl.BlockSpec((tm, E), lambda i: (i, 0)),
                  pl.BlockSpec((E, Vp), lambda i: (0, 0)),
                  pl.BlockSpec((1, Vp), lambda i: (0, 0))],
        out_specs=pl.BlockSpec((tm, Vp), lambda i: (i, 0)),
        compiler_params=_cparams(("parallel",)),
    )(x.reshape(M, E), w, b.reshape(1, Vp))
    return y[:, :V].reshape(B, S, V)


# ----------------------------------------------------------------------------
# Transformer building blocks (glue orchestrating the kernels above)
# ----------------------------------------------------------------------------

def self_attention_block(p, x, mask, nhead, ln):
    B, S, E = x.shape
    x2 = x.reshape(B * S, E)
    qkv = tiled_linear(x2, p["w_qkv"], p["b_qkv"]).reshape(B, S, 3 * E)
    q, k, v = qkv[..., :E], qkv[..., E:2 * E], qkv[..., 2 * E:]
    o = attention(q, k, v, mask, nhead)
    y = proj_residual_ln(o.reshape(B * S, E), p["wo"], p["bo"], x2, ln)
    return y.reshape(B, S, E)


def cross_attention_block(p, x, memory, mask, nhead, ln):
    B, Sq, E = x.shape
    Sk = memory.shape[1]
    x2 = x.reshape(B * Sq, E)
    q = tiled_linear(x2, p["wq"], p["bq"]).reshape(B, Sq, E)
    kv = tiled_linear(memory.reshape(B * Sk, E),
                      p["w_kv"], p["b_kv"]).reshape(B, Sk, 2 * E)
    k, v = kv[..., :E], kv[..., E:]
    o = attention(q, k, v, mask, nhead)
    y = proj_residual_ln(o.reshape(B * Sq, E), p["wo"], p["bo"], x2, ln)
    return y.reshape(B, Sq, E)


def ffn_block(p, x, ln):
    B, S, E = x.shape
    y = ffn_residual_ln(x.reshape(B * S, E), p["w1"], p["b1"], p["w2"], p["b2"], ln)
    return y.reshape(B, S, E)


def encoder_layer(p, x, src_mask, nhead):
    x = self_attention_block(p["attn"], x, src_mask, nhead, p["ln1"])
    x = ffn_block(p, x, p["ln2"])
    return x


def decoder_layer(p, x, memory, tgt_mask, mem_mask, nhead):
    x = self_attention_block(p["self_attn"], x, tgt_mask, nhead, p["ln1"])
    x = cross_attention_block(p["cross_attn"], x, memory, mem_mask, nhead, p["ln2"])
    x = ffn_block(p, x, p["ln3"])
    return x


def full_model_forward(params, src, tgt, src_mask=None, tgt_mask=None,
                       memory_mask=None, *, nhead):
    E = params["src_embed"].shape[1]        # static (array shape), no tracing issue
    B, S_src = src.shape
    _, S_tgt = tgt.shape
    pe = params["pe"]
    assert S_src <= pe.shape[0] and S_tgt <= pe.shape[0], "seq len exceeds PE table"

    zm_src = jnp.zeros((S_src, S_src), jnp.float32) if src_mask is None else src_mask
    zm_tgt = jnp.zeros((S_tgt, S_tgt), jnp.float32) if tgt_mask is None else tgt_mask
    zm_mem = jnp.zeros((S_tgt, S_src), jnp.float32) if memory_mask is None else memory_mask

    # token-embedding gather + sqrt(d_model) scale + sinusoidal PE: plain XLA glue
    scale = math.sqrt(E)
    src_x = jnp.take(params["src_embed"], src, axis=0) * scale + pe[None, :S_src, :]
    tgt_x = jnp.take(params["tgt_embed"], tgt, axis=0) * scale + pe[None, :S_tgt, :]

    # encoder stack (+ final encoder LayerNorm, as in nn.Transformer)
    h = src_x
    for lp in params["enc_layers"]:
        h = encoder_layer(lp, h, zm_src, nhead)
    memory = layernorm(h, params["enc_norm"])

    # decoder stack (+ final decoder LayerNorm)
    d = tgt_x
    for lp in params["dec_layers"]:
        d = decoder_layer(lp, d, memory, zm_tgt, zm_mem, nhead)
    d = layernorm(d, params["dec_norm"])

    return generator(d, params["gen_w"], params["gen_b"])


# ----------------------------------------------------------------------------
# Deterministic parameter init
# ----------------------------------------------------------------------------

def _dense(key, fan_in, fan_out):
    return jax.random.normal(key, (fan_in, fan_out), jnp.float32) * 0.02


def _init_ln(E):
    return dict(g=jnp.ones((E,), jnp.float32), b=jnp.zeros((E,), jnp.float32))


def _init_self_attn(key, E):
    k1, k2 = jax.random.split(key)
    return dict(w_qkv=_dense(k1, E, 3 * E), b_qkv=jnp.zeros((3 * E,), jnp.float32),
                wo=_dense(k2, E, E), bo=jnp.zeros((E,), jnp.float32))


def _init_cross_attn(key, E):
    k1, k2, k3 = jax.random.split(key, 3)
    return dict(wq=_dense(k1, E, E), bq=jnp.zeros((E,), jnp.float32),
                w_kv=_dense(k2, E, 2 * E), b_kv=jnp.zeros((2 * E,), jnp.float32),
                wo=_dense(k3, E, E), bo=jnp.zeros((E,), jnp.float32))


def _init_enc_layer(key, E, F):
    k1, k2, k3 = jax.random.split(key, 3)
    return dict(attn=_init_self_attn(k1, E),
                w1=_dense(k2, E, F), b1=jnp.zeros((F,), jnp.float32),
                w2=_dense(k3, F, E), b2=jnp.zeros((E,), jnp.float32),
                ln1=_init_ln(E), ln2=_init_ln(E))


def _init_dec_layer(key, E, F):
    k1, k2, k3, k4 = jax.random.split(key, 4)
    return dict(self_attn=_init_self_attn(k1, E),
                cross_attn=_init_cross_attn(k2, E),
                w1=_dense(k3, E, F), b1=jnp.zeros((F,), jnp.float32),
                w2=_dense(k4, F, E), b2=jnp.zeros((E,), jnp.float32),
                ln1=_init_ln(E), ln2=_init_ln(E), ln3=_init_ln(E))


def sinusoidal_pe(max_len, d_model):
    pos = np.arange(max_len)[:, None].astype(np.float32)
    div = np.exp(np.arange(0, d_model, 2).astype(np.float32)
                 * (-np.log(10000.0) / d_model))
    pe = np.zeros((max_len, d_model), np.float32)
    pe[:, 0::2] = np.sin(pos * div)
    pe[:, 1::2] = np.cos(pos * div)
    return jnp.asarray(pe)


def init_params(key, *, d_model, dff, n_enc, n_dec,
                vocab_src, vocab_tgt, max_len=64):
    ks = jax.random.split(key, 4 + n_enc + n_dec)
    enc = [_init_enc_layer(ks[4 + i], d_model, dff) for i in range(n_enc)]
    dec = [_init_dec_layer(ks[4 + n_enc + i], d_model, dff) for i in range(n_dec)]
    return dict(
        src_embed=_dense(ks[0], vocab_src, d_model) * 50.0,   # ~N(0,1) embeds
        tgt_embed=_dense(ks[1], vocab_tgt, d_model) * 50.0,
        gen_w=_dense(ks[2], d_model, vocab_tgt),
        gen_b=jnp.zeros((vocab_tgt,), jnp.float32),
        pe=sinusoidal_pe(max_len, d_model),
        enc_layers=enc, dec_layers=dec,
        enc_norm=_init_ln(d_model), dec_norm=_init_ln(d_model),
    )


# ----------------------------------------------------------------------------
# Demo
# ----------------------------------------------------------------------------

if __name__ == "__main__":
    B, S_SRC, S_TGT = 2, 8, 8
    D_MODEL, NHEAD, DFF = 128, 4, 256      # lane-friendly dims (multiples of 128)
    V_SRC, V_TGT = 50, 50
    N_ENC, N_DEC = 2, 2

    key = jax.random.PRNGKey(0)
    kp, ksrc, ktgt = jax.random.split(key, 3)
    params = init_params(kp, d_model=D_MODEL, dff=DFF,
                         n_enc=N_ENC, n_dec=N_DEC,
                         vocab_src=V_SRC, vocab_tgt=V_TGT)

    src = jax.random.randint(ksrc, (B, S_SRC), 0, V_SRC, dtype=jnp.int32)
    tgt = jax.random.randint(ktgt, (B, S_TGT), 0, V_TGT, dtype=jnp.int32)

    # causal target mask, additive-float convention (like nn.Transformer's
    # generate_square_subsequent_mask)
    causal = jnp.where(
        jnp.arange(S_TGT)[:, None] >= jnp.arange(S_TGT)[None, :], 0.0, -1e9
    ).astype(jnp.float32)

    fwd = jax.jit(full_model_forward, static_argnames=("nhead",))
    out = fwd(params, src, tgt, tgt_mask=causal, nhead=NHEAD)
    out = jax.block_until_ready(out)

    assert out.shape == (B, S_TGT, V_TGT), out.shape
    # log_softmax rows must exponentiate to ~1
    row_sums = jnp.exp(out).sum(-1)
    assert bool(jnp.all(jnp.abs(row_sums - 1.0) < 1e-3)), row_sums
    print("KERNEL_OK")
</pallas_src>

<mosaic_0001>
module attributes {stable_mosaic.version = 11 : i64} {
  func.func @_proj_residual_ln_kernel(%arg0: i32, %arg1: memref<16x128xf32, #tpu.memory_space<vmem>>, %arg2: memref<128x128xf32, #tpu.memory_space<vmem>>, %arg3: memref<1x128xf32, #tpu.memory_space<vmem>>, %arg4: memref<16x128xf32, #tpu.memory_space<vmem>>, %arg5: memref<1x128xf32, #tpu.memory_space<vmem>>, %arg6: memref<1x128xf32, #tpu.memory_space<vmem>>, %arg7: memref<16x128xf32, #tpu.memory_space<vmem>>) attributes {dimension_semantics = [#tpu.dimension_semantics<parallel>], iteration_bounds = array<i64: 1>, scalar_prefetch = 0 : i64, scratch_operands = 0 : i64, tpu.core_type = #tpu.core_type<tc>, window_params = [{transform_indices = @transform_0, window_bounds = array<i64: 16, 128>}, {pipeline_mode = #tpu.pipeline_mode<synchronous>, transform_indices = @transform_1, window_bounds = array<i64: 128, 128>}, {pipeline_mode = #tpu.pipeline_mode<synchronous>, transform_indices = @transform_2, window_bounds = array<i64: 1, 128>}, {transform_indices = @transform_3, window_bounds = array<i64: 16, 128>}, {pipeline_mode = #tpu.pipeline_mode<synchronous>, transform_indices = @transform_4, window_bounds = array<i64: 1, 128>}, {pipeline_mode = #tpu.pipeline_mode<synchronous>, transform_indices = @transform_5, window_bounds = array<i64: 1, 128>}, {transform_indices = @transform_6, window_bounds = array<i64: 16, 128>}]} {
    %c0 = arith.constant 0 : index
    %c0_0 = arith.constant 0 : index
    %0 = vector.load %arg1[%c0, %c0_0] : memref<16x128xf32, #tpu.memory_space<vmem>>, vector<16x128xf32>
    %c0_1 = arith.constant 0 : index
    %c0_2 = arith.constant 0 : index
    %1 = vector.load %arg2[%c0_1, %c0_2] : memref<128x128xf32, #tpu.memory_space<vmem>>, vector<128x128xf32>
    %cst = arith.constant dense<0.000000e+00> : vector<16x128xf32>
    %2 = tpu.matmul %0, %1, %cst {dimension_numbers = #tpu.dot_dimension_numbers<[1], [0], [0], [1], [0, 0, 1, 1], [], []>} : vector<16x128xf32>, vector<128x128xf32>, vector<16x128xf32> -> vector<16x128xf32>
    %c0_3 = arith.constant 0 : index
    %c0_4 = arith.constant 0 : index
    %3 = vector.load %arg3[%c0_3, %c0_4] : memref<1x128xf32, #tpu.memory_space<vmem>>, vector<1x128xf32>
    %4 = vector.broadcast %3 : vector<1x128xf32> to vector<16x128xf32>
    %5 = arith.addf %2, %4 : vector<16x128xf32>
    %c0_5 = arith.constant 0 : index
    %c0_6 = arith.constant 0 : index
    %6 = vector.load %arg4[%c0_5, %c0_6] : memref<16x128xf32, #tpu.memory_space<vmem>>, vector<16x128xf32>
    %7 = arith.addf %5, %6 : vector<16x128xf32>
    %c0_7 = arith.constant 0 : index
    %c0_8 = arith.constant 0 : index
    %8 = vector.load %arg5[%c0_7, %c0_8] : memref<1x128xf32, #tpu.memory_space<vmem>>, vector<1x128xf32>
    %c0_9 = arith.constant 0 : index
    %c0_10 = arith.constant 0 : index
    %9 = vector.load %arg6[%c0_9, %c0_10] : memref<1x128xf32, #tpu.memory_space<vmem>>, vector<1x128xf32>
    %cst_11 = arith.constant dense<0.000000e+00> : vector<16xf32>
    %10 = vector.multi_reduction <add>, %7, %cst_11 [1] : vector<16x128xf32> to vector<16xf32>
    %11 = vector.shape_cast %10 : vector<16xf32> to vector<16x1xf32>
    %cst_12 = arith.constant 1.280000e+02 : f32
    %12 = vector.broadcast %cst_12 : f32 to vector<16x1xf32>
    %13 = arith.divf %11, %12 : vector<16x1xf32>
    %14 = vector.broadcast %13 : vector<16x1xf32> to vector<16x128xf32>
    %15 = arith.subf %7, %14 : vector<16x128xf32>
    %16 = arith.mulf %15, %15 : vector<16x128xf32>
    %cst_13 = arith.constant dense<0.000000e+00> : vector<16xf32>
    %17 = vector.multi_reduction <add>, %16, %cst_13 [1] : vector<16x128xf32> to vector<16xf32>
    %18 = vector.shape_cast %17 : vector<16xf32> to vector<16x1xf32>
    %cst_14 = arith.constant 1.280000e+02 : f32
    %19 = vector.broadcast %cst_14 : f32 to vector<16x1xf32>
    %20 = arith.divf %18, %19 : vector<16x1xf32>
    %21 = vector.broadcast %13 : vector<16x1xf32> to vector<16x128xf32>
    %22 = arith.subf %7, %21 : vector<16x128xf32>
    %cst_15 = arith.constant 9.99999974E-6 : f32
    %23 = vector.broadcast %cst_15 : f32 to vector<16x1xf32>
    %24 = arith.addf %20, %23 : vector<16x1xf32>
    %25 = math.rsqrt %24 : vector<16x1xf32>
    %26 = vector.broadcast %25 : vector<16x1xf32> to vector<16x128xf32>
    %27 = arith.mulf %22, %26 : vector<16x128xf32>
    %28 = vector.broadcast %8 : vector<1x128xf32> to vector<16x128xf32>
    %29 = arith.mulf %27, %28 : vector<16x128xf32>
    %30 = vector.broadcast %9 : vector<1x128xf32> to vector<16x128xf32>
    %31 = arith.addf %29, %30 : vector<16x128xf32>
    %c0_16 = arith.constant 0 : index
    %c0_17 = arith.constant 0 : index
    %32 = vector.load %arg7[%c0_16, %c0_17] : memref<16x128xf32, #tpu.memory_space<vmem>>, vector<16x128xf32>
    tpu.vector_store %arg7[%c0_16, %c0_17], %31 {strides = array<i32>} : memref<16x128xf32, #tpu.memory_space<vmem>>, vector<16x128xf32>,
    return
  }
  func.func @transform_0(%arg0: i32) -> (i32, i32) {
    %c0_i32 = arith.constant 0 : i32
    %c0_i32_0 = arith.constant 0 : i32
    return %arg0, %c0_i32 : i32, i32
  }
  func.func @transform_1(%arg0: i32) -> (i32, i32) {
    %c0_i32 = arith.constant 0 : i32
    %c0_i32_0 = arith.constant 0 : i32
    %c0_i32_1 = arith.constant 0 : i32
    return %c0_i32, %c0_i32_0 : i32, i32
  }
  func.func @transform_2(%arg0: i32) -> (i32, i32) {
    %c0_i32 = arith.constant 0 : i32
    %c0_i32_0 = arith.constant 0 : i32
    %c0_i32_1 = arith.constant 0 : i32
    return %c0_i32, %c0_i32_0 : i32, i32
  }
  func.func @transform_3(%arg0: i32) -> (i32, i32) {
    %c0_i32 = arith.constant 0 : i32
    %c0_i32_0 = arith.constant 0 : i32
    return %arg0, %c0_i32 : i32, i32
  }
  func.func @transform_4(%arg0: i32) -> (i32, i32) {
    %c0_i32 = arith.constant 0 : i32
    %c0_i32_0 = arith.constant 0 : i32
    %c0_i32_1 = arith.constant 0 : i32
    return %c0_i32, %c0_i32_0 : i32, i32
  }
  func.func @transform_5(%arg0: i32) -> (i32, i32) {
    %c0_i32 = arith.constant 0 : i32
    %c0_i32_0 = arith.constant 0 : i32
    %c0_i32_1 = arith.constant 0 : i32
    return %c0_i32, %c0_i32_0 : i32, i32
  }
  func.func @transform_6(%arg0: i32) -> (i32, i32) {
    %c0_i32 = arith.constant 0 : i32
    %c0_i32_0 = arith.constant 0 : i32
    return %arg0, %c0_i32 : i32, i32
  }
}

module attributes {stable_mosaic.version = 11 : i64} {
  func.func @_matmul_bias_kernel(%arg0: i32, %arg1: i32, %arg2: i32, %arg3: memref<16x128xf32, #tpu.memory_space<vmem>>, %arg4: memref<128x128xf32, #tpu.memory_space<vmem>>, %arg5: memref<1x128xf32, #tpu.memory_space<vmem>>, %arg6: memref<16x128xf32, #tpu.memory_space<vmem>>, %arg7: memref<16x128xf32, #tpu.memory_space<vmem>>) attributes {dimension_semantics = [#tpu.dimension_semantics<parallel>, #tpu.dimension_semantics<parallel>, #tpu.dimension_semantics<arbitrary>], iteration_bounds = array<i64: 1, 3, 1>, scalar_prefetch = 0 : i64, scratch_operands = 1 : i64, tpu.core_type = #tpu.core_type<tc>, window_params = [{transform_indices = @transform_0, window_bounds = array<i64: 16, 128>}, {transform_indices = @transform_1, window_bounds = array<i64: 128, 128>}, {transform_indices = @transform_2, window_bounds = array<i64: 1, 128>}, {transform_indices = @transform_3, window_bounds = array<i64: 16, 128>}]} {
    %c0_i32 = arith.constant 0 : i32
    %0 = arith.cmpi eq, %arg2, %c0_i32 : i32
    %1 = arith.extui %0 : i1 to i32
    %c0_i32_0 = arith.constant 0 : i32
    %2 = arith.cmpi ne, %1, %c0_i32_0 : i32
    scf.if %2 {
      %cst_10 = arith.constant 0.000000e+00 : f32
      %12 = vector.broadcast %cst_10 : f32 to vector<16x128xf32>
      %c0_11 = arith.constant 0 : index
      %c0_12 = arith.constant 0 : index
      %13 = vector.load %arg7[%c0_11, %c0_12] : memref<16x128xf32, #tpu.memory_space<vmem>>, vector<16x128xf32>
      tpu.vector_store %arg7[%c0_11, %c0_12], %12 {strides = array<i32>} : memref<16x128xf32, #tpu.memory_space<vmem>>, vector<16x128xf32>,
    } else {
    }
    %c0 = arith.constant 0 : index
    %c0_1 = arith.constant 0 : index
    %3 = vector.load %arg7[%c0, %c0_1] : memref<16x128xf32, #tpu.memory_space<vmem>>, vector<16x128xf32>
    %c0_2 = arith.constant 0 : index
    %c0_3 = arith.constant 0 : index
    %4 = vector.load %arg3[%c0_2, %c0_3] : memref<16x128xf32, #tpu.memory_space<vmem>>, vector<16x128xf32>
    %c0_4 = arith.constant 0 : index
    %c0_5 = arith.constant 0 : index
    %5 = vector.load %arg4[%c0_4, %c0_5] : memref<128x128xf32, #tpu.memory_space<vmem>>, vector<128x128xf32>
    %cst = arith.constant dense<0.000000e+00> : vector<16x128xf32>
    %6 = tpu.matmul %4, %5, %cst {dimension_numbers = #tpu.dot_dimension_numbers<[1], [0], [0], [1], [0, 0, 1, 1], [], []>} : vector<16x128xf32>, vector<128x128xf32>, vector<16x128xf32> -> vector<16x128xf32>
    %7 = arith.addf %3, %6 : vector<16x128xf32>
    %c0_6 = arith.constant 0 : index
    %c0_7 = arith.constant 0 : index
    %8 = vector.load %arg7[%c0_6, %c0_7] : memref<16x128xf32, #tpu.memory_space<vmem>>, vector<16x128xf32>
    tpu.vector_store %arg7[%c0_6, %c0_7], %7 {strides = array<i32>} : memref<16x128xf32, #tpu.memory_space<vmem>>, vector<16x128xf32>,
    %c0_i32_8 = arith.constant 0 : i32
    %9 = arith.cmpi eq, %arg2, %c0_i32_8 : i32
    %10 = arith.extui %9 : i1 to i32
    %c0_i32_9 = arith.constant 0 : i32
    %11 = arith.cmpi ne, %10, %c0_i32_9 : i32
    scf.if %11 {
      %c0_10 = arith.constant 0 : index
      %c0_11 = arith.constant 0 : index
      %12 = vector.load %arg7[%c0_10, %c0_11] : memref<16x128xf32, #tpu.memory_space<vmem>>, vector<16x128xf32>
      %c0_12 = arith.constant 0 : index
      %c0_13 = arith.constant 0 : index
      %13 = vector.load %arg5[%c0_12, %c0_13] : memref<1x128xf32, #tpu.memory_space<vmem>>, vector<1x128xf32>
      %14 = vector.broadcast %13 : vector<1x128xf32> to vector<16x128xf32>
      %15 = arith.addf %12, %14 : vector<16x128xf32>
      %c0_14 = arith.constant 0 : index
      %c0_15 = arith.constant 0 : index
      %16 = vector.load %arg6[%c0_14, %c0_15] : memref<16x128xf32, #tpu.memory_space<vmem>>, vector<16x128xf32>
      tpu.vector_store %arg6[%c0_14, %c0_15], %15 {strides = array<i32>} : memref<16x128xf32, #tpu.memory_space<vmem>>, vector<16x128xf32>,
    } else {
    }
    return
  }
  func.func @transform_0(%arg0: i32, %arg1: i32, %arg2: i32) -> (i32, i32) {
    %c0_i32 = arith.constant 0 : i32
    return %arg0, %arg2 : i32, i32
  }
  func.func @transform_1(%arg0: i32, %arg1: i32, %arg2: i32) -> (i32, i32) {
    %c0_i32 = arith.constant 0 : i32
    return %arg2, %arg1 : i32, i32
  }
  func.func @transform_2(%arg0: i32, %arg1: i32, %arg2: i32) -> (i32, i32) {
    %c0_i32 = arith.constant 0 : i32
    %c0_i32_0 = arith.constant 0 : i32
    return %c0_i32, %arg1 : i32, i32
  }
  func.func @transform_3(%arg0: i32, %arg1: i32, %arg2: i32) -> (i32, i32) {
    %c0_i32 = arith.constant 0 : i32
    return %arg0, %arg1 : i32, i32
  }
}

module attributes {stable_mosaic.version = 11 : i64} {
  func.func @_ffn_residual_ln_kernel(%arg0: i32, %arg1: memref<16x128xf32, #tpu.memory_space<vmem>>, %arg2: memref<128x256xf32, #tpu.memory_space<vmem>>, %arg3: memref<1x256xf32, #tpu.memory_space<vmem>>, %arg4: memref<256x128xf32, #tpu.memory_space<vmem>>, %arg5: memref<1x128xf32, #tpu.memory_space<vmem>>, %arg6: memref<1x128xf32, #tpu.memory_space<vmem>>, %arg7: memref<1x128xf32, #tpu.memory_space<vmem>>, %arg8: memref<16x128xf32, #tpu.memory_space<vmem>>) attributes {dimension_semantics = [#tpu.dimension_semantics<parallel>], iteration_bounds = array<i64: 1>, scalar_prefetch = 0 : i64, scratch_operands = 0 : i64, tpu.core_type = #tpu.core_type<tc>, window_params = [{transform_indices = @transform_0, window_bounds = array<i64: 16, 128>}, {pipeline_mode = #tpu.pipeline_mode<synchronous>, transform_indices = @transform_1, window_bounds = array<i64: 128, 256>}, {pipeline_mode = #tpu.pipeline_mode<synchronous>, transform_indices = @transform_2, window_bounds = array<i64: 1, 256>}, {pipeline_mode = #tpu.pipeline_mode<synchronous>, transform_indices = @transform_3, window_bounds = array<i64: 256, 128>}, {pipeline_mode = #tpu.pipeline_mode<synchronous>, transform_indices = @transform_4, window_bounds = array<i64: 1, 128>}, {pipeline_mode = #tpu.pipeline_mode<synchronous>, transform_indices = @transform_5, window_bounds = array<i64: 1, 128>}, {pipeline_mode = #tpu.pipeline_mode<synchronous>, transform_indices = @transform_6, window_bounds = array<i64: 1, 128>}, {transform_indices = @transform_7, window_bounds = array<i64: 16, 128>}]} {
    %c0 = arith.constant 0 : index
    %c0_0 = arith.constant 0 : index
    %0 = vector.load %arg1[%c0, %c0_0] : memref<16x128xf32, #tpu.memory_space<vmem>>, vector<16x128xf32>
    %c0_1 = arith.constant 0 : index
    %c0_2 = arith.constant 0 : index
    %1 = vector.load %arg2[%c0_1, %c0_2] : memref<128x256xf32, #tpu.memory_space<vmem>>, vector<128x256xf32>
    %cst = arith.constant dense<0.000000e+00> : vector<16x256xf32>
    %2 = tpu.matmul %0, %1, %cst {dimension_numbers = #tpu.dot_dimension_numbers<[1], [0], [0], [1], [0, 0, 1, 1], [], []>} : vector<16x128xf32>, vector<128x256xf32>, vector<16x256xf32> -> vector<16x256xf32>
    %c0_3 = arith.constant 0 : index
    %c0_4 = arith.constant 0 : index
    %3 = vector.load %arg3[%c0_3, %c0_4] : memref<1x256xf32, #tpu.memory_space<vmem>>, vector<1x256xf32>
    %4 = vector.broadcast %3 : vector<1x256xf32> to vector<16x256xf32>
    %5 = arith.addf %2, %4 : vector<16x256xf32>
    %cst_5 = arith.constant 0.000000e+00 : f32
    %6 = vector.broadcast %cst_5 : f32 to vector<16x256xf32>
    %7 = arith.maximumf %5, %6 : vector<16x256xf32>
    %c0_6 = arith.constant 0 : index
    %c0_7 = arith.constant 0 : index
    %8 = vector.load %arg4[%c0_6, %c0_7] : memref<256x128xf32, #tpu.memory_space<vmem>>, vector<256x128xf32>
    %cst_8 = arith.constant dense<0.000000e+00> : vector<16x128xf32>
    %9 = tpu.matmul %7, %8, %cst_8 {dimension_numbers = #tpu.dot_dimension_numbers<[1], [0], [0], [1], [0, 0, 1, 1], [], []>} : vector<16x256xf32>, vector<256x128xf32>, vector<16x128xf32> -> vector<16x128xf32>
    %c0_9 = arith.constant 0 : index
    %c0_10 = arith.constant 0 : index
    %10 = vector.load %arg5[%c0_9, %c0_10] : memref<1x128xf32, #tpu.memory_space<vmem>>, vector<1x128xf32>
    %11 = vector.broadcast %10 : vector<1x128xf32> to vector<16x128xf32>
    %12 = arith.addf %9, %11 : vector<16x128xf32>
    %13 = arith.addf %0, %12 : vector<16x128xf32>
    %c0_11 = arith.constant 0 : index
    %c0_12 = arith.constant 0 : index
    %14 = vector.load %arg6[%c0_11, %c0_12] : memref<1x128xf32, #tpu.memory_space<vmem>>, vector<1x128xf32>
    %c0_13 = arith.constant 0 : index
    %c0_14 = arith.constant 0 : index
    %15 = vector.load %arg7[%c0_13, %c0_14] : memref<1x128xf32, #tpu.memory_space<vmem>>, vector<1x128xf32>
    %cst_15 = arith.constant dense<0.000000e+00> : vector<16xf32>
    %16 = vector.multi_reduction <add>, %13, %cst_15 [1] : vector<16x128xf32> to vector<16xf32>
    %17 = vector.shape_cast %16 : vector<16xf32> to vector<16x1xf32>
    %cst_16 = arith.constant 1.280000e+02 : f32
    %18 = vector.broadcast %cst_16 : f32 to vector<16x1xf32>
    %19 = arith.divf %17, %18 : vector<16x1xf32>
    %20 = vector.broadcast %19 : vector<16x1xf32> to vector<16x128xf32>
    %21 = arith.subf %13, %20 : vector<16x128xf32>
    %22 = arith.mulf %21, %21 : vector<16x128xf32>
    %cst_17 = arith.constant dense<0.000000e+00> : vector<16xf32>
    %23 = vector.multi_reduction <add>, %22, %cst_17 [1] : vector<16x128xf32> to vector<16xf32>
    %24 = vector.shape_cast %23 : vector<16xf32> to vector<16x1xf32>
    %cst_18 = arith.constant 1.280000e+02 : f32
    %25 = vector.broadcast %cst_18 : f32 to vector<16x1xf32>
    %26 = arith.divf %24, %25 : vector<16x1xf32>
    %27 = vector.broadcast %19 : vector<16x1xf32> to vector<16x128xf32>
    %28 = arith.subf %13, %27 : vector<16x128xf32>
    %cst_19 = arith.constant 9.99999974E-6 : f32
    %29 = vector.broadcast %cst_19 : f32 to vector<16x1xf32>
    %30 = arith.addf %26, %29 : vector<16x1xf32>
    %31 = math.rsqrt %30 : vector<16x1xf32>
    %32 = vector.broadcast %31 : vector<16x1xf32> to vector<16x128xf32>
    %33 = arith.mulf %28, %32 : vector<16x128xf32>
    %34 = vector.broadcast %14 : vector<1x128xf32> to vector<16x128xf32>
    %35 = arith.mulf %33, %34 : vector<16x128xf32>
    %36 = vector.broadcast %15 : vector<1x128xf32> to vector<16x128xf32>
    %37 = arith.addf %35, %36 : vector<16x128xf32>
    %c0_20 = arith.constant 0 : index
    %c0_21 = arith.constant 0 : index
    %38 = vector.load %arg8[%c0_20, %c0_21] : memref<16x128xf32, #tpu.memory_space<vmem>>, vector<16x128xf32>
    tpu.vector_store %arg8[%c0_20, %c0_21], %37 {strides = array<i32>} : memref<16x128xf32, #tpu.memory_space<vmem>>, vector<16x128xf32>,
    return
  }
  func.func @transform_0(%arg0: i32) -> (i32, i32) {
    %c0_i32 = arith.constant 0 : i32
    %c0_i32_0 = arith.constant 0 : i32
    return %arg0, %c0_i32 : i32, i32
  }
  func.func @transform_1(%arg0: i32) -> (i32, i32) {
    %c0_i32 = arith.constant 0 : i32
    %c0_i32_0 = arith.constant 0 : i32
    %c0_i32_1 = arith.constant 0 : i32
    return %c0_i32, %c0_i32_0 : i32, i32
  }
  func.func @transform_2(%arg0: i32) -> (i32, i32) {
    %c0_i32 = arith.constant 0 : i32
    %c0_i32_0 = arith.constant 0 : i32
    %c0_i32_1 = arith.constant 0 : i32
    return %c0_i32, %c0_i32_0 : i32, i32
  }
  func.func @transform_3(%arg0: i32) -> (i32, i32) {
    %c0_i32 = arith.constant 0 : i32
    %c0_i32_0 = arith.constant 0 : i32
    %c0_i32_1 = arith.constant 0 : i32
    return %c0_i32, %c0_i32_0 : i32, i32
  }
  func.func @transform_4(%arg0: i32) -> (i32, i32) {
    %c0_i32 = arith.constant 0 : i32
    %c0_i32_0 = arith.constant 0 : i32
    %c0_i32_1 = arith.constant 0 : i32
    return %c0_i32, %c0_i32_0 : i32, i32
  }
  func.func @transform_5(%arg0: i32) -> (i32, i32) {
    %c0_i32 = arith.constant 0 : i32
    %c0_i32_0 = arith.constant 0 : i32
    %c0_i32_1 = arith.constant 0 : i32
    return %c0_i32, %c0_i32_0 : i32, i32
  }
  func.func @transform_6(%arg0: i32) -> (i32, i32) {
    %c0_i32 = arith.constant 0 : i32
    %c0_i32_0 = arith.constant 0 : i32
    %c0_i32_1 = arith.constant 0 : i32
    return %c0_i32, %c0_i32_0 : i32, i32
  }
  func.func @transform_7(%arg0: i32) -> (i32, i32) {
    %c0_i32 = arith.constant 0 : i32
    %c0_i32_0 = arith.constant 0 : i32
    return %arg0, %c0_i32 : i32, i32
  }
}

module attributes {stable_mosaic.version = 11 : i64} {
  func.func @_mha_kernel(%arg0: i32, %arg1: memref<1x8x128xf32, #tpu.memory_space<vmem>>, %arg2: memref<1x8x128xf32, #tpu.memory_space<vmem>>, %arg3: memref<1x8x128xf32, #tpu.memory_space<vmem>>, %arg4: memref<8x8xf32, #tpu.memory_space<vmem>>, %arg5: memref<1x8x128xf32, #tpu.memory_space<vmem>>) attributes {dimension_semantics = [#tpu.dimension_semantics<parallel>], iteration_bounds = array<i64: 2>, scalar_prefetch = 0 : i64, scratch_operands = 0 : i64, tpu.core_type = #tpu.core_type<tc>, window_params = [{transform_indices = @transform_0, window_bounds = array<i64: 1, 8, 128>}, {transform_indices = @transform_1, window_bounds = array<i64: 1, 8, 128>}, {transform_indices = @transform_2, window_bounds = array<i64: 1, 8, 128>}, {pipeline_mode = #tpu.pipeline_mode<synchronous>, transform_indices = @transform_3, window_bounds = array<i64: 8, 8>}, {transform_indices = @transform_4, window_bounds = array<i64: 1, 8, 128>}]} {
    %c0 = arith.constant 0 : index
    %c0_0 = arith.constant 0 : index
    %c0_1 = arith.constant 0 : index
    %0 = vector.load %arg1[%c0, %c0_0, %c0_1] : memref<1x8x128xf32, #tpu.memory_space<vmem>>, vector<1x8x128xf32>
    %1 = vector.shape_cast %0 : vector<1x8x128xf32> to vector<8x128xf32>
    %c0_2 = arith.constant 0 : index
    %c0_3 = arith.constant 0 : index
    %c0_4 = arith.constant 0 : index
    %2 = vector.load %arg2[%c0_2, %c0_3, %c0_4] : memref<1x8x128xf32, #tpu.memory_space<vmem>>, vector<1x8x128xf32>
    %3 = vector.shape_cast %2 : vector<1x8x128xf32> to vector<8x128xf32>
    %c0_5 = arith.constant 0 : index
    %c0_6 = arith.constant 0 : index
    %c0_7 = arith.constant 0 : index
    %4 = vector.load %arg3[%c0_5, %c0_6, %c0_7] : memref<1x8x128xf32, #tpu.memory_space<vmem>>, vector<1x8x128xf32>
    %5 = vector.shape_cast %4 : vector<1x8x128xf32> to vector<8x128xf32>
    %c0_8 = arith.constant 0 : index
    %c0_9 = arith.constant 0 : index
    %6 = vector.load %arg4[%c0_8, %c0_9] : memref<8x8xf32, #tpu.memory_space<vmem>>, vector<8x8xf32>
    %7 = vector.extract_strided_slice %1 {offsets = [0, 0], sizes = [8, 32], strides = [1, 1]} : vector<8x128xf32> to vector<8x32xf32>
    %cst = arith.constant 0.176776692 : f32
    %8 = vector.broadcast %cst : f32 to vector<8x32xf32>
    %9 = arith.mulf %7, %8 : vector<8x32xf32>
    %10 = vector.extract_strided_slice %3 {offsets = [0, 0], sizes = [8, 32], strides = [1, 1]} : vector<8x128xf32> to vector<8x32xf32>
    %cst_10 = arith.constant dense<0.000000e+00> : vector<8x8xf32>
    %11 = tpu.matmul %9, %10, %cst_10 {dimension_numbers = #tpu.dot_dimension_numbers<[1], [1], [0], [0], [0, 0, 1, 0], [], []>} : vector<8x32xf32>, vector<8x32xf32>, vector<8x8xf32> -> vector<8x8xf32>
    %12 = arith.addf %11, %6 : vector<8x8xf32>
    %cst_11 = arith.constant dense<0xFF800000> : vector<8xf32>
    %13 = vector.multi_reduction <maximumf>, %12, %cst_11 [1] : vector<8x8xf32> to vector<8xf32>
    %14 = vector.shape_cast %13 : vector<8xf32> to vector<8x1xf32>
    %15 = vector.broadcast %14 : vector<8x1xf32> to vector<8x8xf32>
    %16 = arith.subf %12, %15 : vector<8x8xf32>
    %17 = math.exp %16 : vector<8x8xf32>
    %cst_12 = arith.constant dense<0.000000e+00> : vector<8xf32>
    %18 = vector.multi_reduction <add>, %17, %cst_12 [1] : vector<8x8xf32> to vector<8xf32>
    %19 = vector.shape_cast %18 : vector<8xf32> to vector<8x1xf32>
    %cst_13 = arith.constant 1.000000e+00 : f32
    %20 = vector.broadcast %cst_13 : f32 to vector<8x1xf32>
    %21 = arith.divf %20, %19 : vector<8x1xf32>
    %22 = vector.broadcast %21 : vector<8x1xf32> to vector<8x8xf32>
    %23 = arith.mulf %17, %22 : vector<8x8xf32>
    %24 = vector.extract_strided_slice %5 {offsets = [0, 0], sizes = [8, 32], strides = [1, 1]} : vector<8x128xf32> to vector<8x32xf32>
    %cst_14 = arith.constant dense<0.000000e+00> : vector<8x32xf32>
    %25 = tpu.matmul %23, %24, %cst_14 {dimension_numbers = #tpu.dot_dimension_numbers<[1], [0], [0], [1], [0, 0, 1, 1], [], []>} : vector<8x8xf32>, vector<8x32xf32>, vector<8x32xf32> -> vector<8x32xf32>
    %26 = vector.extract_strided_slice %1 {offsets = [0, 32], sizes = [8, 32], strides = [1, 1]} : vector<8x128xf32> to vector<8x32xf32>
    %cst_15 = arith.constant 0.176776692 : f32
    %27 = vector.broadcast %cst_15 : f32 to vector<8x32xf32>
    %28 = arith.mulf %26, %27 : vector<8x32xf32>
    %29 = vector.extract_strided_slice %3 {offsets = [0, 32], sizes = [8, 32], strides = [1, 1]} : vector<8x128xf32> to vector<8x32xf32>
    %cst_16 = arith.constant dense<0.000000e+00> : vector<8x8xf32>
    %30 = tpu.matmul %28, %29, %cst_16 {dimension_numbers = #tpu.dot_dimension_numbers<[1], [1], [0], [0], [0, 0, 1, 0], [], []>} : vector<8x32xf32>, vector<8x32xf32>, vector<8x8xf32> -> vector<8x8xf32>
    %31 = arith.addf %30, %6 : vector<8x8xf32>
    %cst_17 = arith.constant dense<0xFF800000> : vector<8xf32>
    %32 = vector.multi_reduction <maximumf>, %31, %cst_17 [1] : vector<8x8xf32> to vector<8xf32>
    %33 = vector.shape_cast %32 : vector<8xf32> to vector<8x1xf32>
    %34 = vector.broadcast %33 : vector<8x1xf32> to vector<8x8xf32>
    %35 = arith.subf %31, %34 : vector<8x8xf32>
    %36 = math.exp %35 : vector<8x8xf32>
    %cst_18 = arith.constant dense<0.000000e+00> : vector<8xf32>
    %37 = vector.multi_reduction <add>, %36, %cst_18 [1] : vector<8x8xf32> to vector<8xf32>
    %38 = vector.shape_cast %37 : vector<8xf32> to vector<8x1xf32>
    %cst_19 = arith.constant 1.000000e+00 : f32
    %39 = vector.broadcast %cst_19 : f32 to vector<8x1xf32>
    %40 = arith.divf %39, %38 : vector<8x1xf32>
    %41 = vector.broadcast %40 : vector<8x1xf32> to vector<8x8xf32>
    %42 = arith.mulf %36, %41 : vector<8x8xf32>
    %43 = vector.extract_strided_slice %5 {offsets = [0, 32], sizes = [8, 32], strides = [1, 1]} : vector<8x128xf32> to vector<8x32xf32>
    %cst_20 = arith.constant dense<0.000000e+00> : vector<8x32xf32>
    %44 = tpu.matmul %42, %43, %cst_20 {dimension_numbers = #tpu.dot_dimension_numbers<[1], [0], [0], [1], [0, 0, 1, 1], [], []>} : vector<8x8xf32>, vector<8x32xf32>, vector<8x32xf32> -> vector<8x32xf32>
    %45 = vector.extract_strided_slice %1 {offsets = [0, 64], sizes = [8, 32], strides = [1, 1]} : vector<8x128xf32> to vector<8x32xf32>
    %cst_21 = arith.constant 0.176776692 : f32
    %46 = vector.broadcast %cst_21 : f32 to vector<8x32xf32>
    %47 = arith.mulf %45, %46 : vector<8x32xf32>
    %48 = vector.extract_strided_slice %3 {offsets = [0, 64], sizes = [8, 32], strides = [1, 1]} : vector<8x128xf32> to vector<8x32xf32>
    %cst_22 = arith.constant dense<0.000000e+00> : vector<8x8xf32>
    %49 = tpu.matmul %47, %48, %cst_22 {dimension_numbers = #tpu.dot_dimension_numbers<[1], [1], [0], [0], [0, 0, 1, 0], [], []>} : vector<8x32xf32>, vector<8x32xf32>, vector<8x8xf32> -> vector<8x8xf32>
    %50 = arith.addf %49, %6 : vector<8x8xf32>
    %cst_23 = arith.constant dense<0xFF800000> : vector<8xf32>
    %51 = vector.multi_reduction <maximumf>, %50, %cst_23 [1] : vector<8x8xf32> to vector<8xf32>
    %52 = vector.shape_cast %51 : vector<8xf32> to vector<8x1xf32>
    %53 = vector.broadcast %52 : vector<8x1xf32> to vector<8x8xf32>
    %54 = arith.subf %50, %53 : vector<8x8xf32>
    %55 = math.exp %54 : vector<8x8xf32>
    %cst_24 = arith.constant dense<0.000000e+00> : vector<8xf32>
    %56 = vector.multi_reduction <add>, %55, %cst_24 [1] : vector<8x8xf32> to vector<8xf32>
    %57 = vector.shape_cast %56 : vector<8xf32> to vector<8x1xf32>
    %cst_25 = arith.constant 1.000000e+00 : f32
    %58 = vector.broadcast %cst_25 : f32 to vector<8x1xf32>
    %59 = arith.divf %58, %57 : vector<8x1xf32>
    %60 = vector.broadcast %59 : vector<8x1xf32> to vector<8x8xf32>
    %61 = arith.mulf %55, %60 : vector<8x8xf32>
    %62 = vector.extract_strided_slice %5 {offsets = [0, 64], sizes = [8, 32], strides = [1, 1]} : vector<8x128xf32> to vector<8x32xf32>
    %cst_26 = arith.constant dense<0.000000e+00> : vector<8x32xf32>
    %63 = tpu.matmul %61, %62, %cst_26 {dimension_numbers = #tpu.dot_dimension_numbers<[1], [0], [0], [1], [0, 0, 1, 1], [], []>} : vector<8x8xf32>, vector<8x32xf32>, vector<8x32xf32> -> vector<8x32xf32>
    %64 = vector.extract_strided_slice %1 {offsets = [0, 96], sizes = [8, 32], strides = [1, 1]} : vector<8x128xf32> to vector<8x32xf32>
    %cst_27 = arith.constant 0.176776692 : f32
    %65 = vector.broadcast %cst_27 : f32 to vector<8x32xf32>
    %66 = arith.mulf %64, %65 : vector<8x32xf32>
    %67 = vector.extract_strided_slice %3 {offsets = [0, 96], sizes = [8, 32], strides = [1, 1]} : vector<8x128xf32> to vector<8x32xf32>
    %cst_28 = arith.constant dense<0.000000e+00> : vector<8x8xf32>
    %68 = tpu.matmul %66, %67, %cst_28 {dimension_numbers = #tpu.dot_dimension_numbers<[1], [1], [0], [0], [0, 0, 1, 0], [], []>} : vector<8x32xf32>, vector<8x32xf32>, vector<8x8xf32> -> vector<8x8xf32>
    %69 = arith.addf %68, %6 : vector<8x8xf32>
    %cst_29 = arith.constant dense<0xFF800000> : vector<8xf32>
    %70 = vector.multi_reduction <maximumf>, %69, %cst_29 [1] : vector<8x8xf32> to vector<8xf32>
    %71 = vector.shape_cast %70 : vector<8xf32> to vector<8x1xf32>
    %72 = vector.broadcast %71 : vector<8x1xf32> to vector<8x8xf32>
    %73 = arith.subf %69, %72 : vector<8x8xf32>
    %74 = math.exp %73 : vector<8x8xf32>
    %cst_30 = arith.constant dense<0.000000e+00> : vector<8xf32>
    %75 = vector.multi_reduction <add>, %74, %cst_30 [1] : vector<8x8xf32> to vector<8xf32>
    %76 = vector.shape_cast %75 : vector<8xf32> to vector<8x1xf32>
    %cst_31 = arith.constant 1.000000e+00 : f32
    %77 = vector.broadcast %cst_31 : f32 to vector<8x1xf32>
    %78 = arith.divf %77, %76 : vector<8x1xf32>
    %79 = vector.broadcast %78 : vector<8x1xf32> to vector<8x8xf32>
    %80 = arith.mulf %74, %79 : vector<8x8xf32>
    %81 = vector.extract_strided_slice %5 {offsets = [0, 96], sizes = [8, 32], strides = [1, 1]} : vector<8x128xf32> to vector<8x32xf32>
    %cst_32 = arith.constant dense<0.000000e+00> : vector<8x32xf32>
    %82 = tpu.matmul %80, %81, %cst_32 {dimension_numbers = #tpu.dot_dimension_numbers<[1], [0], [0], [1], [0, 0, 1, 1], [], []>} : vector<8x8xf32>, vector<8x32xf32>, vector<8x32xf32> -> vector<8x32xf32>
    %83 = tpu.concatenate %25, %44, %63, %82 in 1 : vector<8x32xf32>, vector<8x32xf32>, vector<8x32xf32>, vector<8x32xf32> -> vector<8x128xf32>
    %c0_33 = arith.constant 0 : index
    %c0_34 = arith.constant 0 : index
    %c0_35 = arith.constant 0 : index
    %84 = vector.load %arg5[%c0_33, %c0_34, %c0_35] : memref<1x8x128xf32, #tpu.memory_space<vmem>>, vector<1x8x128xf32>
    %85 = vector.shape_cast %84 : vector<1x8x128xf32> to vector<8x128xf32>
    %86 = vector.shape_cast %83 : vector<8x128xf32> to vector<1x8x128xf32>
    tpu.vector_store %arg5[%c0_33, %c0_34, %c0_35], %86 {strides = array<i32>} : memref<1x8x128xf32, #tpu.memory_space<vmem>>, vector<1x8x128xf32>,
    return
  }
  func.func @transform_0(%arg0: i32) -> (i32, i32, i32) {
    %c0_i32 = arith.constant 0 : i32
    %c0_i32_0 = arith.constant 0 : i32
    %c0_i32_1 = arith.constant 0 : i32
    return %arg0, %c0_i32, %c0_i32_0 : i32, i32, i32
  }
  func.func @transform_1(%arg0: i32) -> (i32, i32, i32) {
    %c0_i32 = arith.constant 0 : i32
    %c0_i32_0 = arith.constant 0 : i32
    %c0_i32_1 = arith.constant 0 : i32
    return %arg0, %c0_i32, %c0_i32_0 : i32, i32, i32
  }
  func.func @transform_2(%arg0: i32) -> (i32, i32, i32) {
    %c0_i32 = arith.constant 0 : i32
    %c0_i32_0 = arith.constant 0 : i32
    %c0_i32_1 = arith.constant 0 : i32
    return %arg0, %c0_i32, %c0_i32_0 : i32, i32, i32
  }
  func.func @transform_3(%arg0: i32) -> (i32, i32) {
    %c0_i32 = arith.constant 0 : i32
    %c0_i32_0 = arith.constant 0 : i32
    %c0_i32_1 = arith.constant 0 : i32
    return %c0_i32, %c0_i32_0 : i32, i32
  }
  func.func @transform_4(%arg0: i32) -> (i32, i32, i32) {
    %c0_i32 = arith.constant 0 : i32
    %c0_i32_0 = arith.constant 0 : i32
    %c0_i32_1 = arith.constant 0 : i32
    return %arg0, %c0_i32, %c0_i32_0 : i32, i32, i32
  }
}

module attributes {stable_mosaic.version = 11 : i64} {
  func.func @_layernorm_kernel(%arg0: i32, %arg1: memref<16x128xf32, #tpu.memory_space<vmem>>, %arg2: memref<1x128xf32, #tpu.memory_space<vmem>>, %arg3: memref<1x128xf32, #tpu.memory_space<vmem>>, %arg4: memref<16x128xf32, #tpu.memory_space<vmem>>) attributes {dimension_semantics = [#tpu.dimension_semantics<parallel>], iteration_bounds = array<i64: 1>, scalar_prefetch = 0 : i64, scratch_operands = 0 : i64, tpu.core_type = #tpu.core_type<tc>, window_params = [{transform_indices = @transform_0, window_bounds = array<i64: 16, 128>}, {pipeline_mode = #tpu.pipeline_mode<synchronous>, transform_indices = @transform_1, window_bounds = array<i64: 1, 128>}, {pipeline_mode = #tpu.pipeline_mode<synchronous>, transform_indices = @transform_2, window_bounds = array<i64: 1, 128>}, {transform_indices = @transform_3, window_bounds = array<i64: 16, 128>}]} {
    %c0 = arith.constant 0 : index
    %c0_0 = arith.constant 0 : index
    %0 = vector.load %arg1[%c0, %c0_0] : memref<16x128xf32, #tpu.memory_space<vmem>>, vector<16x128xf32>
    %c0_1 = arith.constant 0 : index
    %c0_2 = arith.constant 0 : index
    %1 = vector.load %arg2[%c0_1, %c0_2] : memref<1x128xf32, #tpu.memory_space<vmem>>, vector<1x128xf32>
    %c0_3 = arith.constant 0 : index
    %c0_4 = arith.constant 0 : index
    %2 = vector.load %arg3[%c0_3, %c0_4] : memref<1x128xf32, #tpu.memory_space<vmem>>, vector<1x128xf32>
    %cst = arith.constant dense<0.000000e+00> : vector<16xf32>
    %3 = vector.multi_reduction <add>, %0, %cst [1] : vector<16x128xf32> to vector<16xf32>
    %4 = vector.shape_cast %3 : vector<16xf32> to vector<16x1xf32>
    %cst_5 = arith.constant 1.280000e+02 : f32
    %5 = vector.broadcast %cst_5 : f32 to vector<16x1xf32>
    %6 = arith.divf %4, %5 : vector<16x1xf32>
    %7 = vector.broadcast %6 : vector<16x1xf32> to vector<16x128xf32>
    %8 = arith.subf %0, %7 : vector<16x128xf32>
    %9 = arith.mulf %8, %8 : vector<16x128xf32>
    %cst_6 = arith.constant dense<0.000000e+00> : vector<16xf32>
    %10 = vector.multi_reduction <add>, %9, %cst_6 [1] : vector<16x128xf32> to vector<16xf32>
    %11 = vector.shape_cast %10 : vector<16xf32> to vector<16x1xf32>
    %cst_7 = arith.constant 1.280000e+02 : f32
    %12 = vector.broadcast %cst_7 : f32 to vector<16x1xf32>
    %13 = arith.divf %11, %12 : vector<16x1xf32>
    %14 = vector.broadcast %6 : vector<16x1xf32> to vector<16x128xf32>
    %15 = arith.subf %0, %14 : vector<16x128xf32>
    %cst_8 = arith.constant 9.99999974E-6 : f32
    %16 = vector.broadcast %cst_8 : f32 to vector<16x1xf32>
    %17 = arith.addf %13, %16 : vector<16x1xf32>
    %18 = math.rsqrt %17 : vector<16x1xf32>
    %19 = vector.broadcast %18 : vector<16x1xf32> to vector<16x128xf32>
    %20 = arith.mulf %15, %19 : vector<16x128xf32>
    %21 = vector.broadcast %1 : vector<1x128xf32> to vector<16x128xf32>
    %22 = arith.mulf %20, %21 : vector<16x128xf32>
    %23 = vector.broadcast %2 : vector<1x128xf32> to vector<16x128xf32>
    %24 = arith.addf %22, %23 : vector<16x128xf32>
    %c0_9 = arith.constant 0 : index
    %c0_10 = arith.constant 0 : index
    %25 = vector.load %arg4[%c0_9, %c0_10] : memref<16x128xf32, #tpu.memory_space<vmem>>, vector<16x128xf32>
    tpu.vector_store %arg4[%c0_9, %c0_10], %24 {strides = array<i32>} : memref<16x128xf32, #tpu.memory_space<vmem>>, vector<16x128xf32>,
    return
  }
  func.func @transform_0(%arg0: i32) -> (i32, i32) {
    %c0_i32 = arith.constant 0 : i32
    %c0_i32_0 = arith.constant 0 : i32
    return %arg0, %c0_i32 : i32, i32
  }
  func.func @transform_1(%arg0: i32) -> (i32, i32) {
    %c0_i32 = arith.constant 0 : i32
    %c0_i32_0 = arith.constant 0 : i32
    %c0_i32_1 = arith.constant 0 : i32
    return %c0_i32, %c0_i32_0 : i32, i32
  }
  func.func @transform_2(%arg0: i32) -> (i32, i32) {
    %c0_i32 = arith.constant 0 : i32
    %c0_i32_0 = arith.constant 0 : i32
    %c0_i32_1 = arith.constant 0 : i32
    return %c0_i32, %c0_i32_0 : i32, i32
  }
  func.func @transform_3(%arg0: i32) -> (i32, i32) {
    %c0_i32 = arith.constant 0 : i32
    %c0_i32_0 = arith.constant 0 : i32
    return %arg0, %c0_i32 : i32, i32
  }
}

module attributes {stable_mosaic.version = 11 : i64} {
  func.func @_matmul_bias_kernel(%arg0: i32, %arg1: i32, %arg2: i32, %arg3: memref<16x128xf32, #tpu.memory_space<vmem>>, %arg4: memref<128x128xf32, #tpu.memory_space<vmem>>, %arg5: memref<1x128xf32, #tpu.memory_space<vmem>>, %arg6: memref<16x128xf32, #tpu.memory_space<vmem>>, %arg7: memref<16x128xf32, #tpu.memory_space<vmem>>) attributes {dimension_semantics = [#tpu.dimension_semantics<parallel>, #tpu.dimension_semantics<parallel>, #tpu.dimension_semantics<arbitrary>], iteration_bounds = array<i64: 1, 1, 1>, scalar_prefetch = 0 : i64, scratch_operands = 1 : i64, tpu.core_type = #tpu.core_type<tc>, window_params = [{transform_indices = @transform_0, window_bounds = array<i64: 16, 128>}, {transform_indices = @transform_1, window_bounds = array<i64: 128, 128>}, {transform_indices = @transform_2, window_bounds = array<i64: 1, 128>}, {transform_indices = @transform_3, window_bounds = array<i64: 16, 128>}]} {
    %c0_i32 = arith.constant 0 : i32
    %0 = arith.cmpi eq, %arg2, %c0_i32 : i32
    %1 = arith.extui %0 : i1 to i32
    %c0_i32_0 = arith.constant 0 : i32
    %2 = arith.cmpi ne, %1, %c0_i32_0 : i32
    scf.if %2 {
      %cst_10 = arith.constant 0.000000e+00 : f32
      %12 = vector.broadcast %cst_10 : f32 to vector<16x128xf32>
      %c0_11 = arith.constant 0 : index
      %c0_12 = arith.constant 0 : index
      %13 = vector.load %arg7[%c0_11, %c0_12] : memref<16x128xf32, #tpu.memory_space<vmem>>, vector<16x128xf32>
      tpu.vector_store %arg7[%c0_11, %c0_12], %12 {strides = array<i32>} : memref<16x128xf32, #tpu.memory_space<vmem>>, vector<16x128xf32>,
    } else {
    }
    %c0 = arith.constant 0 : index
    %c0_1 = arith.constant 0 : index
    %3 = vector.load %arg7[%c0, %c0_1] : memref<16x128xf32, #tpu.memory_space<vmem>>, vector<16x128xf32>
    %c0_2 = arith.constant 0 : index
    %c0_3 = arith.constant 0 : index
    %4 = vector.load %arg3[%c0_2, %c0_3] : memref<16x128xf32, #tpu.memory_space<vmem>>, vector<16x128xf32>
    %c0_4 = arith.constant 0 : index
    %c0_5 = arith.constant 0 : index
    %5 = vector.load %arg4[%c0_4, %c0_5] : memref<128x128xf32, #tpu.memory_space<vmem>>, vector<128x128xf32>
    %cst = arith.constant dense<0.000000e+00> : vector<16x128xf32>
    %6 = tpu.matmul %4, %5, %cst {dimension_numbers = #tpu.dot_dimension_numbers<[1], [0], [0], [1], [0, 0, 1, 1], [], []>} : vector<16x128xf32>, vector<128x128xf32>, vector<16x128xf32> -> vector<16x128xf32>
    %7 = arith.addf %3, %6 : vector<16x128xf32>
    %c0_6 = arith.constant 0 : index
    %c0_7 = arith.constant 0 : index
    %8 = vector.load %arg7[%c0_6, %c0_7] : memref<16x128xf32, #tpu.memory_space<vmem>>, vector<16x128xf32>
    tpu.vector_store %arg7[%c0_6, %c0_7], %7 {strides = array<i32>} : memref<16x128xf32, #tpu.memory_space<vmem>>, vector<16x128xf32>,
    %c0_i32_8 = arith.constant 0 : i32
    %9 = arith.cmpi eq, %arg2, %c0_i32_8 : i32
    %10 = arith.extui %9 : i1 to i32
    %c0_i32_9 = arith.constant 0 : i32
    %11 = arith.cmpi ne, %10, %c0_i32_9 : i32
    scf.if %11 {
      %c0_10 = arith.constant 0 : index
      %c0_11 = arith.constant 0 : index
      %12 = vector.load %arg7[%c0_10, %c0_11] : memref<16x128xf32, #tpu.memory_space<vmem>>, vector<16x128xf32>
      %c0_12 = arith.constant 0 : index
      %c0_13 = arith.constant 0 : index
      %13 = vector.load %arg5[%c0_12, %c0_13] : memref<1x128xf32, #tpu.memory_space<vmem>>, vector<1x128xf32>
      %14 = vector.broadcast %13 : vector<1x128xf32> to vector<16x128xf32>
      %15 = arith.addf %12, %14 : vector<16x128xf32>
      %c0_14 = arith.constant 0 : index
      %c0_15 = arith.constant 0 : index
      %16 = vector.load %arg6[%c0_14, %c0_15] : memref<16x128xf32, #tpu.memory_space<vmem>>, vector<16x128xf32>
      tpu.vector_store %arg6[%c0_14, %c0_15], %15 {strides = array<i32>} : memref<16x128xf32, #tpu.memory_space<vmem>>, vector<16x128xf32>,
    } else {
    }
    return
  }
  func.func @transform_0(%arg0: i32, %arg1: i32, %arg2: i32) -> (i32, i32) {
    %c0_i32 = arith.constant 0 : i32
    return %arg0, %arg2 : i32, i32
  }
  func.func @transform_1(%arg0: i32, %arg1: i32, %arg2: i32) -> (i32, i32) {
    %c0_i32 = arith.constant 0 : i32
    return %arg2, %arg1 : i32, i32
  }
  func.func @transform_2(%arg0: i32, %arg1: i32, %arg2: i32) -> (i32, i32) {
    %c0_i32 = arith.constant 0 : i32
    %c0_i32_0 = arith.constant 0 : i32
    return %c0_i32, %arg1 : i32, i32
  }
  func.func @transform_3(%arg0: i32, %arg1: i32, %arg2: i32) -> (i32, i32) {
    %c0_i32 = arith.constant 0 : i32
    return %arg0, %arg1 : i32, i32
  }
}

module attributes {stable_mosaic.version = 11 : i64} {
  func.func @_matmul_bias_kernel(%arg0: i32, %arg1: i32, %arg2: i32, %arg3: memref<16x128xf32, #tpu.memory_space<vmem>>, %arg4: memref<128x256xf32, #tpu.memory_space<vmem>>, %arg5: memref<1x256xf32, #tpu.memory_space<vmem>>, %arg6: memref<16x256xf32, #tpu.memory_space<vmem>>, %arg7: memref<16x256xf32, #tpu.memory_space<vmem>>) attributes {dimension_semantics = [#tpu.dimension_semantics<parallel>, #tpu.dimension_semantics<parallel>, #tpu.dimension_semantics<arbitrary>], iteration_bounds = array<i64: 1, 1, 1>, scalar_prefetch = 0 : i64, scratch_operands = 1 : i64, tpu.core_type = #tpu.core_type<tc>, window_params = [{transform_indices = @transform_0, window_bounds = array<i64: 16, 128>}, {transform_indices = @transform_1, window_bounds = array<i64: 128, 256>}, {transform_indices = @transform_2, window_bounds = array<i64: 1, 256>}, {transform_indices = @transform_3, window_bounds = array<i64: 16, 256>}]} {
    %c0_i32 = arith.constant 0 : i32
    %0 = arith.cmpi eq, %arg2, %c0_i32 : i32
    %1 = arith.extui %0 : i1 to i32
    %c0_i32_0 = arith.constant 0 : i32
    %2 = arith.cmpi ne, %1, %c0_i32_0 : i32
    scf.if %2 {
      %cst_10 = arith.constant 0.000000e+00 : f32
      %12 = vector.broadcast %cst_10 : f32 to vector<16x256xf32>
      %c0_11 = arith.constant 0 : index
      %c0_12 = arith.constant 0 : index
      %13 = vector.load %arg7[%c0_11, %c0_12] : memref<16x256xf32, #tpu.memory_space<vmem>>, vector<16x256xf32>
      tpu.vector_store %arg7[%c0_11, %c0_12], %12 {strides = array<i32>} : memref<16x256xf32, #tpu.memory_space<vmem>>, vector<16x256xf32>,
    } else {
    }
    %c0 = arith.constant 0 : index
    %c0_1 = arith.constant 0 : index
    %3 = vector.load %arg7[%c0, %c0_1] : memref<16x256xf32, #tpu.memory_space<vmem>>, vector<16x256xf32>
    %c0_2 = arith.constant 0 : index
    %c0_3 = arith.constant 0 : index
    %4 = vector.load %arg3[%c0_2, %c0_3] : memref<16x128xf32, #tpu.memory_space<vmem>>, vector<16x128xf32>
    %c0_4 = arith.constant 0 : index
    %c0_5 = arith.constant 0 : index
    %5 = vector.load %arg4[%c0_4, %c0_5] : memref<128x256xf32, #tpu.memory_space<vmem>>, vector<128x256xf32>
    %cst = arith.constant dense<0.000000e+00> : vector<16x256xf32>
    %6 = tpu.matmul %4, %5, %cst {dimension_numbers = #tpu.dot_dimension_numbers<[1], [0], [0], [1], [0, 0, 1, 1], [], []>} : vector<16x128xf32>, vector<128x256xf32>, vector<16x256xf32> -> vector<16x256xf32>
    %7 = arith.addf %3, %6 : vector<16x256xf32>
    %c0_6 = arith.constant 0 : index
    %c0_7 = arith.constant 0 : index
    %8 = vector.load %arg7[%c0_6, %c0_7] : memref<16x256xf32, #tpu.memory_space<vmem>>, vector<16x256xf32>
    tpu.vector_store %arg7[%c0_6, %c0_7], %7 {strides = array<i32>} : memref<16x256xf32, #tpu.memory_space<vmem>>, vector<16x256xf32>,
    %c0_i32_8 = arith.constant 0 : i32
    %9 = arith.cmpi eq, %arg2, %c0_i32_8 : i32
    %10 = arith.extui %9 : i1 to i32
    %c0_i32_9 = arith.constant 0 : i32
    %11 = arith.cmpi ne, %10, %c0_i32_9 : i32
    scf.if %11 {
      %c0_10 = arith.constant 0 : index
      %c0_11 = arith.constant 0 : index
      %12 = vector.load %arg7[%c0_10, %c0_11] : memref<16x256xf32, #tpu.memory_space<vmem>>, vector<16x256xf32>
      %c0_12 = arith.constant 0 : index
      %c0_13 = arith.constant 0 : index
      %13 = vector.load %arg5[%c0_12, %c0_13] : memref<1x256xf32, #tpu.memory_space<vmem>>, vector<1x256xf32>
      %14 = vector.broadcast %13 : vector<1x256xf32> to vector<16x256xf32>
      %15 = arith.addf %12, %14 : vector<16x256xf32>
      %c0_14 = arith.constant 0 : index
      %c0_15 = arith.constant 0 : index
      %16 = vector.load %arg6[%c0_14, %c0_15] : memref<16x256xf32, #tpu.memory_space<vmem>>, vector<16x256xf32>
      tpu.vector_store %arg6[%c0_14, %c0_15], %15 {strides = array<i32>} : memref<16x256xf32, #tpu.memory_space<vmem>>, vector<16x256xf32>,
    } else {
    }
    return
  }
  func.func @transform_0(%arg0: i32, %arg1: i32, %arg2: i32) -> (i32, i32) {
    %c0_i32 = arith.constant 0 : i32
    return %arg0, %arg2 : i32, i32
  }
  func.func @transform_1(%arg0: i32, %arg1: i32, %arg2: i32) -> (i32, i32) {
    %c0_i32 = arith.constant 0 : i32
    return %arg2, %arg1 : i32, i32
  }
  func.func @transform_2(%arg0: i32, %arg1: i32, %arg2: i32) -> (i32, i32) {
    %c0_i32 = arith.constant 0 : i32
    %c0_i32_0 = arith.constant 0 : i32
    return %c0_i32, %arg1 : i32, i32
  }
  func.func @transform_3(%arg0: i32, %arg1: i32, %arg2: i32) -> (i32, i32) {
    %c0_i32 = arith.constant 0 : i32
    return %arg0, %arg1 : i32, i32
  }
}

module attributes {stable_mosaic.version = 11 : i64} {
  func.func @_generator_kernel(%arg0: i32, %arg1: memref<16x128xf32, #tpu.memory_space<vmem>>, %arg2: memref<128x128xf32, #tpu.memory_space<vmem>>, %arg3: memref<1x128xf32, #tpu.memory_space<vmem>>, %arg4: memref<16x128xf32, #tpu.memory_space<vmem>>) attributes {dimension_semantics = [#tpu.dimension_semantics<parallel>], iteration_bounds = array<i64: 1>, scalar_prefetch = 0 : i64, scratch_operands = 0 : i64, tpu.core_type = #tpu.core_type<tc>, window_params = [{transform_indices = @transform_0, window_bounds = array<i64: 16, 128>}, {pipeline_mode = #tpu.pipeline_mode<synchronous>, transform_indices = @transform_1, window_bounds = array<i64: 128, 128>}, {pipeline_mode = #tpu.pipeline_mode<synchronous>, transform_indices = @transform_2, window_bounds = array<i64: 1, 128>}, {transform_indices = @transform_3, window_bounds = array<i64: 16, 128>}]} {
    %c0 = arith.constant 0 : index
    %c0_0 = arith.constant 0 : index
    %0 = vector.load %arg1[%c0, %c0_0] : memref<16x128xf32, #tpu.memory_space<vmem>>, vector<16x128xf32>
    %c0_1 = arith.constant 0 : index
    %c0_2 = arith.constant 0 : index
    %1 = vector.load %arg2[%c0_1, %c0_2] : memref<128x128xf32, #tpu.memory_space<vmem>>, vector<128x128xf32>
    %cst = arith.constant dense<0.000000e+00> : vector<16x128xf32>
    %2 = tpu.matmul %0, %1, %cst {dimension_numbers = #tpu.dot_dimension_numbers<[1], [0], [0], [1], [0, 0, 1, 1], [], []>} : vector<16x128xf32>, vector<128x128xf32>, vector<16x128xf32> -> vector<16x128xf32>
    %c0_3 = arith.constant 0 : index
    %c0_4 = arith.constant 0 : index
    %3 = vector.load %arg3[%c0_3, %c0_4] : memref<1x128xf32, #tpu.memory_space<vmem>>, vector<1x128xf32>
    %4 = vector.broadcast %3 : vector<1x128xf32> to vector<16x128xf32>
    %5 = arith.addf %2, %4 : vector<16x128xf32>
    %cst_5 = arith.constant dense<0xFF800000> : vector<16xf32>
    %6 = vector.multi_reduction <maximumf>, %5, %cst_5 [1] : vector<16x128xf32> to vector<16xf32>
    %7 = vector.shape_cast %6 : vector<16xf32> to vector<16x1xf32>
    %8 = vector.broadcast %7 : vector<16x1xf32> to vector<16x128xf32>
    %9 = arith.subf %5, %8 : vector<16x128xf32>
    %10 = math.exp %9 : vector<16x128xf32>
    %cst_6 = arith.constant dense<0.000000e+00> : vector<16xf32>
    %11 = vector.multi_reduction <add>, %10, %cst_6 [1] : vector<16x128xf32> to vector<16xf32>
    %12 = vector.shape_cast %11 : vector<16xf32> to vector<16x1xf32>
    %13 = math.log %12 : vector<16x1xf32>
    %14 = vector.broadcast %13 : vector<16x1xf32> to vector<16x128xf32>
    %15 = arith.subf %9, %14 : vector<16x128xf32>
    %c0_7 = arith.constant 0 : index
    %c0_8 = arith.constant 0 : index
    %16 = vector.load %arg4[%c0_7, %c0_8] : memref<16x128xf32, #tpu.memory_space<vmem>>, vector<16x128xf32>
    tpu.vector_store %arg4[%c0_7, %c0_8], %15 {strides = array<i32>} : memref<16x128xf32, #tpu.memory_space<vmem>>, vector<16x128xf32>,
    return
  }
  func.func @transform_0(%arg0: i32) -> (i32, i32) {
    %c0_i32 = arith.constant 0 : i32
    %c0_i32_0 = arith.constant 0 : i32
    return %arg0, %c0_i32 : i32, i32
  }
  func.func @transform_1(%arg0: i32) -> (i32, i32) {
    %c0_i32 = arith.constant 0 : i32
    %c0_i32_0 = arith.constant 0 : i32
    %c0_i32_1 = arith.constant 0 : i32
    return %c0_i32, %c0_i32_0 : i32, i32
  }
  func.func @transform_2(%arg0: i32) -> (i32, i32) {
    %c0_i32 = arith.constant 0 : i32
    %c0_i32_0 = arith.constant 0 : i32
    %c0_i32_1 = arith.constant 0 : i32
    return %c0_i32, %c0_i32_0 : i32, i32
  }
  func.func @transform_3(%arg0: i32) -> (i32, i32) {
    %c0_i32 = arith.constant 0 : i32
    %c0_i32_0 = arith.constant 0 : i32
    return %arg0, %c0_i32 : i32, i32
  }
}

</mosaic_0001>

<llo_original>
// kernel: full_model_forward.30
$region0: #{full_model_forward.30}
  #allocation0 [shape = 'u32[]', space=smem, size = 0x4, offset = 0x4, fixed_abs, tag = 'smem constant byte address 0x4 - core index']
  #allocation1 [shape = 'u32[144,128]{1,0:T(1,128)}', space=vmem, size = 0x12000, scoped, tag = 'internal scratch']
  %s0 = inlined_call_operand.vmem [shape: f32[16,128], index: 0, kind: input, shape index: {}]
  %s1 = inlined_call_operand.vmem [shape: f32[128,256], index: 1, kind: input, shape index: {}]
  %s2 = inlined_call_operand.vmem [shape: f32[1,256], index: 2, kind: input, shape index: {}]
  %s3 = inlined_call_operand.vmem [shape: f32[256,128], index: 3, kind: input, shape index: {}]
  %s4 = inlined_call_operand.vmem [shape: f32[1,128], index: 4, kind: input, shape index: {}]
  %s5 = inlined_call_operand.vmem [shape: f32[1,128], index: 5, kind: input, shape index: {}]
  %s6 = inlined_call_operand.vmem [shape: f32[1,128], index: 6, kind: input, shape index: {}]
  %s7 = inlined_call_operand.vmem [shape: f32[16,128], index: 7, kind: output, shape index: {}]
  %s8 = sld [smem:[#allocation0]]
  $region38: #{full_model_forward.30} parent=0
    _
  %s10 = ssub.s32 1, %s8
  %s11 = scalar_select 0, %s10, %s8
  // Predicated region
  $region2: #{full_model_forward.30} parent=0 // pred_check
    _
  $region3: #{full_model_forward.30} parent=0 // pred_check_branch
    %13 = sbr.rel (0) target = $region5
  $region4: #{full_model_forward.30} parent=0 // pred_region
    _
  $region5: #{full_model_forward.30} parent=0 // pred_fallthru
    _
  // Predicated region
  $region6: #{full_model_forward.30} parent=0 // pred_check
    _
  $region7: #{full_model_forward.30} parent=0 // pred_check_branch
    %15 = sbr.rel (0) target = $region9
  $region8: #{full_model_forward.30} parent=0 // pred_region
    _
  $region9: #{full_model_forward.30} parent=0 // pred_fallthru
    _
  // Predicated region
  $region10: #{full_model_forward.30} parent=0 // pred_check
    _
  $region11: #{full_model_forward.30} parent=0 // pred_check_branch
    %17 = sbr.rel (0) target = $region13
  $region12: #{full_model_forward.30} parent=0 // pred_region
    _
  $region13: #{full_model_forward.30} parent=0 // pred_fallthru
    _
  // Predicated region
  $region14: #{full_model_forward.30} parent=0 // pred_check
    _
  $region15: #{full_model_forward.30} parent=0 // pred_check_branch
    %19 = sbr.rel (0) target = $region17
  $region16: #{full_model_forward.30} parent=0 // pred_region
    _
  $region17: #{full_model_forward.30} parent=0 // pred_fallthru
    _
  // Predicated region
  $region18: #{full_model_forward.30} parent=0 // pred_check
    _
  $region19: #{full_model_forward.30} parent=0 // pred_check_branch
    %21 = sbr.rel (0) target = $region21
  $region20: #{full_model_forward.30} parent=0 // pred_region
    _
  $region21: #{full_model_forward.30} parent=0 // pred_fallthru
    _
  // Predicated region
  $region22: #{full_model_forward.30} parent=0 // pred_check
    _
  $region23: #{full_model_forward.30} parent=0 // pred_check_branch
    %23 = sbr.rel (0) target = $region25
  $region24: #{full_model_forward.30} parent=0 // pred_region
    _
  $region25: #{full_model_forward.30} parent=0 // pred_fallthru
    _
  // Predicated region
  $region26: #{full_model_forward.30} parent=0 // pred_check
    _
  $region27: #{full_model_forward.30} parent=0 // pred_check_branch
    %25 = sbr.rel (0) target = $region29
  $region28: #{full_model_forward.30} parent=0 // pred_region
    _
  $region29: #{full_model_forward.30} parent=0 // pred_fallthru
    _
  %v26 = vld [vmem:[%s0] sm:$0xff]
  %v27 = vld [vmem:[%s0 + $0x8] sm:$0xff]
  %v28 = vld [vmem:[%s1] sm:$0xff]
  %v29 = vld [vmem:[%s1 + $0x8] sm:$0xff]
  %v30 = vld [vmem:[%s1 + $0x10] sm:$0xff]
  %v31 = vld [vmem:[%s1 + $0x18] sm:$0xff]
  %v32 = vld [vmem:[%s1 + $0x20] sm:$0xff]
  %v33 = vld [vmem:[%s1 + $0x28] sm:$0xff]
  %v34 = vld [vmem:[%s1 + $0x30] sm:$0xff]
  %v35 = vld [vmem:[%s1 + $0x38] sm:$0xff]
  %v36 = vld [vmem:[%s1 + $0x40] sm:$0xff]
  %v37 = vld [vmem:[%s1 + $0x48] sm:$0xff]
  %v38 = vld [vmem:[%s1 + $0x50] sm:$0xff]
  %v39 = vld [vmem:[%s1 + $0x58] sm:$0xff]
  %v40 = vld [vmem:[%s1 + $0x60] sm:$0xff]
  %v41 = vld [vmem:[%s1 + $0x68] sm:$0xff]
  %v42 = vld [vmem:[%s1 + $0x70] sm:$0xff]
  %v43 = vld [vmem:[%s1 + $0x78] sm:$0xff]
  %v44 = vld [vmem:[%s1 + $0x80] sm:$0xff]
  %v45 = vld [vmem:[%s1 + $0x88] sm:$0xff]
  %v46 = vld [vmem:[%s1 + $0x90] sm:$0xff]
  %v47 = vld [vmem:[%s1 + $0x98] sm:$0xff]
  %v48 = vld [vmem:[%s1 + $0xa0] sm:$0xff]
  %v49 = vld [vmem:[%s1 + $0xa8] sm:$0xff]
  %v50 = vld [vmem:[%s1 + $0xb0] sm:$0xff]
  %v51 = vld [vmem:[%s1 + $0xb8] sm:$0xff]
  %v52 = vld [vmem:[%s1 + $0xc0] sm:$0xff]
  %v53 = vld [vmem:[%s1 + $0xc8] sm:$0xff]
  %v54 = vld [vmem:[%s1 + $0xd0] sm:$0xff]
  %v55 = vld [vmem:[%s1 + $0xd8] sm:$0xff]
  %v56 = vld [vmem:[%s1 + $0xe0] sm:$0xff]
  %v57 = vld [vmem:[%s1 + $0xe8] sm:$0xff]
  %v58 = vld [vmem:[%s1 + $0xf0] sm:$0xff]
  %v59 = vld [vmem:[%s1 + $0xf8] sm:$0xff]
  %v60 = vld [vmem:[%s2] sm:$0x3]
  %v62 = vlaneseq
  %v63 = vshrl.u32 %v62, 7
  %v64 = vsub.s32 0, %v63
  %v65 = vrot.slane %v60, %v64
  %v66 = vlaneseq
  %v67 = vshrl.u32 %v66, 7
  %v68 = vsub.s32 1, %v67
  %v69 = vrot.slane %v60, %v68
  %72 = vmatprep.subr.mxu0 %v59
  %73 = vmatpush1.msra.mxu0 %v58
  %74 = vmatprep.subr.mxu0 %v57
  %75 = vmatpush1.msra.mxu0 %v56
  %76 = vmatprep.subr.mxu0 %v55
  %77 = vmatpush1.msra.mxu0 %v54
  %78 = vmatprep.subr.mxu0 %v53
  %79 = vmatpush1.msra.mxu0 %v52
  %80 = vmatprep.subr.mxu0 %v51
  %81 = vmatpush1.msra.mxu0 %v50
  %82 = vmatprep.subr.mxu0 %v49
  %83 = vmatpush1.msra.mxu0 %v48
  %84 = vmatprep.subr.mxu0 %v47
  %85 = vmatpush1.msra.mxu0 %v46
  %86 = vmatprep.subr.mxu0 %v45
  %87 = vmatpush1.msra.mxu0 %v44
  %88 = vmatprep.subr.mxu0 %v43
  %89 = vmatpush1.msra.mxu0 %v42
  %90 = vmatprep.subr.mxu0 %v41
  %91 = vmatpush1.msra.mxu0 %v40
  %92 = vmatprep.subr.mxu0 %v39
  %93 = vmatpush1.msra.mxu0 %v38
  %94 = vmatprep.subr.mxu0 %v37
  %95 = vmatpush1.msra.mxu0 %v36
  %96 = vmatprep.subr.mxu0 %v35
  %97 = vmatpush1.msra.mxu0 %v34
  %98 = vmatprep.subr.mxu0 %v33
  %99 = vmatpush1.msra.mxu0 %v32
  %100 = vmatprep.subr.mxu0 %v31
  %101 = vmatpush1.msra.mxu0 %v30
  %102 = vmatprep.subr.mxu0 %v29
  %103 = vmatpush1.msra.mxu0 %v28
  %104 = vmatprep.subr.mxu0 0.0
  %105 = vmatpush2.msra.mxu0 0.0
  %106 = vmatprep.subr.mxu0 0.0
  %107 = vmatpush2.msra.mxu0 0.0
  %108 = vmatprep.subr.mxu0 0.0
  %109 = vmatpush2.msra.mxu0 0.0
  %110 = vmatprep.subr.mxu0 0.0
  %111 = vmatpush2.msra.mxu0 0.0
  %112 = vmatprep.subr.mxu0 0.0
  %113 = vmatpush2.msra.mxu0 0.0
  %114 = vmatprep.subr.mxu0 0.0
  %115 = vmatpush2.msra.mxu0 0.0
  %116 = vmatprep.subr.mxu0 0.0
  %117 = vmatpush2.msra.mxu0 0.0
  %118 = vmatprep.subr.mxu0 0.0
  %119 = vmatpush2.msra.mxu0 0.0
  %120 = vmatprep.subr.mxu0 0.0
  %121 = vmatpush2.msra.mxu0 0.0
  %122 = vmatprep.subr.mxu0 0.0
  %123 = vmatpush2.msra.mxu0 0.0
  %124 = vmatprep.subr.mxu0 0.0
  %125 = vmatpush2.msra.mxu0 0.0
  %126 = vmatprep.subr.mxu0 0.0
  %127 = vmatpush2.msra.mxu0 0.0
  %128 = vmatprep.subr.mxu0 0.0
  %129 = vmatpush2.msra.mxu0 0.0
  %130 = vmatprep.subr.mxu0 0.0
  %131 = vmatpush2.msra.mxu0 0.0
  %132 = vmatprep.subr.mxu0 0.0
  %133 = vmatpush2.msra.mxu0 0.0
  %134 = vmatprep.subr.mxu0 0.0
  %135 = vmatpush2.msra.mxu0 0.0
  %136 = vmatprep.mubr.f32.mxu0 0.0
  %137 = vmatmul.mubr.f32.gmra.mxu0 %v26
  %v138 = vpop.f32.mrf.mxu0
  %v139 = vadd.f32 %v65, %v138
  %v140 = vpop.f32.mrf.mxu0
  %v141 = vadd.f32 %v69, %v140
  %142 = vmatprep.mubr.f32.mxu0 0.0
  %143 = vmatmul.mubr.f32.gmra.mxu0 %v27
  %v144 = vpop.f32.mrf.mxu0
  %v145 = vadd.f32 %v65, %v144
  %v146 = vpop.f32.mrf.mxu0
  %v147 = vadd.f32 %v69, %v146
  %148 = vdwg.mxu0
  %v149 = vmax.f32 %v139, 0.0
  %v150 = vmax.f32 %v141, 0.0
  %v151 = vmax.f32 %v145, 0.0
  %v152 = vmax.f32 %v147, 0.0
  %v153 = vld [vmem:[%s3] sm:$0xff]
  %v154 = vld [vmem:[%s3 + $0x8] sm:$0xff]
  %v155 = vld [vmem:[%s3 + $0x10] sm:$0xff]
  %v156 = vld [vmem:[%s3 + $0x18] sm:$0xff]
  %v157 = vld [vmem:[%s3 + $0x20] sm:$0xff]
  %v158 = vld [vmem:[%s3 + $0x28] sm:$0xff]
  %v159 = vld [vmem:[%s3 + $0x30] sm:$0xff]
  %v160 = vld [vmem:[%s3 + $0x38] sm:$0xff]
  %v161 = vld [vmem:[%s3 + $0x40] sm:$0xff]
  %v162 = vld [vmem:[%s3 + $0x48] sm:$0xff]
  %v163 = vld [vmem:[%s3 + $0x50] sm:$0xff]
  %v164 = vld [vmem:[%s3 + $0x58] sm:$0xff]
  %v165 = vld [vmem:[%s3 + $0x60] sm:$0xff]
  %v166 = vld [vmem:[%s3 + $0x68] sm:$0xff]
  %v167 = vld [vmem:[%s3 + $0x70] sm:$0xff]
  %v168 = vld [vmem:[%s3 + $0x78] sm:$0xff]
  %v169 = vld [vmem:[%s3 + $0x80] sm:$0xff]
  %v170 = vld [vmem:[%s3 + $0x88] sm:$0xff]
  %v171 = vld [vmem:[%s3 + $0x90] sm:$0xff]
  %v172 = vld [vmem:[%s3 + $0x98] sm:$0xff]
  %v173 = vld [vmem:[%s3 + $0xa0] sm:$0xff]
  %v174 = vld [vmem:[%s3 + $0xa8] sm:$0xff]
  %v175 = vld [vmem:[%s3 + $0xb0] sm:$0xff]
  %v176 = vld [vmem:[%s3 + $0xb8] sm:$0xff]
  %v177 = vld [vmem:[%s3 + $0xc0] sm:$0xff]
  %v178 = vld [vmem:[%s3 + $0xc8] sm:$0xff]
  %v179 = vld [vmem:[%s3 + $0xd0] sm:$0xff]
  %v180 = vld [vmem:[%s3 + $0xd8] sm:$0xff]
  %v181 = vld [vmem:[%s3 + $0xe0] sm:$0xff]
  %v182 = vld [vmem:[%s3 + $0xe8] sm:$0xff]
  %v183 = vld [vmem:[%s3 + $0xf0] sm:$0xff]
  %v184 = vld [vmem:[%s3 + $0xf8] sm:$0xff]
  %v185 = vld [vmem:[%s4] sm:$0x1]
  %v187 = vlaneseq
  %v188 = vshrl.u32 %v187, 7
  %v189 = vsub.s32 0, %v188
  %v190 = vrot.slane %v185, %v189
  %192 = vmatprep.subr.mxu0 0.0
  %193 = vmatpush1.msra.mxu0 %v168
  %194 = vmatprep.subr.mxu0 0.0
  %195 = vmatpush1.msra.mxu0 %v167
  %196 = vmatprep.subr.mxu0 0.0
  %197 = vmatpush1.msra.mxu0 %v166
  %198 = vmatprep.subr.mxu0 0.0
  %199 = vmatpush1.msra.mxu0 %v165
  %200 = vmatprep.subr.mxu0 0.0
  %201 = vmatpush1.msra.mxu0 %v164
  %202 = vmatprep.subr.mxu0 0.0
  %203 = vmatpush1.msra.mxu0 %v163
  %204 = vmatprep.subr.mxu0 0.0
  %205 = vmatpush1.msra.mxu0 %v162
  %206 = vmatprep.subr.mxu0 0.0
  %207 = vmatpush1.msra.mxu0 %v161
  %208 = vmatprep.subr.mxu0 0.0
  %209 = vmatpush1.msra.mxu0 %v160
  %210 = vmatprep.subr.mxu0 0.0
  %211 = vmatpush1.msra.mxu0 %v159
  %212 = vmatprep.subr.mxu0 0.0
  %213 = vmatpush1.msra.mxu0 %v158
  %214 = vmatprep.subr.mxu0 0.0
  %215 = vmatpush1.msra.mxu0 %v157
  %216 = vmatprep.subr.mxu0 0.0
  %217 = vmatpush1.msra.mxu0 %v156
  %218 = vmatprep.subr.mxu0 0.0
  %219 = vmatpush1.msra.mxu0 %v155
  %220 = vmatprep.subr.mxu0 0.0
  %221 = vmatpush1.msra.mxu0 %v154
  %222 = vmatprep.subr.mxu0 0.0
  %223 = vmatpush1.msra.mxu0 %v153
  %224 = vmatprep.subr.mxu0 0.0
  %225 = vmatpush2.msra.mxu0 %v184
  %226 = vmatprep.subr.mxu0 0.0
  %227 = vmatpush2.msra.mxu0 %v183
  %228 = vmatprep.subr.mxu0 0.0
  %229 = vmatpush2.msra.mxu0 %v182
  %230 = vmatprep.subr.mxu0 0.0
  %231 = vmatpush2.msra.mxu0 %v181
  %232 = vmatprep.subr.mxu0 0.0
  %233 = vmatpush2.msra.mxu0 %v180
  %234 = vmatprep.subr.mxu0 0.0
  %235 = vmatpush2.msra.mxu0 %v179
  %236 = vmatprep.subr.mxu0 0.0
  %237 = vmatpush2.msra.mxu0 %v178
  %238 = vmatprep.subr.mxu0 0.0
  %239 = vmatpush2.msra.mxu0 %v177
  %240 = vmatprep.subr.mxu0 0.0
  %241 = vmatpush2.msra.mxu0 %v176
  %242 = vmatprep.subr.mxu0 0.0
  %243 = vmatpush2.msra.mxu0 %v175
  %244 = vmatprep.subr.mxu0 0.0
  %245 = vmatpush2.msra.mxu0 %v174
  %246 = vmatprep.subr.mxu0 0.0
  %247 = vmatpush2.msra.mxu0 %v173
  %248 = vmatprep.subr.mxu0 0.0
  %249 = vmatpush2.msra.mxu0 %v172
  %250 = vmatprep.subr.mxu0 0.0
  %251 = vmatpush2.msra.mxu0 %v171
  %252 = vmatprep.subr.mxu0 0.0
  %253 = vmatpush2.msra.mxu0 %v170
  %254 = vmatprep.subr.mxu0 0.0
  %255 = vmatpush2.msra.mxu0 %v169
  %256 = vmatprep.mubr.f32.mxu0 %v150
  %257 = vmatmul.mubr.f32.gmra.mxu0 %v149
  %v258 = vpop.f32.mrf.mxu0
  %v259 = vadd.f32 %v190, %v258
  %v260 = vpop.f32.mrf.mxu0
  %261 = vmatprep.mubr.f32.mxu0 %v152
  %262 = vmatmul.mubr.f32.gmra.mxu0 %v151
  %v263 = vpop.f32.mrf.mxu0
  %v264 = vadd.f32 %v190, %v263
  %v265 = vpop.f32.mrf.mxu0
  %266 = vdwg.mxu0
  %v267 = vadd.f32 %v26, %v259
  %v268 = vadd.f32 %v27, %v264
  %v269 = vld [vmem:[%s5] sm:$0x1]
  %v270 = vld [vmem:[%s6] sm:$0x1]
  %271 = vadd.xlane.f32.xlu0 %v267
  %v272 = vpop.xlane.xlu0 %271
  %273 = vadd.xlane.f32.xlu0 %v268
  %v274 = vpop.xlane.xlu0 %273
  %v275 = vrcp.pop 128.0
  %v276 = vmul.f32 %v272, %v275
  %v277 = vmul.f32 %v274, %v275
  %v278 = vsub.f32 %v267, %v276
  %v279 = vsub.f32 %v268, %v277
  %v280 = vmul.f32 %v278, %v278
  %v281 = vmul.f32 %v279, %v279
  %282 = vadd.xlane.f32.xlu0 %v280
  %v283 = vpop.xlane.xlu0 %282
  %284 = vadd.xlane.f32.xlu0 %v281
  %v285 = vpop.xlane.xlu0 %284
  %v286 = vmul.f32 %v283, %v275
  %v287 = vmul.f32 %v285, %v275
  %v288 = vadd.f32 %v286, 1e-05
  %v289 = vadd.f32 %v287, 1e-05
  %v290 = vrsqrt.pop %v288
  %v291 = vrsqrt.pop %v289
  %v292 = vmul.f32 %v278, %v290
  %v293 = vmul.f32 %v279, %v291
  %v295 = vlaneseq
  %v296 = vshrl.u32 %v295, 7
  %v297 = vsub.s32 0, %v296
  %v298 = vrot.slane %v269, %v297
  %v300 = vmul.f32 %v292, %v298
  %v301 = vmul.f32 %v293, %v298
  %v303 = vlaneseq
  %v304 = vshrl.u32 %v303, 7
  %v305 = vsub.s32 0, %v304
  %v306 = vrot.slane %v270, %v305
  %v308 = vadd.f32 %v300, %v306
  %v309 = vadd.f32 %v301, %v306
  %310 = vst [vmem:[%s7] sm:$0xff] %v308
  %311 = vst [vmem:[%s7 + $0x8] sm:$0xff] %v309
  // Predicated region
  $region30: #{full_model_forward.30} parent=0 // pred_check
    _
  $region31: #{full_model_forward.30} parent=0 // pred_check_branch
    %313 = sbr.rel (0) target = $region33
  $region32: #{full_model_forward.30} parent=0 // pred_region
    _
  $region33: #{full_model_forward.30} parent=0 // pred_fallthru
    _
  // Predicated region
  $region34: #{full_model_forward.30} parent=0 // pred_check
    _
  $region35: #{full_model_forward.30} parent=0 // pred_check_branch
    %315 = sbr.rel (0) target = $region37
  $region36: #{full_model_forward.30} parent=0 // pred_region
    _
  $region37: #{full_model_forward.30} parent=0 // pred_fallthru
    _

// kernel: full_model_forward.27
$region0: #{full_model_forward.27}
  #allocation0 [shape = 'u32[]', space=smem, size = 0x4, offset = 0x4, fixed_abs, tag = 'smem constant byte address 0x4 - core index']
  #allocation1 [shape = 'u32[144,128]{1,0:T(1,128)}', space=vmem, size = 0x12000, scoped, tag = 'internal scratch']
  #allocation2 [shape = 'f32[16,128]{1,0:T(8,128)}', space=vmem, size = 0x2000, scoped, tag = 'scratch operand']
  %s0 = inlined_call_operand.vmem [shape: f32[16,128], index: 0, kind: input, shape index: {}]
  %s1 = inlined_call_operand.vmem [shape: f32[128,384], index: 1, kind: input, shape index: {}]
  %s2 = inlined_call_operand.vmem [shape: f32[1,384], index: 2, kind: input, shape index: {}]
  %s3 = inlined_call_operand.vmem [shape: f32[16,384], index: 3, kind: output, shape index: {}]
  %s4 = sld [smem:[#allocation0]]
  $region125: #{full_model_forward.27} parent=0
    _
  %s6 = ssub.s32 1, %s4
  %s7 = scalar_select 0, %s6, %s4
  $region1: #{full_model_forward.27} parent=0
    #allocation3 [shape = 'u8[131072]{0}', space=vmem, size = 0x20000, scoped, tag = 'input window, operand 1']
    #allocation4 [shape = 'u8[16384]{0}', space=vmem, size = 0x4000, scoped, tag = 'output window, operand 0']
    loop: start=0, step=1, limit=5
    $region2: #{full_model_forward.27} parent=1 // loop_pre_header
      _
    $region3: #{full_model_forward.27} parent=1 // loop_header
      %s9 = sphi 0, %s13
      %p10 = scmp.ge.s32.totalorder %s9, 5
      %s16 = sphi 0, %s35
      %s17 = sphi 0, %s31
      %s18 = sphi 0, %s27
      %s19 = sphi 0, %s16
      %s20 = sphi 0, %s17
      %s21 = sphi 0, %s18
      %s22 = sphi 0, %s19
      %s23 = sphi 0, %s20
      %s24 = sphi 0, %s21
      %s40 = sphi 0, %s42
      %s43 = sphi 0, %s40
      %s44 = sphi 0, %s43
      %s60 = sphi 0, %s44
      %s68 = sphi 0, %s70
      %s71 = sphi 0, %s68
      %s72 = sphi 0, %s71
      %s88 = sphi 0, %s72
      %s94 = sphi 0, %s96
      %s97 = sphi 0, %s94
      %s98 = sphi 0, %s97
      %s114 = sphi 0, %s98
      %s122 = sphi 0, %s124
      %s125 = sphi 0, %s122
      %s126 = sphi 0, %s125
      %s142 = sphi 0, %s126
    $region4: #{full_model_forward.27} parent=1 // loop_header_branch
      %12 = sbr.rel (%p10) target = $region8
    $region5: #{full_model_forward.27} parent=1 // loop_body
      %s14 = ssub.s32 %s9, 1
      %s15 = ssub.s32 %s9, 2
      %s25 = sadd.s32 1, %s18
      %p26 = scmp.ge.s32.totalorder %s25, 1
      %s27 = scalar_select %p26, 0, %s25
      %s28 = sadd.s32 1, %s17
      %s29 = scalar_select %p26, %s28, %s17
      %p30 = scmp.ge.s32.totalorder %s29, 3
      %s31 = scalar_select %p30, 0, %s29
      %s32 = sadd.s32 1, %s16
      %s33 = scalar_select %p30, %s32, %s16
      %p34 = scmp.ge.s32.totalorder %s33, 1
      %s35 = scalar_select %p34, 0, %s33
      %s36 = ssub.s32 %s16, %s35
      %s37 = ssub.s32 %s18, %s27
      %s38 = sor.u32 %s36, %s37
      %p39 = scmp.eq.s32.totalorder %s38, 0
      %s41 = sadd.s32 %s40, 1
      %s42 = scalar_select %p39, %s40, %s41
      %p45 = pneg %p39
      %p46 = scmp.eq.s32.totalorder %s9, 2
      %p47 = por %p45, %p46
      %p48 = scmp.ne.s32.totalorder %s40, %s43
      %p49 = scmp.eq.s32.totalorder %s9, 0
      %p50 = por %p48, %p49
      %p51 = scmp.ne.s32.totalorder %s40, %s43
      %p52 = scmp.eq.s32.totalorder %s14, 2
      %p53 = por %p51, %p52
      %p54 = scmp.ne.s32.totalorder %s43, %s44
      %p55 = scmp.eq.s32.totalorder %s14, 0
      %p56 = por %p54, %p55
      %p57 = scmp.ne.s32.totalorder %s43, %s44
      %p58 = scmp.eq.s32.totalorder %s15, 2
      %p59 = por %p57, %p58
      %p61 = scmp.ne.s32.totalorder %s44, %s60
      %p62 = scmp.eq.s32.totalorder %s15, 0
      %p63 = por %p61, %p62
      %s64 = ssub.s32 %s18, %s27
      %s65 = ssub.s32 %s17, %s31
      %s66 = sor.u32 %s64, %s65
      %p67 = scmp.eq.s32.totalorder %s66, 0
      %s69 = sadd.s32 %s68, 1
      %s70 = scalar_select %p67, %s68, %s69
      %p73 = pneg %p67
      %p74 = scmp.eq.s32.totalorder %s9, 2
      %p75 = por %p73, %p74
      %p76 = scmp.ne.s32.totalorder %s68, %s71
      %p77 = scmp.eq.s32.totalorder %s9, 0
      %p78 = por %p76, %p77
      %p79 = scmp.ne.s32.totalorder %s68, %s71
      %p80 = scmp.eq.s32.totalorder %s14, 2
      %p81 = por %p79, %p80
      %p82 = scmp.ne.s32.totalorder %s71, %s72
      %p83 = scmp.eq.s32.totalorder %s14, 0
      %p84 = por %p82, %p83
      %p85 = scmp.ne.s32.totalorder %s71, %s72
      %p86 = scmp.eq.s32.totalorder %s15, 2
      %p87 = por %p85, %p86
      %p89 = scmp.ne.s32.totalorder %s72, %s88
      %p90 = scmp.eq.s32.totalorder %s15, 0
      %p91 = por %p89, %p90
      %s92 = ssub.s32 %s17, %s31
      %p93 = scmp.eq.s32.totalorder %s92, 0
      %s95 = sadd.s32 %s94, 1
      %s96 = scalar_select %p93, %s94, %s95
      %p99 = pneg %p93
      %p100 = scmp.eq.s32.totalorder %s9, 2
      %p101 = por %p99, %p100
      %p102 = scmp.ne.s32.totalorder %s94, %s97
      %p103 = scmp.eq.s32.totalorder %s9, 0
      %p104 = por %p102, %p103
      %p105 = scmp.ne.s32.totalorder %s94, %s97
      %p106 = scmp.eq.s32.totalorder %s14, 2
      %p107 = por %p105, %p106
      %p108 = scmp.ne.s32.totalorder %s97, %s98
      %p109 = scmp.eq.s32.totalorder %s14, 0
      %p110 = por %p108, %p109
      %p111 = scmp.ne.s32.totalorder %s97, %s98
      %p112 = scmp.eq.s32.totalorder %s15, 2
      %p113 = por %p111, %p112
      %p115 = scmp.ne.s32.totalorder %s98, %s114
      %p116 = scmp.eq.s32.totalorder %s15, 0
      %p117 = por %p115, %p116
      %s118 = ssub.s32 %s16, %s35
      %s119 = ssub.s32 %s17, %s31
      %s120 = sor.u32 %s118, %s119
      %p121 = scmp.eq.s32.totalorder %s120, 0
      %s123 = sadd.s32 %s122, 1
      %s124 = scalar_select %p121, %s122, %s123
      %p127 = pneg %p121
      %p128 = scmp.eq.s32.totalorder %s9, 2
      %p129 = por %p127, %p128
      %p130 = scmp.ne.s32.totalorder %s122, %s125
      %p131 = scmp.eq.s32.totalorder %s9, 0
      %p132 = por %p130, %p131
      %p133 = scmp.ne.s32.totalorder %s122, %s125
      %p134 = scmp.eq.s32.totalorder %s14, 2
      %p135 = por %p133, %p134
      %p136 = scmp.ne.s32.totalorder %s125, %s126
      %p137 = scmp.eq.s32.totalorder %s14, 0
      %p138 = por %p136, %p137
      %p139 = scmp.ne.s32.totalorder %s125, %s126
      %p140 = scmp.eq.s32.totalorder %s15, 2
      %p141 = por %p139, %p140
      %p143 = scmp.ne.s32.totalorder %s126, %s142
      %p144 = scmp.eq.s32.totalorder %s15, 0
      %p145 = por %p143, %p144
      %p146 = scmp.le.s32.totalorder 1, %s9
      %p147 = scmp.lt.s32.totalorder %s9, 4
      %p148 = pnand %p146, %p147
      %p149 = pneg %p148
      // Predicated region
      $region9: #{full_model_forward.27} parent=5 // pred_check
        _
      $region10: #{full_model_forward.27} parent=5 // pred_check_branch
        %151 = sbr.rel (%p148) target = $region12
      $region11: #{full_model_forward.27} parent=5 // pred_region
        %s152 = ssub.s32 %s9, 1
        // Predicated region
        $region13: #{full_model_forward.27} parent=11 // pred_check
          %p153 = pneg %p56
        $region14: #{full_model_forward.27} parent=11 // pred_check_branch
          %155 = sbr.rel (%p153) target = $region16
        $region15: #{full_model_forward.27} parent=11 // pred_region
          %s156 = smul.u32 2, %s19
          %p157 = scmp.lt.s32.totalorder %s156, 1
          %s158 = scalar_select %p157, %s156, 1
          %p159 = scmp.lt.s32.totalorder %s21, 0
          %s160 = scalar_select %p159, %s21, 0
          %s161 = sadd.s32 %s160, %s158
          %s162 = smul.addr %s161, 8
          %s163 = scalar_lea.vmem %s0, %s162
          %s164 = smul.u32 2, %s19
        $region16: #{full_model_forward.27} parent=11 // pred_fallthru
          _
      $region12: #{full_model_forward.27} parent=5 // pred_fallthru
        _
      %p165 = scmp.lt.s32.totalorder %s9, 3
      // Predicated region
      $region17: #{full_model_forward.27} parent=5 // pred_check
        %p166 = pneg %p165
      $region18: #{full_model_forward.27} parent=5 // pred_check_branch
        %168 = sbr.rel (%p166) target = $region20
      $region19: #{full_model_forward.27} parent=5 // pred_region
        // Predicated region
        $region21: #{full_model_forward.27} parent=19 // pred_check
          %p169 = pneg %p78
        $region22: #{full_model_forward.27} parent=19 // pred_check_branch
          %171 = sbr.rel (%p169) target = $region24
        $region23: #{full_model_forward.27} parent=19 // pred_region
          %s172 = sand.u32 %s68, 1
          %s173 = sand.u32 %s68, 1
          %s174 = smul.addr %s173, 128
          %s175 = scalar_lea.vmem [#allocation3], %s174
          %s176 = smul.u32 16, %s18
          %s177 = smul.addr %s176, 3
          %s178 = sadd.s32 %s17, %s177
          %s179 = smul.addr %s178, 8
          %s180 = scalar_lea.vmem %s1, %s179
          // Predicated region
          $region25: #{full_model_forward.27} parent=23 // pred_check
            _
          $region26: #{full_model_forward.27} parent=23 // pred_check_branch
            %182 = sbr.rel (0) target = $region28
          $region27: #{full_model_forward.27} parent=23 // pred_region
            // Predicated region
            $region29: #{full_model_forward.27} parent=27 // pred_check
              _
            $region30: #{full_model_forward.27} parent=27 // pred_check_branch
              %184 = sbr.rel (0) target = $region32
            $region31: #{full_model_forward.27} parent=27 // pred_region
              // Predicated region
              $region44: #{full_model_forward.27} parent=31 // pred_check
                _
              $region45: #{full_model_forward.27} parent=31 // pred_check_branch
                %230 = sbr.rel (0) target = $region47
              $region46: #{full_model_forward.27} parent=31 // pred_region
                loop: start=0, step=1, limit=1
                $region48: #{full_model_forward.27} parent=46 // loop_pre_header
                  _
                $region49: #{full_model_forward.27} parent=46 // loop_header
                  %s232 = sphi 0, %s236
                  %p233 = scmp.ge.s32.totalorder %s232, 1
                  %s237 = sphi %s180, %s180
                  %s238 = sphi %s175, %s175
                $region50: #{full_model_forward.27} parent=46 // loop_header_branch
                  %235 = sbr.rel (%p233) target = $region54
                $region51: #{full_model_forward.27} parent=46 // loop_body
                  %v239 = vld [vmem:[%s237] sm:$0xff]
                  %240 = vst [vmem:[%s238] sm:$0xff] %v239
                  %v241 = vld [vmem:[%s237 + $0x18] sm:$0xff]
                  %242 = vst [vmem:[%s238 + $0x8] sm:$0xff] %v241
                  %v243 = vld [vmem:[%s237 + $0x30] sm:$0xff]
                  %244 = vst [vmem:[%s238 + $0x10] sm:$0xff] %v243
                  %v245 = vld [vmem:[%s237 + $0x48] sm:$0xff]
                  %246 = vst [vmem:[%s238 + $0x18] sm:$0xff] %v245
                  %v247 = vld [vmem:[%s237 + $0x60] sm:$0xff]
                  %248 = vst [vmem:[%s238 + $0x20] sm:$0xff] %v247
                  %v249 = vld [vmem:[%s237 + $0x78] sm:$0xff]
                  %250 = vst [vmem:[%s238 + $0x28] sm:$0xff] %v249
                  %v251 = vld [vmem:[%s237 + $0x90] sm:$0xff]
                  %252 = vst [vmem:[%s238 + $0x30] sm:$0xff] %v251
                  %v253 = vld [vmem:[%s237 + $0xa8] sm:$0xff]
                  %254 = vst [vmem:[%s238 + $0x38] sm:$0xff] %v253
                  %v255 = vld [vmem:[%s237 + $0xc0] sm:$0xff]
                  %256 = vst [vmem:[%s238 + $0x40] sm:$0xff] %v255
                  %v257 = vld [vmem:[%s237 + $0xd8] sm:$0xff]
                  %258 = vst [vmem:[%s238 + $0x48] sm:$0xff] %v257
                  %v259 = vld [vmem:[%s237 + $0xf0] sm:$0xff]
                  %260 = vst [vmem:[%s238 + $0x50] sm:$0xff] %v259
                  %v261 = vld [vmem:[%s237 + $0x108] sm:$0xff]
                  %262 = vst [vmem:[%s238 + $0x58] sm:$0xff] %v261
                  %v263 = vld [vmem:[%s237 + $0x120] sm:$0xff]
                  %264 = vst [vmem:[%s238 + $0x60] sm:$0xff] %v263
                  %v265 = vld [vmem:[%s237 + $0x138] sm:$0xff]
                  %266 = vst [vmem:[%s238 + $0x68] sm:$0xff] %v265
                  %v267 = vld [vmem:[%s237 + $0x150] sm:$0xff]
                  %268 = vst [vmem:[%s238 + $0x70] sm:$0xff] %v267
                  %v269 = vld [vmem:[%s237 + $0x168] sm:$0xff]
                  %270 = vst [vmem:[%s238 + $0x78] sm:$0xff] %v269
                $region52: #{full_model_forward.27} parent=46 // loop_footer
                  %s236 = sadd.s32 1, %s232
                $region53: #{full_model_forward.27} parent=46 // loop_footer_branch
                  %231 = sbr.rel target = $region49
                $region54: #{full_model_forward.27} parent=46 // loop_exit
                  _
              $region47: #{full_model_forward.27} parent=31 // pred_fallthru
                _
              // Predicated region
              $region55: #{full_model_forward.27} parent=31 // pred_check
                _
              $region56: #{full_model_forward.27} parent=31 // pred_check_branch
                %272 = sbr.rel target = $region58
              $region57: #{full_model_forward.27} parent=31 // pred_region
                _
              $region58: #{full_model_forward.27} parent=31 // pred_fallthru
                _
            $region32: #{full_model_forward.27} parent=27 // pred_fallthru
              _
            // Predicated region
            $region33: #{full_model_forward.27} parent=27 // pred_check
              _
            $region34: #{full_model_forward.27} parent=27 // pred_check_branch
              %186 = sbr.rel target = $region36
            $region35: #{full_model_forward.27} parent=27 // pred_region
              %s188 = ssub.s32 256, 1
              loop: start=0, step=1, limit=1
              $region37: #{full_model_forward.27} parent=35 // loop_pre_header
                _
              $region38: #{full_model_forward.27} parent=35 // loop_header
                %s190 = sphi 0, %s194
                %p191 = scmp.ge.s32.totalorder %s190, 1
                %s195 = sphi %s180, %s180
                %s196 = sphi %s175, %s175
              $region39: #{full_model_forward.27} parent=35 // loop_header_branch
                %193 = sbr.rel (%p191) target = $region43
              $region40: #{full_model_forward.27} parent=35 // loop_body
                %v197 = vld [vmem:[%s195] sm:%s188]
                %198 = vst [vmem:[%s196] sm:%s188] %v197
                %v199 = vld [vmem:[%s195 + $0x18] sm:%s188]
                %200 = vst [vmem:[%s196 + $0x8] sm:%s188] %v199
                %v201 = vld [vmem:[%s195 + $0x30] sm:%s188]
                %202 = vst [vmem:[%s196 + $0x10] sm:%s188] %v201
                %v203 = vld [vmem:[%s195 + $0x48] sm:%s188]
                %204 = vst [vmem:[%s196 + $0x18] sm:%s188] %v203
                %v205 = vld [vmem:[%s195 + $0x60] sm:%s188]
                %206 = vst [vmem:[%s196 + $0x20] sm:%s188] %v205
                %v207 = vld [vmem:[%s195 + $0x78] sm:%s188]
                %208 = vst [vmem:[%s196 + $0x28] sm:%s188] %v207
                %v209 = vld [vmem:[%s195 + $0x90] sm:%s188]
                %210 = vst [vmem:[%s196 + $0x30] sm:%s188] %v209
                %v211 = vld [vmem:[%s195 + $0xa8] sm:%s188]
                %212 = vst [vmem:[%s196 + $0x38] sm:%s188] %v211
                %v213 = vld [vmem:[%s195 + $0xc0] sm:%s188]
                %214 = vst [vmem:[%s196 + $0x40] sm:%s188] %v213
                %v215 = vld [vmem:[%s195 + $0xd8] sm:%s188]
                %216 = vst [vmem:[%s196 + $0x48] sm:%s188] %v215
                %v217 = vld [vmem:[%s195 + $0xf0] sm:%s188]
                %218 = vst [vmem:[%s196 + $0x50] sm:%s188] %v217
                %v219 = vld [vmem:[%s195 + $0x108] sm:%s188]
                %220 = vst [vmem:[%s196 + $0x58] sm:%s188] %v219
                %v221 = vld [vmem:[%s195 + $0x120] sm:%s188]
                %222 = vst [vmem:[%s196 + $0x60] sm:%s188] %v221
                %v223 = vld [vmem:[%s195 + $0x138] sm:%s188]
                %224 = vst [vmem:[%s196 + $0x68] sm:%s188] %v223
                %v225 = vld [vmem:[%s195 + $0x150] sm:%s188]
                %226 = vst [vmem:[%s196 + $0x70] sm:%s188] %v225
                %v227 = vld [vmem:[%s195 + $0x168] sm:%s188]
                %228 = vst [vmem:[%s196 + $0x78] sm:%s188] %v227
              $region41: #{full_model_forward.27} parent=35 // loop_footer
                %s194 = sadd.s32 1, %s190
              $region42: #{full_model_forward.27} parent=35 // loop_footer_branch
                %189 = sbr.rel target = $region38
              $region43: #{full_model_forward.27} parent=35 // loop_exit
                _
            $region36: #{full_model_forward.27} parent=27 // pred_fallthru
              _
          $region28: #{full_model_forward.27} parent=23 // pred_fallthru
            _
          %273 = vnop
        $region24: #{full_model_forward.27} parent=19 // pred_fallthru
          _
        // Predicated region
        $region59: #{full_model_forward.27} parent=19 // pred_check
          %p274 = pneg %p104
        $region60: #{full_model_forward.27} parent=19 // pred_check_branch
          %276 = sbr.rel (%p274) target = $region62
        $region61: #{full_model_forward.27} parent=19 // pred_region
          %p277 = scmp.lt.s32.totalorder %s17, 2
          %s278 = scalar_select %p277, %s17, 2
          %s279 = scalar_lea.vmem %s2, %s278
        $region62: #{full_model_forward.27} parent=19 // pred_fallthru
          _
      $region20: #{full_model_forward.27} parent=5 // pred_fallthru
        _
      %p280 = scmp.le.s32.totalorder 1, %s9
      %p281 = scmp.lt.s32.totalorder %s9, 4
      %p282 = pnand %p280, %p281
      %p283 = pneg %p282
      // Predicated region
      $region63: #{full_model_forward.27} parent=5 // pred_check
        _
      $region64: #{full_model_forward.27} parent=5 // pred_check_branch
        %285 = sbr.rel (%p282) target = $region66
      $region65: #{full_model_forward.27} parent=5 // pred_region
        %s286 = ssub.s32 %s9, 1
        %s287 = sand.u32 %s71, 1
        %s288 = sand.u32 %s71, 1
        %s289 = smul.addr %s288, 128
        %s290 = scalar_lea.vmem [#allocation3], %s289
        // Predicated region
        $region67: #{full_model_forward.27} parent=65 // pred_check
          %p291 = pneg %p84
        $region68: #{full_model_forward.27} parent=65 // pred_check_branch
          %293 = sbr.rel (%p291) target = $region70
        $region69: #{full_model_forward.27} parent=65 // pred_region
          _
        $region70: #{full_model_forward.27} parent=65 // pred_fallthru
          _
        %s294 = smul.u32 2, %s19
        %p295 = scmp.lt.s32.totalorder %s294, 1
        %s296 = scalar_select %p295, %s294, 1
        %p297 = scmp.lt.s32.totalorder %s21, 0
        %s298 = scalar_select %p297, %s21, 0
        %s299 = sadd.s32 %s298, %s296
        %s300 = smul.addr %s299, 8
        %s301 = scalar_lea.vmem %s0, %s300
        %p302 = pneg %p56
        %p303 = pneg %p53
        %s304 = sand.u32 %s71, 1
        %s305 = sand.u32 %s71, 1
        %s306 = smul.addr %s305, 128
        %s307 = scalar_lea.vmem [#allocation3], %s306
        %p308 = pneg %p84
        %p309 = pneg %p81
        %p310 = scmp.lt.s32.totalorder %s20, 2
        %s311 = scalar_select %p310, %s20, 2
        %s312 = scalar_lea.vmem %s2, %s311
        %p313 = pneg %p110
        %p314 = pneg %p107
        %p315 = pneg %p138
        %p316 = pneg %p135
        %s317 = sand.u32 %s125, 1
        %s318 = sand.u32 %s125, 1
        %s319 = smul.addr %s318, 16
        %s320 = scalar_lea.vmem [#allocation4], %s319
        %s321 = smul.u32 2, %s19
        %p322 = scmp.lt.s32.totalorder %s321, 1
        %s323 = scalar_select %p322, %s321, 1
        %p324 = scmp.lt.s32.totalorder %s21, 0
        %s325 = scalar_select %p324, %s21, 0
        %s326 = sadd.s32 %s325, %s323
        %s327 = smul.addr %s326, 8
        %s328 = scalar_lea.vmem %s0, %s327
        %s329 = smul.u32 2, %s19
        %s330 = smul.u32 16, %s21
        %p331 = scmp.lt.s32.totalorder %s20, 2
        %s332 = scalar_select %p331, %s20, 2
        %s333 = scalar_lea.vmem %s2, %s332
        %s334 = smul.u32 2, %s19
        %p335 = scmp.eq.s32.totalorder %s21, 0
        // Predicated region
        $region71: #{full_model_forward.27} parent=65 // pred_check
          %p336 = pneg %p335
        $region72: #{full_model_forward.27} parent=65 // pred_check_branch
          %338 = sbr.rel (%p336) target = $region74
        $region73: #{full_model_forward.27} parent=65 // pred_region
          %339 = vst [vmem:[#allocation2] sm:$0xff] 0.0
          %340 = vst [vmem:[#allocation2 + $0x8] sm:$0xff] 0.0
        $region74: #{full_model_forward.27} parent=65 // pred_fallthru
          _
        %v341 = vld [vmem:[#allocation2] sm:$0xff]
        %v342 = vld [vmem:[#allocation2 + $0x8] sm:$0xff]
        %v343 = vld [vmem:[%s328] sm:$0xff]
        %v344 = vld [vmem:[%s328 + $0x8] sm:$0xff]
        %v345 = vld [vmem:[%s290] sm:$0xff]
        %v346 = vld [vmem:[%s290 + $0x8] sm:$0xff]
        %v347 = vld [vmem:[%s290 + $0x10] sm:$0xff]
        %v348 = vld [vmem:[%s290 + $0x18] sm:$0xff]
        %v349 = vld [vmem:[%s290 + $0x20] sm:$0xff]
        %v350 = vld [vmem:[%s290 + $0x28] sm:$0xff]
        %v351 = vld [vmem:[%s290 + $0x30] sm:$0xff]
        %v352 = vld [vmem:[%s290 + $0x38] sm:$0xff]
        %v353 = vld [vmem:[%s290 + $0x40] sm:$0xff]
        %v354 = vld [vmem:[%s290 + $0x48] sm:$0xff]
        %v355 = vld [vmem:[%s290 + $0x50] sm:$0xff]
        %v356 = vld [vmem:[%s290 + $0x58] sm:$0xff]
        %v357 = vld [vmem:[%s290 + $0x60] sm:$0xff]
        %v358 = vld [vmem:[%s290 + $0x68] sm:$0xff]
        %v359 = vld [vmem:[%s290 + $0x70] sm:$0xff]
        %v360 = vld [vmem:[%s290 + $0x78] sm:$0xff]
        %361 = vmatprep.subr.mxu0 0.0
        %362 = vmatpush1.msra.mxu0 %v360
        %363 = vmatprep.subr.mxu0 0.0
        %364 = vmatpush1.msra.mxu0 %v359
        %365 = vmatprep.subr.mxu0 0.0
        %366 = vmatpush1.msra.mxu0 %v358
        %367 = vmatprep.subr.mxu0 0.0
        %368 = vmatpush1.msra.mxu0 %v357
        %369 = vmatprep.subr.mxu0 0.0
        %370 = vmatpush1.msra.mxu0 %v356
        %371 = vmatprep.subr.mxu0 0.0
        %372 = vmatpush1.msra.mxu0 %v355
        %373 = vmatprep.subr.mxu0 0.0
        %374 = vmatpush1.msra.mxu0 %v354
        %375 = vmatprep.subr.mxu0 0.0
        %376 = vmatpush1.msra.mxu0 %v353
        %377 = vmatprep.subr.mxu0 0.0
        %378 = vmatpush1.msra.mxu0 %v352
        %379 = vmatprep.subr.mxu0 0.0
        %380 = vmatpush1.msra.mxu0 %v351
        %381 = vmatprep.subr.mxu0 0.0
        %382 = vmatpush1.msra.mxu0 %v350
        %383 = vmatprep.subr.mxu0 0.0
        %384 = vmatpush1.msra.mxu0 %v349
        %385 = vmatprep.subr.mxu0 0.0
        %386 = vmatpush1.msra.mxu0 %v348
        %387 = vmatprep.subr.mxu0 0.0
        %388 = vmatpush1.msra.mxu0 %v347
        %389 = vmatprep.subr.mxu0 0.0
        %390 = vmatpush1.msra.mxu0 %v346
        %391 = vmatprep.subr.mxu0 0.0
        %392 = vmatpush1.msra.mxu0 %v345
        %393 = vmatprep.subr.mxu0 0.0
        %394 = vmatpush2.msra.mxu0 0.0
        %395 = vmatprep.subr.mxu0 0.0
        %396 = vmatpush2.msra.mxu0 0.0
        %397 = vmatprep.subr.mxu0 0.0
        %398 = vmatpush2.msra.mxu0 0.0
        %399 = vmatprep.subr.mxu0 0.0
        %400 = vmatpush2.msra.mxu0 0.0
        %401 = vmatprep.subr.mxu0 0.0
        %402 = vmatpush2.msra.mxu0 0.0
        %403 = vmatprep.subr.mxu0 0.0
        %404 = vmatpush2.msra.mxu0 0.0
        %405 = vmatprep.subr.mxu0 0.0
        %406 = vmatpush2.msra.mxu0 0.0
        %407 = vmatprep.subr.mxu0 0.0
        %408 = vmatpush2.msra.mxu0 0.0
        %409 = vmatprep.subr.mxu0 0.0
        %410 = vmatpush2.msra.mxu0 0.0
        %411 = vmatprep.subr.mxu0 0.0
        %412 = vmatpush2.msra.mxu0 0.0
        %413 = vmatprep.subr.mxu0 0.0
        %414 = vmatpush2.msra.mxu0 0.0
        %415 = vmatprep.subr.mxu0 0.0
        %416 = vmatpush2.msra.mxu0 0.0
        %417 = vmatprep.subr.mxu0 0.0
        %418 = vmatpush2.msra.mxu0 0.0
        %419 = vmatprep.subr.mxu0 0.0
        %420 = vmatpush2.msra.mxu0 0.0
        %421 = vmatprep.subr.mxu0 0.0
        %422 = vmatpush2.msra.mxu0 0.0
        %423 = vmatprep.subr.mxu0 0.0
        %424 = vmatpush2.msra.mxu0 0.0
        %425 = vmatprep.mubr.f32.mxu0 0.0
        %426 = vmatmul.mubr.f32.gmra.mxu0 %v343
        %v427 = vpop.f32.mrf.mxu0
        %v428 = vadd.f32 0.0, %v427
        %v429 = vpop.f32.mrf.mxu0
        %430 = vmatprep.mubr.f32.mxu0 0.0
        %431 = vmatmul.mubr.f32.gmra.mxu0 %v344
        %v432 = vpop.f32.mrf.mxu0
        %v433 = vadd.f32 0.0, %v432
        %v434 = vpop.f32.mrf.mxu0
        %435 = vdwg.mxu0
        %v436 = vadd.f32 %v341, %v428
        %v437 = vadd.f32 %v342, %v433
        %438 = vst [vmem:[#allocation2] sm:$0xff] %v436
        %439 = vst [vmem:[#allocation2 + $0x8] sm:$0xff] %v437
        // Predicated region
        $region75: #{full_model_forward.27} parent=65 // pred_check
          %p440 = pneg %p335
        $region76: #{full_model_forward.27} parent=65 // pred_check_branch
          %442 = sbr.rel (%p440) target = $region78
        $region77: #{full_model_forward.27} parent=65 // pred_region
          %v443 = vld [vmem:[#allocation2] sm:$0xff]
          %v444 = vld [vmem:[#allocation2 + $0x8] sm:$0xff]
          %v445 = vld [vmem:[%s333] sm:$0x1]
          %v447 = vlaneseq
          %v448 = vshrl.u32 %v447, 7
          %v449 = vsub.s32 0, %v448
          %v450 = vrot.slane %v445, %v449
          %v452 = vadd.f32 %v443, %v450
          %v453 = vadd.f32 %v444, %v450
          %454 = vst [vmem:[%s320] sm:$0xff] %v452
          %455 = vst [vmem:[%s320 + $0x8] sm:$0xff] %v453
        $region78: #{full_model_forward.27} parent=65 // pred_fallthru
          _
        %s456 = sand.u32 %s125, 1
        %s457 = sand.u32 %s125, 1
        %s458 = smul.addr %s457, 16
        %s459 = scalar_lea.vmem [#allocation4], %s458
        // Predicated region
        $region79: #{full_model_forward.27} parent=65 // pred_check
          %p460 = pneg %p135
        $region80: #{full_model_forward.27} parent=65 // pred_check_branch
          %462 = sbr.rel (%p460) target = $region82
        $region81: #{full_model_forward.27} parent=65 // pred_region
          %s463 = smul.u32 2, %s19
          %s464 = smul.addr %s463, 3
          %s465 = sadd.s32 %s20, %s464
          %s466 = smul.addr %s465, 8
          %s467 = scalar_lea.vmem %s3, %s466
          // Predicated region
          $region83: #{full_model_forward.27} parent=81 // pred_check
            _
          $region84: #{full_model_forward.27} parent=81 // pred_check_branch
            %469 = sbr.rel (0) target = $region86
          $region85: #{full_model_forward.27} parent=81 // pred_region
            // Predicated region
            $region87: #{full_model_forward.27} parent=85 // pred_check
              _
            $region88: #{full_model_forward.27} parent=85 // pred_check_branch
              %471 = sbr.rel (0) target = $region90
            $region89: #{full_model_forward.27} parent=85 // pred_region
              // Predicated region
              $region102: #{full_model_forward.27} parent=89 // pred_check
                _
              $region103: #{full_model_forward.27} parent=89 // pred_check_branch
                %489 = sbr.rel (0) target = $region105
              $region104: #{full_model_forward.27} parent=89 // pred_region
                loop: start=0, step=1, limit=1
                $region106: #{full_model_forward.27} parent=104 // loop_pre_header
                  _
                $region107: #{full_model_forward.27} parent=104 // loop_header
                  %s491 = sphi 0, %s495
                  %p492 = scmp.ge.s32.totalorder %s491, 1
                  %s496 = sphi %s459, %s459
                  %s497 = sphi %s467, %s467
                $region108: #{full_model_forward.27} parent=104 // loop_header_branch
                  %494 = sbr.rel (%p492) target = $region112
                $region109: #{full_model_forward.27} parent=104 // loop_body
                  %v498 = vld [vmem:[%s496] sm:$0xff]
                  %499 = vst [vmem:[%s497] sm:$0xff] %v498
                  %v500 = vld [vmem:[%s496 + $0x8] sm:$0xff]
                  %501 = vst [vmem:[%s497 + $0x18] sm:$0xff] %v500
                $region110: #{full_model_forward.27} parent=104 // loop_footer
                  %s495 = sadd.s32 1, %s491
                $region111: #{full_model_forward.27} parent=104 // loop_footer_branch
                  %490 = sbr.rel target = $region107
                $region112: #{full_model_forward.27} parent=104 // loop_exit
                  _
              $region105: #{full_model_forward.27} parent=89 // pred_fallthru
                _
              // Predicated region
              $region113: #{full_model_forward.27} parent=89 // pred_check
                _
              $region114: #{full_model_forward.27} parent=89 // pred_check_branch
                %503 = sbr.rel target = $region116
              $region115: #{full_model_forward.27} parent=89 // pred_region
                _
              $region116: #{full_model_forward.27} parent=89 // pred_fallthru
                _
            $region90: #{full_model_forward.27} parent=85 // pred_fallthru
              _
            // Predicated region
            $region91: #{full_model_forward.27} parent=85 // pred_check
              _
            $region92: #{full_model_forward.27} parent=85 // pred_check_branch
              %473 = sbr.rel target = $region94
            $region93: #{full_model_forward.27} parent=85 // pred_region
              %s475 = ssub.s32 256, 1
              loop: start=0, step=1, limit=1
              $region95: #{full_model_forward.27} parent=93 // loop_pre_header
                _
              $region96: #{full_model_forward.27} parent=93 // loop_header
                %s477 = sphi 0, %s481
                %p478 = scmp.ge.s32.totalorder %s477, 1
                %s482 = sphi %s459, %s459
                %s483 = sphi %s467, %s467
              $region97: #{full_model_forward.27} parent=93 // loop_header_branch
                %480 = sbr.rel (%p478) target = $region101
              $region98: #{full_model_forward.27} parent=93 // loop_body
                %v484 = vld [vmem:[%s482] sm:%s475]
                %485 = vst [vmem:[%s483] sm:%s475] %v484
                %v486 = vld [vmem:[%s482 + $0x8] sm:%s475]
                %487 = vst [vmem:[%s483 + $0x18] sm:%s475] %v486
              $region99: #{full_model_forward.27} parent=93 // loop_footer
                %s481 = sadd.s32 1, %s477
              $region100: #{full_model_forward.27} parent=93 // loop_footer_branch
                %476 = sbr.rel target = $region96
              $region101: #{full_model_forward.27} parent=93 // loop_exit
                _
            $region94: #{full_model_forward.27} parent=85 // pred_fallthru
              _
          $region86: #{full_model_forward.27} parent=81 // pred_fallthru
            _
          %504 = vnop
        $region82: #{full_model_forward.27} parent=65 // pred_fallthru
          _
      $region66: #{full_model_forward.27} parent=5 // pred_fallthru
        _
      %p505 = scmp.le.s32.totalorder 2, %s9
      // Predicated region
      $region117: #{full_model_forward.27} parent=5 // pred_check
        %p506 = pneg %p505
      $region118: #{full_model_forward.27} parent=5 // pred_check_branch
        %508 = sbr.rel (%p506) target = $region120
      $region119: #{full_model_forward.27} parent=5 // pred_region
        %s509 = ssub.s32 %s9, 2
        // Predicated region
        $region121: #{full_model_forward.27} parent=119 // pred_check
          %p510 = pneg %p141
        $region122: #{full_model_forward.27} parent=119 // pred_check_branch
          %512 = sbr.rel (%p510) target = $region124
        $region123: #{full_model_forward.27} parent=119 // pred_region
          %s513 = sand.u32 %s126, 1
          %s514 = sand.u32 %s126, 1
          %s515 = smul.addr %s514, 16
          %s516 = scalar_lea.vmem [#allocation4], %s515
        $region124: #{full_model_forward.27} parent=119 // pred_fallthru
          _
      $region120: #{full_model_forward.27} parent=5 // pred_fallthru
        _
    $region6: #{full_model_forward.27} parent=1 // loop_footer
      %s13 = sadd.s32 1, %s9
    $region7: #{full_model_forward.27} parent=1 // loop_footer_branch
      %8 = sbr.rel target = $region3
    $region8: #{full_model_forward.27} parent=1 // loop_exit
      _

// kernel: full_model_forward.29
$region0: #{full_model_forward.29}
  #allocation0 [shape = 'u32[]', space=smem, size = 0x4, offset = 0x4, fixed_abs, tag = 'smem constant byte address 0x4 - core index']
  #allocation1 [shape = 'u32[144,128]{1,0:T(1,128)}', space=vmem, size = 0x12000, scoped, tag = 'internal scratch']
  %s0 = inlined_call_operand.vmem [shape: f32[16,128], index: 0, kind: input, shape index: {}]
  %s1 = inlined_call_operand.vmem [shape: f32[128,128], index: 1, kind: input, shape index: {}]
  %s2 = inlined_call_operand.vmem [shape: f32[1,128], index: 2, kind: input, shape index: {}]
  %s3 = inlined_call_operand.vmem [shape: f32[16,128], index: 3, kind: input, shape index: {}]
  %s4 = inlined_call_operand.vmem [shape: f32[1,128], index: 4, kind: input, shape index: {}]
  %s5 = inlined_call_operand.vmem [shape: f32[1,128], index: 5, kind: input, shape index: {}]
  %s6 = inlined_call_operand.vmem [shape: f32[16,128], index: 6, kind: output, shape index: {}]
  %s7 = sld [smem:[#allocation0]]
  $region34: #{full_model_forward.29} parent=0
    _
  %s9 = ssub.s32 1, %s7
  %s10 = scalar_select 0, %s9, %s7
  // Predicated region
  $region2: #{full_model_forward.29} parent=0 // pred_check
    _
  $region3: #{full_model_forward.29} parent=0 // pred_check_branch
    %12 = sbr.rel (0) target = $region5
  $region4: #{full_model_forward.29} parent=0 // pred_region
    _
  $region5: #{full_model_forward.29} parent=0 // pred_fallthru
    _
  // Predicated region
  $region6: #{full_model_forward.29} parent=0 // pred_check
    _
  $region7: #{full_model_forward.29} parent=0 // pred_check_branch
    %14 = sbr.rel (0) target = $region9
  $region8: #{full_model_forward.29} parent=0 // pred_region
    _
  $region9: #{full_model_forward.29} parent=0 // pred_fallthru
    _
  // Predicated region
  $region10: #{full_model_forward.29} parent=0 // pred_check
    _
  $region11: #{full_model_forward.29} parent=0 // pred_check_branch
    %16 = sbr.rel (0) target = $region13
  $region12: #{full_model_forward.29} parent=0 // pred_region
    _
  $region13: #{full_model_forward.29} parent=0 // pred_fallthru
    _
  // Predicated region
  $region14: #{full_model_forward.29} parent=0 // pred_check
    _
  $region15: #{full_model_forward.29} parent=0 // pred_check_branch
    %18 = sbr.rel (0) target = $region17
  $region16: #{full_model_forward.29} parent=0 // pred_region
    _
  $region17: #{full_model_forward.29} parent=0 // pred_fallthru
    _
  // Predicated region
  $region18: #{full_model_forward.29} parent=0 // pred_check
    _
  $region19: #{full_model_forward.29} parent=0 // pred_check_branch
    %20 = sbr.rel (0) target = $region21
  $region20: #{full_model_forward.29} parent=0 // pred_region
    _
  $region21: #{full_model_forward.29} parent=0 // pred_fallthru
    _
  // Predicated region
  $region22: #{full_model_forward.29} parent=0 // pred_check
    _
  $region23: #{full_model_forward.29} parent=0 // pred_check_branch
    %22 = sbr.rel (0) target = $region25
  $region24: #{full_model_forward.29} parent=0 // pred_region
    _
  $region25: #{full_model_forward.29} parent=0 // pred_fallthru
    _
  %v23 = vld [vmem:[%s0] sm:$0xff]
  %v24 = vld [vmem:[%s0 + $0x8] sm:$0xff]
  %v25 = vld [vmem:[%s1] sm:$0xff]
  %v26 = vld [vmem:[%s1 + $0x8] sm:$0xff]
  %v27 = vld [vmem:[%s1 + $0x10] sm:$0xff]
  %v28 = vld [vmem:[%s1 + $0x18] sm:$0xff]
  %v29 = vld [vmem:[%s1 + $0x20] sm:$0xff]
  %v30 = vld [vmem:[%s1 + $0x28] sm:$0xff]
  %v31 = vld [vmem:[%s1 + $0x30] sm:$0xff]
  %v32 = vld [vmem:[%s1 + $0x38] sm:$0xff]
  %v33 = vld [vmem:[%s1 + $0x40] sm:$0xff]
  %v34 = vld [vmem:[%s1 + $0x48] sm:$0xff]
  %v35 = vld [vmem:[%s1 + $0x50] sm:$0xff]
  %v36 = vld [vmem:[%s1 + $0x58] sm:$0xff]
  %v37 = vld [vmem:[%s1 + $0x60] sm:$0xff]
  %v38 = vld [vmem:[%s1 + $0x68] sm:$0xff]
  %v39 = vld [vmem:[%s1 + $0x70] sm:$0xff]
  %v40 = vld [vmem:[%s1 + $0x78] sm:$0xff]
  %v41 = vld [vmem:[%s2] sm:$0x1]
  %v43 = vlaneseq
  %v44 = vshrl.u32 %v43, 7
  %v45 = vsub.s32 0, %v44
  %v46 = vrot.slane %v41, %v45
  %48 = vmatprep.subr.mxu0 0.0
  %49 = vmatpush1.msra.mxu0 %v40
  %50 = vmatprep.subr.mxu0 0.0
  %51 = vmatpush1.msra.mxu0 %v39
  %52 = vmatprep.subr.mxu0 0.0
  %53 = vmatpush1.msra.mxu0 %v38
  %54 = vmatprep.subr.mxu0 0.0
  %55 = vmatpush1.msra.mxu0 %v37
  %56 = vmatprep.subr.mxu0 0.0
  %57 = vmatpush1.msra.mxu0 %v36
  %58 = vmatprep.subr.mxu0 0.0
  %59 = vmatpush1.msra.mxu0 %v35
  %60 = vmatprep.subr.mxu0 0.0
  %61 = vmatpush1.msra.mxu0 %v34
  %62 = vmatprep.subr.mxu0 0.0
  %63 = vmatpush1.msra.mxu0 %v33
  %64 = vmatprep.subr.mxu0 0.0
  %65 = vmatpush1.msra.mxu0 %v32
  %66 = vmatprep.subr.mxu0 0.0
  %67 = vmatpush1.msra.mxu0 %v31
  %68 = vmatprep.subr.mxu0 0.0
  %69 = vmatpush1.msra.mxu0 %v30
  %70 = vmatprep.subr.mxu0 0.0
  %71 = vmatpush1.msra.mxu0 %v29
  %72 = vmatprep.subr.mxu0 0.0
  %73 = vmatpush1.msra.mxu0 %v28
  %74 = vmatprep.subr.mxu0 0.0
  %75 = vmatpush1.msra.mxu0 %v27
  %76 = vmatprep.subr.mxu0 0.0
  %77 = vmatpush1.msra.mxu0 %v26
  %78 = vmatprep.subr.mxu0 0.0
  %79 = vmatpush1.msra.mxu0 %v25
  %80 = vmatprep.subr.mxu0 0.0
  %81 = vmatpush2.msra.mxu0 0.0
  %82 = vmatprep.subr.mxu0 0.0
  %83 = vmatpush2.msra.mxu0 0.0
  %84 = vmatprep.subr.mxu0 0.0
  %85 = vmatpush2.msra.mxu0 0.0
  %86 = vmatprep.subr.mxu0 0.0
  %87 = vmatpush2.msra.mxu0 0.0
  %88 = vmatprep.subr.mxu0 0.0
  %89 = vmatpush2.msra.mxu0 0.0
  %90 = vmatprep.subr.mxu0 0.0
  %91 = vmatpush2.msra.mxu0 0.0
  %92 = vmatprep.subr.mxu0 0.0
  %93 = vmatpush2.msra.mxu0 0.0
  %94 = vmatprep.subr.mxu0 0.0
  %95 = vmatpush2.msra.mxu0 0.0
  %96 = vmatprep.subr.mxu0 0.0
  %97 = vmatpush2.msra.mxu0 0.0
  %98 = vmatprep.subr.mxu0 0.0
  %99 = vmatpush2.msra.mxu0 0.0
  %100 = vmatprep.subr.mxu0 0.0
  %101 = vmatpush2.msra.mxu0 0.0
  %102 = vmatprep.subr.mxu0 0.0
  %103 = vmatpush2.msra.mxu0 0.0
  %104 = vmatprep.subr.mxu0 0.0
  %105 = vmatpush2.msra.mxu0 0.0
  %106 = vmatprep.subr.mxu0 0.0
  %107 = vmatpush2.msra.mxu0 0.0
  %108 = vmatprep.subr.mxu0 0.0
  %109 = vmatpush2.msra.mxu0 0.0
  %110 = vmatprep.subr.mxu0 0.0
  %111 = vmatpush2.msra.mxu0 0.0
  %112 = vmatprep.mubr.f32.mxu0 0.0
  %113 = vmatmul.mubr.f32.gmra.mxu0 %v23
  %v114 = vpop.f32.mrf.mxu0
  %v115 = vadd.f32 %v46, %v114
  %v116 = vpop.f32.mrf.mxu0
  %117 = vmatprep.mubr.f32.mxu0 0.0
  %118 = vmatmul.mubr.f32.gmra.mxu0 %v24
  %v119 = vpop.f32.mrf.mxu0
  %v120 = vadd.f32 %v46, %v119
  %v121 = vpop.f32.mrf.mxu0
  %122 = vdwg.mxu0
  %v123 = vld [vmem:[%s3] sm:$0xff]
  %v124 = vld [vmem:[%s3 + $0x8] sm:$0xff]
  %v125 = vadd.f32 %v115, %v123
  %v126 = vadd.f32 %v120, %v124
  %v127 = vld [vmem:[%s4] sm:$0x1]
  %v128 = vld [vmem:[%s5] sm:$0x1]
  %129 = vadd.xlane.f32.xlu0 %v125
  %v130 = vpop.xlane.xlu0 %129
  %131 = vadd.xlane.f32.xlu0 %v126
  %v132 = vpop.xlane.xlu0 %131
  %v133 = vrcp.pop 128.0
  %v134 = vmul.f32 %v130, %v133
  %v135 = vmul.f32 %v132, %v133
  %v136 = vsub.f32 %v125, %v134
  %v137 = vsub.f32 %v126, %v135
  %v138 = vmul.f32 %v136, %v136
  %v139 = vmul.f32 %v137, %v137
  %140 = vadd.xlane.f32.xlu0 %v138
  %v141 = vpop.xlane.xlu0 %140
  %142 = vadd.xlane.f32.xlu0 %v139
  %v143 = vpop.xlane.xlu0 %142
  %v144 = vmul.f32 %v141, %v133
  %v145 = vmul.f32 %v143, %v133
  %v146 = vadd.f32 %v144, 1e-05
  %v147 = vadd.f32 %v145, 1e-05
  %v148 = vrsqrt.pop %v146
  %v149 = vrsqrt.pop %v147
  %v150 = vmul.f32 %v136, %v148
  %v151 = vmul.f32 %v137, %v149
  %v153 = vlaneseq
  %v154 = vshrl.u32 %v153, 7
  %v155 = vsub.s32 0, %v154
  %v156 = vrot.slane %v127, %v155
  %v158 = vmul.f32 %v150, %v156
  %v159 = vmul.f32 %v151, %v156
  %v161 = vlaneseq
  %v162 = vshrl.u32 %v161, 7
  %v163 = vsub.s32 0, %v162
  %v164 = vrot.slane %v128, %v163
  %v166 = vadd.f32 %v158, %v164
  %v167 = vadd.f32 %v159, %v164
  %168 = vst [vmem:[%s6] sm:$0xff] %v166
  %169 = vst [vmem:[%s6 + $0x8] sm:$0xff] %v167
  // Predicated region
  $region26: #{full_model_forward.29} parent=0 // pred_check
    _
  $region27: #{full_model_forward.29} parent=0 // pred_check_branch
    %171 = sbr.rel (0) target = $region29
  $region28: #{full_model_forward.29} parent=0 // pred_region
    _
  $region29: #{full_model_forward.29} parent=0 // pred_fallthru
    _
  // Predicated region
  $region30: #{full_model_forward.29} parent=0 // pred_check
    _
  $region31: #{full_model_forward.29} parent=0 // pred_check_branch
    %173 = sbr.rel (0) target = $region33
  $region32: #{full_model_forward.29} parent=0 // pred_region
    _
  $region33: #{full_model_forward.29} parent=0 // pred_fallthru
    _

// kernel: full_model_forward.28
$region0: #{full_model_forward.28}
  #allocation0 [shape = 'u32[]', space=smem, size = 0x4, offset = 0x4, fixed_abs, tag = 'smem constant byte address 0x4 - core index']
  #allocation1 [shape = 'u32[144,128]{1,0:T(1,128)}', space=vmem, size = 0x12000, scoped, tag = 'internal scratch']
  %s0 = inlined_call_operand.vmem [shape: f32[2,8,128], index: 0, kind: input, shape index: {}]
  %s1 = inlined_call_operand.vmem [shape: f32[2,8,128], index: 1, kind: input, shape index: {}]
  %s2 = inlined_call_operand.vmem [shape: f32[2,8,128], index: 2, kind: input, shape index: {}]
  %s3 = inlined_call_operand.vmem [shape: f32[8,8], index: 3, kind: input, shape index: {}]
  %s4 = inlined_call_operand.vmem [shape: f32[2,8,128], index: 4, kind: output, shape index: {}]
  %s5 = sld [smem:[#allocation0]]
  $region49: #{full_model_forward.28} parent=0
    _
  %s7 = ssub.s32 1, %s5
  %s8 = scalar_select 0, %s7, %s5
  loop: start=0, step=1, limit=4
  $region2: #{full_model_forward.28} parent=0 // loop_pre_header
    _
  $region3: #{full_model_forward.28} parent=0 // loop_header
    %s10 = sphi 0, %s14
    %p11 = scmp.ge.s32.totalorder %s10, 4
    %s20 = sphi 0, %s22
    %s23 = sphi 0, %s20
    %s24 = sphi 0, %s23
    %s40 = sphi 0, %s24
    %s46 = sphi 0, %s48
    %s49 = sphi 0, %s46
    %s50 = sphi 0, %s49
    %s66 = sphi 0, %s50
    %s72 = sphi 0, %s74
    %s75 = sphi 0, %s72
    %s76 = sphi 0, %s75
    %s92 = sphi 0, %s76
    %s96 = sphi 0, %s96
    %s98 = sphi 0, %s96
    %s99 = sphi 0, %s98
    %s113 = sphi 0, %s99
    %s119 = sphi 0, %s121
    %s122 = sphi 0, %s119
    %s123 = sphi 0, %s122
    %s139 = sphi 0, %s123
  $region4: #{full_model_forward.28} parent=0 // loop_header_branch
    %13 = sbr.rel (%p11) target = $region8
  $region5: #{full_model_forward.28} parent=0 // loop_body
    %s15 = ssub.s32 %s10, 1
    %s16 = ssub.s32 %s10, 2
    %s17 = sadd.s32 %s10, 1
    %s18 = ssub.s32 %s10, %s17
    %p19 = scmp.eq.s32.totalorder %s18, 0
    %s21 = sadd.s32 %s20, 1
    %s22 = scalar_select %p19, %s20, %s21
    %p25 = pneg %p19
    %p26 = scmp.eq.s32.totalorder %s10, 1
    %p27 = por %p25, %p26
    %p28 = scmp.ne.s32.totalorder %s20, %s23
    %p29 = scmp.eq.s32.totalorder %s10, 0
    %p30 = por %p28, %p29
    %p31 = scmp.ne.s32.totalorder %s20, %s23
    %p32 = scmp.eq.s32.totalorder %s15, 1
    %p33 = por %p31, %p32
    %p34 = scmp.ne.s32.totalorder %s23, %s24
    %p35 = scmp.eq.s32.totalorder %s15, 0
    %p36 = por %p34, %p35
    %p37 = scmp.ne.s32.totalorder %s23, %s24
    %p38 = scmp.eq.s32.totalorder %s16, 1
    %p39 = por %p37, %p38
    %p41 = scmp.ne.s32.totalorder %s24, %s40
    %p42 = scmp.eq.s32.totalorder %s16, 0
    %p43 = por %p41, %p42
    %s44 = ssub.s32 %s10, %s17
    %p45 = scmp.eq.s32.totalorder %s44, 0
    %s47 = sadd.s32 %s46, 1
    %s48 = scalar_select %p45, %s46, %s47
    %p51 = pneg %p45
    %p52 = scmp.eq.s32.totalorder %s10, 1
    %p53 = por %p51, %p52
    %p54 = scmp.ne.s32.totalorder %s46, %s49
    %p55 = scmp.eq.s32.totalorder %s10, 0
    %p56 = por %p54, %p55
    %p57 = scmp.ne.s32.totalorder %s46, %s49
    %p58 = scmp.eq.s32.totalorder %s15, 1
    %p59 = por %p57, %p58
    %p60 = scmp.ne.s32.totalorder %s49, %s50
    %p61 = scmp.eq.s32.totalorder %s15, 0
    %p62 = por %p60, %p61
    %p63 = scmp.ne.s32.totalorder %s49, %s50
    %p64 = scmp.eq.s32.totalorder %s16, 1
    %p65 = por %p63, %p64
    %p67 = scmp.ne.s32.totalorder %s50, %s66
    %p68 = scmp.eq.s32.totalorder %s16, 0
    %p69 = por %p67, %p68
    %s70 = ssub.s32 %s10, %s17
    %p71 = scmp.eq.s32.totalorder %s70, 0
    %s73 = sadd.s32 %s72, 1
    %s74 = scalar_select %p71, %s72, %s73
    %p77 = pneg %p71
    %p78 = scmp.eq.s32.totalorder %s10, 1
    %p79 = por %p77, %p78
    %p80 = scmp.ne.s32.totalorder %s72, %s75
    %p81 = scmp.eq.s32.totalorder %s10, 0
    %p82 = por %p80, %p81
    %p83 = scmp.ne.s32.totalorder %s72, %s75
    %p84 = scmp.eq.s32.totalorder %s15, 1
    %p85 = por %p83, %p84
    %p86 = scmp.ne.s32.totalorder %s75, %s76
    %p87 = scmp.eq.s32.totalorder %s15, 0
    %p88 = por %p86, %p87
    %p89 = scmp.ne.s32.totalorder %s75, %s76
    %p90 = scmp.eq.s32.totalorder %s16, 1
    %p91 = por %p89, %p90
    %p93 = scmp.ne.s32.totalorder %s76, %s92
    %p94 = scmp.eq.s32.totalorder %s16, 0
    %p95 = por %p93, %p94
    %s97 = sadd.s32 %s96, 1
    %p100 = scmp.eq.s32.totalorder %s10, 1
    %p101 = scmp.ne.s32.totalorder %s96, %s98
    %p102 = scmp.eq.s32.totalorder %s10, 0
    %p103 = por %p101, %p102
    %p104 = scmp.ne.s32.totalorder %s96, %s98
    %p105 = scmp.eq.s32.totalorder %s15, 1
    %p106 = por %p104, %p105
    %p107 = scmp.ne.s32.totalorder %s98, %s99
    %p108 = scmp.eq.s32.totalorder %s15, 0
    %p109 = por %p107, %p108
    %p110 = scmp.ne.s32.totalorder %s98, %s99
    %p111 = scmp.eq.s32.totalorder %s16, 1
    %p112 = por %p110, %p111
    %p114 = scmp.ne.s32.totalorder %s99, %s113
    %p115 = scmp.eq.s32.totalorder %s16, 0
    %p116 = por %p114, %p115
    %s117 = ssub.s32 %s10, %s17
    %p118 = scmp.eq.s32.totalorder %s117, 0
    %s120 = sadd.s32 %s119, 1
    %s121 = scalar_select %p118, %s119, %s120
    %p124 = pneg %p118
    %p125 = scmp.eq.s32.totalorder %s10, 1
    %p126 = por %p124, %p125
    %p127 = scmp.ne.s32.totalorder %s119, %s122
    %p128 = scmp.eq.s32.totalorder %s10, 0
    %p129 = por %p127, %p128
    %p130 = scmp.ne.s32.totalorder %s119, %s122
    %p131 = scmp.eq.s32.totalorder %s15, 1
    %p132 = por %p130, %p131
    %p133 = scmp.ne.s32.totalorder %s122, %s123
    %p134 = scmp.eq.s32.totalorder %s15, 0
    %p135 = por %p133, %p134
    %p136 = scmp.ne.s32.totalorder %s122, %s123
    %p137 = scmp.eq.s32.totalorder %s16, 1
    %p138 = por %p136, %p137
    %p140 = scmp.ne.s32.totalorder %s123, %s139
    %p141 = scmp.eq.s32.totalorder %s16, 0
    %p142 = por %p140, %p141
    %p143 = scmp.le.s32.totalorder 1, %s10
    %p144 = scmp.lt.s32.totalorder %s10, 3
    %p145 = pnand %p143, %p144
    %p146 = pneg %p145
    // Predicated region
    $region9: #{full_model_forward.28} parent=5 // pred_check
      _
    $region10: #{full_model_forward.28} parent=5 // pred_check_branch
      %148 = sbr.rel (%p145) target = $region12
    $region11: #{full_model_forward.28} parent=5 // pred_region
      %s149 = ssub.s32 %s10, 1
      // Predicated region
      $region13: #{full_model_forward.28} parent=11 // pred_check
        %p150 = pneg %p109
      $region14: #{full_model_forward.28} parent=11 // pred_check_branch
        %152 = sbr.rel (%p150) target = $region16
      $region15: #{full_model_forward.28} parent=11 // pred_region
        _
      $region16: #{full_model_forward.28} parent=11 // pred_fallthru
        _
    $region12: #{full_model_forward.28} parent=5 // pred_fallthru
      _
    %p153 = scmp.lt.s32.totalorder %s10, 2
    // Predicated region
    $region17: #{full_model_forward.28} parent=5 // pred_check
      %p154 = pneg %p153
    $region18: #{full_model_forward.28} parent=5 // pred_check_branch
      %156 = sbr.rel (%p154) target = $region20
    $region19: #{full_model_forward.28} parent=5 // pred_region
      // Predicated region
      $region21: #{full_model_forward.28} parent=19 // pred_check
        %p157 = pneg %p30
      $region22: #{full_model_forward.28} parent=19 // pred_check_branch
        %159 = sbr.rel (%p157) target = $region24
      $region23: #{full_model_forward.28} parent=19 // pred_region
        %p160 = scmp.lt.s32.totalorder %s10, 1
        %s161 = scalar_select %p160, %s10, 1
        %s162 = smul.addr %s161, 8
        %s163 = scalar_lea.vmem %s0, %s162
      $region24: #{full_model_forward.28} parent=19 // pred_fallthru
        _
      // Predicated region
      $region25: #{full_model_forward.28} parent=19 // pred_check
        %p164 = pneg %p56
      $region26: #{full_model_forward.28} parent=19 // pred_check_branch
        %166 = sbr.rel (%p164) target = $region28
      $region27: #{full_model_forward.28} parent=19 // pred_region
        %p167 = scmp.lt.s32.totalorder %s10, 1
        %s168 = scalar_select %p167, %s10, 1
        %s169 = smul.addr %s168, 8
        %s170 = scalar_lea.vmem %s1, %s169
      $region28: #{full_model_forward.28} parent=19 // pred_fallthru
        _
      // Predicated region
      $region29: #{full_model_forward.28} parent=19 // pred_check
        %p171 = pneg %p82
      $region30: #{full_model_forward.28} parent=19 // pred_check_branch
        %173 = sbr.rel (%p171) target = $region32
      $region31: #{full_model_forward.28} parent=19 // pred_region
        %p174 = scmp.lt.s32.totalorder %s10, 1
        %s175 = scalar_select %p174, %s10, 1
        %s176 = smul.addr %s175, 8
        %s177 = scalar_lea.vmem %s2, %s176
      $region32: #{full_model_forward.28} parent=19 // pred_fallthru
        _
    $region20: #{full_model_forward.28} parent=5 // pred_fallthru
      _
    %p178 = scmp.le.s32.totalorder 1, %s10
    %p179 = scmp.lt.s32.totalorder %s10, 3
    %p180 = pnand %p178, %p179
    %p181 = pneg %p180
    // Predicated region
    $region33: #{full_model_forward.28} parent=5 // pred_check
      _
    $region34: #{full_model_forward.28} parent=5 // pred_check_branch
      %183 = sbr.rel (%p180) target = $region36
    $region35: #{full_model_forward.28} parent=5 // pred_region
      %s184 = ssub.s32 %s10, 1
      %p185 = scmp.lt.s32.totalorder %s15, 1
      %s186 = scalar_select %p185, %s15, 1
      %s187 = smul.addr %s186, 8
      %s188 = scalar_lea.vmem %s0, %s187
      %p189 = pneg %p36
      %p190 = pneg %p33
      %p191 = scmp.lt.s32.totalorder %s15, 1
      %s192 = scalar_select %p191, %s15, 1
      %s193 = smul.addr %s192, 8
      %s194 = scalar_lea.vmem %s1, %s193
      %p195 = pneg %p62
      %p196 = pneg %p59
      %p197 = scmp.lt.s32.totalorder %s15, 1
      %s198 = scalar_select %p197, %s15, 1
      %s199 = smul.addr %s198, 8
      %s200 = scalar_lea.vmem %s2, %s199
      %p201 = pneg %p88
      %p202 = pneg %p85
      %p203 = pneg %p109
      %p204 = pneg %p106
      %p205 = pneg %p135
      %p206 = pneg %p132
      %p207 = scmp.lt.s32.totalorder %s15, 1
      %s208 = scalar_select %p207, %s15, 1
      %s209 = smul.addr %s208, 8
      %s210 = scalar_lea.vmem %s4, %s209
      %p211 = scmp.lt.s32.totalorder %s15, 1
      %s212 = scalar_select %p211, %s15, 1
      %s213 = smul.addr %s212, 8
      %s214 = scalar_lea.vmem %s0, %s213
      %p215 = scmp.lt.s32.totalorder %s15, 1
      %s216 = scalar_select %p215, %s15, 1
      %s217 = smul.addr %s216, 8
      %s218 = scalar_lea.vmem %s1, %s217
      %p219 = scmp.lt.s32.totalorder %s15, 1
      %s220 = scalar_select %p219, %s15, 1
      %s221 = smul.addr %s220, 8
      %s222 = scalar_lea.vmem %s2, %s221
      %p223 = scmp.lt.s32.totalorder %s15, 1
      %s224 = scalar_select %p223, %s15, 1
      %s225 = smul.addr %s224, 8
      %s226 = scalar_lea.vmem %s4, %s225
      %v227 = vld [vmem:[%s214] sm:$0xff]
      %v228 = vld [vmem:[%s218] sm:$0xff]
      %v229 = vld [vmem:[%s222] sm:$0xff]
      %v230 = vld [vmem:[%s3] sm:$0xff]
      %v231 = vmul.f32 %v227, 0.17677669
      %vm232 = vcmask 261120
      %v234 = vsel %vm232, %v231, 0
      %v237 = vsel %vm232, %v228, 0
      %239 = vmatprep.subr.mxu0 0.0
      %240 = vmatpush1.xpose.msra.mxu0 0.0
      %241 = vmatprep.subr.mxu0 0.0
      %242 = vmatpush1.xpose.msra.mxu0 0.0
      %243 = vmatprep.subr.mxu0 0.0
      %244 = vmatpush1.xpose.msra.mxu0 0.0
      %245 = vmatprep.subr.mxu0 0.0
      %246 = vmatpush1.xpose.msra.mxu0 0.0
      %247 = vmatprep.subr.mxu0 0.0
      %248 = vmatpush1.xpose.msra.mxu0 0.0
      %249 = vmatprep.subr.mxu0 0.0
      %250 = vmatpush1.xpose.msra.mxu0 0.0
      %251 = vmatprep.subr.mxu0 0.0
      %252 = vmatpush1.xpose.msra.mxu0 0.0
      %253 = vmatprep.subr.mxu0 0.0
      %254 = vmatpush1.xpose.msra.mxu0 0.0
      %255 = vmatprep.subr.mxu0 0.0
      %256 = vmatpush1.xpose.msra.mxu0 0.0
      %257 = vmatprep.subr.mxu0 0.0
      %258 = vmatpush1.xpose.msra.mxu0 0.0
      %259 = vmatprep.subr.mxu0 0.0
      %260 = vmatpush1.xpose.msra.mxu0 0.0
      %261 = vmatprep.subr.mxu0 0.0
      %262 = vmatpush1.xpose.msra.mxu0 0.0
      %263 = vmatprep.subr.mxu0 0.0
      %264 = vmatpush1.xpose.msra.mxu0 0.0
      %265 = vmatprep.subr.mxu0 0.0
      %266 = vmatpush1.xpose.msra.mxu0 0.0
      %267 = vmatprep.subr.mxu0 0.0
      %268 = vmatpush1.xpose.msra.mxu0 0.0
      %269 = vmatprep.subr.mxu0 0.0
      %270 = vmatpush1.xpose.msra.mxu0 %v237
      %271 = vmatprep.subr.mxu0 0.0
      %272 = vmatpush2.xpose.msra.mxu0 0.0
      %273 = vmatprep.subr.mxu0 0.0
      %274 = vmatpush2.xpose.msra.mxu0 0.0
      %275 = vmatprep.subr.mxu0 0.0
      %276 = vmatpush2.xpose.msra.mxu0 0.0
      %277 = vmatprep.subr.mxu0 0.0
      %278 = vmatpush2.xpose.msra.mxu0 0.0
      %279 = vmatprep.subr.mxu0 0.0
      %280 = vmatpush2.xpose.msra.mxu0 0.0
      %281 = vmatprep.subr.mxu0 0.0
      %282 = vmatpush2.xpose.msra.mxu0 0.0
      %283 = vmatprep.subr.mxu0 0.0
      %284 = vmatpush2.xpose.msra.mxu0 0.0
      %285 = vmatprep.subr.mxu0 0.0
      %286 = vmatpush2.xpose.msra.mxu0 0.0
      %287 = vmatprep.subr.mxu0 0.0
      %288 = vmatpush2.xpose.msra.mxu0 0.0
      %289 = vmatprep.subr.mxu0 0.0
      %290 = vmatpush2.xpose.msra.mxu0 0.0
      %291 = vmatprep.subr.mxu0 0.0
      %292 = vmatpush2.xpose.msra.mxu0 0.0
      %293 = vmatprep.subr.mxu0 0.0
      %294 = vmatpush2.xpose.msra.mxu0 0.0
      %295 = vmatprep.subr.mxu0 0.0
      %296 = vmatpush2.xpose.msra.mxu0 0.0
      %297 = vmatprep.subr.mxu0 0.0
      %298 = vmatpush2.xpose.msra.mxu0 0.0
      %299 = vmatprep.subr.mxu0 0.0
      %300 = vmatpush2.xpose.msra.mxu0 0.0
      %301 = vmatprep.subr.mxu0 0.0
      %302 = vmatpush2.xpose.msra.mxu0 0.0
      %303 = vmatprep.mubr.f32.mxu0 0.0
      %304 = vmatmul.mubr.f32.gmra.mxu0 %v234
      %v305 = vpop.f32.mrf.mxu0
      %v306 = vadd.f32 %v230, %v305
      %v307 = vpop.f32.mrf.mxu0
      %308 = vdwg.mxu0
      %vm309 = vcmask 64512
      %v310 = vsel %vm309, %v306, -inf
      %311 = vmax.xlane.f32.xlu0 %v310
      %v312 = vpop.xlane.xlu0 %311
      %v313 = vsub.f32 %v306, %v312
      %v314 = vmul.f32 %v313, 1.442695
      %v315 = vpow.pop %v314
      %v316 = vsel %vm309, %v315, 0.0
      %317 = vadd.xlane.f32.xlu0 %v316
      %v318 = vpop.xlane.xlu0 %317
      %v319 = vrcp.pop %v318
      %v320 = vmul.f32 1.0, %v319
      %v321 = vmul.f32 %v315, %v320
      %v323 = vsel %vm309, %v321, 0
      %325 = vmatprep.subr.mxu0 0.0
      %326 = vmatpush1.msra.mxu0 0.0
      %327 = vmatprep.subr.mxu0 0.0
      %328 = vmatpush1.msra.mxu0 0.0
      %329 = vmatprep.subr.mxu0 0.0
      %330 = vmatpush1.msra.mxu0 0.0
      %331 = vmatprep.subr.mxu0 0.0
      %332 = vmatpush1.msra.mxu0 0.0
      %333 = vmatprep.subr.mxu0 0.0
      %334 = vmatpush1.msra.mxu0 0.0
      %335 = vmatprep.subr.mxu0 0.0
      %336 = vmatpush1.msra.mxu0 0.0
      %337 = vmatprep.subr.mxu0 0.0
      %338 = vmatpush1.msra.mxu0 0.0
      %339 = vmatprep.subr.mxu0 0.0
      %340 = vmatpush1.msra.mxu0 0.0
      %341 = vmatprep.subr.mxu0 0.0
      %342 = vmatpush1.msra.mxu0 0.0
      %343 = vmatprep.subr.mxu0 0.0
      %344 = vmatpush1.msra.mxu0 0.0
      %345 = vmatprep.subr.mxu0 0.0
      %346 = vmatpush1.msra.mxu0 0.0
      %347 = vmatprep.subr.mxu0 0.0
      %348 = vmatpush1.msra.mxu0 0.0
      %349 = vmatprep.subr.mxu0 0.0
      %350 = vmatpush1.msra.mxu0 0.0
      %351 = vmatprep.subr.mxu0 0.0
      %352 = vmatpush1.msra.mxu0 0.0
      %353 = vmatprep.subr.mxu0 0.0
      %354 = vmatpush1.msra.mxu0 0.0
      %355 = vmatprep.subr.mxu0 0.0
      %356 = vmatpush1.msra.mxu0 %v229
      %357 = vmatprep.subr.mxu0 0.0
      %358 = vmatpush2.msra.mxu0 0.0
      %359 = vmatprep.subr.mxu0 0.0
      %360 = vmatpush2.msra.mxu0 0.0
      %361 = vmatprep.subr.mxu0 0.0
      %362 = vmatpush2.msra.mxu0 0.0
      %363 = vmatprep.subr.mxu0 0.0
      %364 = vmatpush2.msra.mxu0 0.0
      %365 = vmatprep.subr.mxu0 0.0
      %366 = vmatpush2.msra.mxu0 0.0
      %367 = vmatprep.subr.mxu0 0.0
      %368 = vmatpush2.msra.mxu0 0.0
      %369 = vmatprep.subr.mxu0 0.0
      %370 = vmatpush2.msra.mxu0 0.0
      %371 = vmatprep.subr.mxu0 0.0
      %372 = vmatpush2.msra.mxu0 0.0
      %373 = vmatprep.subr.mxu0 0.0
      %374 = vmatpush2.msra.mxu0 0.0
      %375 = vmatprep.subr.mxu0 0.0
      %376 = vmatpush2.msra.mxu0 0.0
      %377 = vmatprep.subr.mxu0 0.0
      %378 = vmatpush2.msra.mxu0 0.0
      %379 = vmatprep.subr.mxu0 0.0
      %380 = vmatpush2.msra.mxu0 0.0
      %381 = vmatprep.subr.mxu0 0.0
      %382 = vmatpush2.msra.mxu0 0.0
      %383 = vmatprep.subr.mxu0 0.0
      %384 = vmatpush2.msra.mxu0 0.0
      %385 = vmatprep.subr.mxu0 0.0
      %386 = vmatpush2.msra.mxu0 0.0
      %387 = vmatprep.subr.mxu0 0.0
      %388 = vmatpush2.msra.mxu0 0.0
      %389 = vmatprep.mubr.f32.mxu0 0.0
      %390 = vmatmul.mubr.f32.gmra.mxu0 %v323
      %v391 = vpop.f32.mrf.mxu0
      %v392 = vadd.f32 0.0, %v391
      %v393 = vpop.f32.mrf.mxu0
      %394 = vdwg.mxu0
      %395 = vrot.lane.b32.xlu0 %v231, 96
      %v396 = vpop.permute.xlu0 %395
      %397 = vrot.lane.b32.xlu0 %v228, 96
      %v398 = vpop.permute.xlu0 %397
      %v399 = vsel %vm232, %v396, 0
      %v401 = vsel %vm232, %v398, 0
      %403 = vmatprep.subr.mxu0 0.0
      %404 = vmatpush1.xpose.msra.mxu0 0.0
      %405 = vmatprep.subr.mxu0 0.0
      %406 = vmatpush1.xpose.msra.mxu0 0.0
      %407 = vmatprep.subr.mxu0 0.0
      %408 = vmatpush1.xpose.msra.mxu0 0.0
      %409 = vmatprep.subr.mxu0 0.0
      %410 = vmatpush1.xpose.msra.mxu0 0.0
      %411 = vmatprep.subr.mxu0 0.0
      %412 = vmatpush1.xpose.msra.mxu0 0.0
      %413 = vmatprep.subr.mxu0 0.0
      %414 = vmatpush1.xpose.msra.mxu0 0.0
      %415 = vmatprep.subr.mxu0 0.0
      %416 = vmatpush1.xpose.msra.mxu0 0.0
      %417 = vmatprep.subr.mxu0 0.0
      %418 = vmatpush1.xpose.msra.mxu0 0.0
      %419 = vmatprep.subr.mxu0 0.0
      %420 = vmatpush1.xpose.msra.mxu0 0.0
      %421 = vmatprep.subr.mxu0 0.0
      %422 = vmatpush1.xpose.msra.mxu0 0.0
      %423 = vmatprep.subr.mxu0 0.0
      %424 = vmatpush1.xpose.msra.mxu0 0.0
      %425 = vmatprep.subr.mxu0 0.0
      %426 = vmatpush1.xpose.msra.mxu0 0.0
      %427 = vmatprep.subr.mxu0 0.0
      %428 = vmatpush1.xpose.msra.mxu0 0.0
      %429 = vmatprep.subr.mxu0 0.0
      %430 = vmatpush1.xpose.msra.mxu0 0.0
      %431 = vmatprep.subr.mxu0 0.0
      %432 = vmatpush1.xpose.msra.mxu0 0.0
      %433 = vmatprep.subr.mxu0 0.0
      %434 = vmatpush1.xpose.msra.mxu0 %v401
      %435 = vmatprep.subr.mxu0 0.0
      %436 = vmatpush2.xpose.msra.mxu0 0.0
      %437 = vmatprep.subr.mxu0 0.0
      %438 = vmatpush2.xpose.msra.mxu0 0.0
      %439 = vmatprep.subr.mxu0 0.0
      %440 = vmatpush2.xpose.msra.mxu0 0.0
      %441 = vmatprep.subr.mxu0 0.0
      %442 = vmatpush2.xpose.msra.mxu0 0.0
      %443 = vmatprep.subr.mxu0 0.0
      %444 = vmatpush2.xpose.msra.mxu0 0.0
      %445 = vmatprep.subr.mxu0 0.0
      %446 = vmatpush2.xpose.msra.mxu0 0.0
      %447 = vmatprep.subr.mxu0 0.0
      %448 = vmatpush2.xpose.msra.mxu0 0.0
      %449 = vmatprep.subr.mxu0 0.0
      %450 = vmatpush2.xpose.msra.mxu0 0.0
      %451 = vmatprep.subr.mxu0 0.0
      %452 = vmatpush2.xpose.msra.mxu0 0.0
      %453 = vmatprep.subr.mxu0 0.0
      %454 = vmatpush2.xpose.msra.mxu0 0.0
      %455 = vmatprep.subr.mxu0 0.0
      %456 = vmatpush2.xpose.msra.mxu0 0.0
      %457 = vmatprep.subr.mxu0 0.0
      %458 = vmatpush2.xpose.msra.mxu0 0.0
      %459 = vmatprep.subr.mxu0 0.0
      %460 = vmatpush2.xpose.msra.mxu0 0.0
      %461 = vmatprep.subr.mxu0 0.0
      %462 = vmatpush2.xpose.msra.mxu0 0.0
      %463 = vmatprep.subr.mxu0 0.0
      %464 = vmatpush2.xpose.msra.mxu0 0.0
      %465 = vmatprep.subr.mxu0 0.0
      %466 = vmatpush2.xpose.msra.mxu0 0.0
      %467 = vmatprep.mubr.f32.mxu0 0.0
      %468 = vmatmul.mubr.f32.gmra.mxu0 %v399
      %v469 = vpop.f32.mrf.mxu0
      %v470 = vadd.f32 %v230, %v469
      %v471 = vpop.f32.mrf.mxu0
      %472 = vdwg.mxu0
      %v473 = vsel %vm309, %v470, -inf
      %474 = vmax.xlane.f32.xlu0 %v473
      %v475 = vpop.xlane.xlu0 %474
      %v476 = vsub.f32 %v470, %v475
      %v477 = vmul.f32 %v476, 1.442695
      %v478 = vpow.pop %v477
      %v479 = vsel %vm309, %v478, 0.0
      %480 = vadd.xlane.f32.xlu0 %v479
      %v481 = vpop.xlane.xlu0 %480
      %v482 = vrcp.pop %v481
      %v483 = vmul.f32 1.0, %v482
      %v484 = vmul.f32 %v478, %v483
      %486 = vrot.lane.b32.xlu0 %v229, 96
      %v487 = vpop.permute.xlu0 %486
      %v490 = vsel %vm309, %v484, 0
      %492 = vmatprep.subr.mxu0 0.0
      %493 = vmatpush1.msra.mxu0 0.0
      %494 = vmatprep.subr.mxu0 0.0
      %495 = vmatpush1.msra.mxu0 0.0
      %496 = vmatprep.subr.mxu0 0.0
      %497 = vmatpush1.msra.mxu0 0.0
      %498 = vmatprep.subr.mxu0 0.0
      %499 = vmatpush1.msra.mxu0 0.0
      %500 = vmatprep.subr.mxu0 0.0
      %501 = vmatpush1.msra.mxu0 0.0
      %502 = vmatprep.subr.mxu0 0.0
      %503 = vmatpush1.msra.mxu0 0.0
      %504 = vmatprep.subr.mxu0 0.0
      %505 = vmatpush1.msra.mxu0 0.0
      %506 = vmatprep.subr.mxu0 0.0
      %507 = vmatpush1.msra.mxu0 0.0
      %508 = vmatprep.subr.mxu0 0.0
      %509 = vmatpush1.msra.mxu0 0.0
      %510 = vmatprep.subr.mxu0 0.0
      %511 = vmatpush1.msra.mxu0 0.0
      %512 = vmatprep.subr.mxu0 0.0
      %513 = vmatpush1.msra.mxu0 0.0
      %514 = vmatprep.subr.mxu0 0.0
      %515 = vmatpush1.msra.mxu0 0.0
      %516 = vmatprep.subr.mxu0 0.0
      %517 = vmatpush1.msra.mxu0 0.0
      %518 = vmatprep.subr.mxu0 0.0
      %519 = vmatpush1.msra.mxu0 0.0
      %520 = vmatprep.subr.mxu0 0.0
      %521 = vmatpush1.msra.mxu0 0.0
      %522 = vmatprep.subr.mxu0 0.0
      %523 = vmatpush1.msra.mxu0 %v487
      %524 = vmatprep.subr.mxu0 0.0
      %525 = vmatpush2.msra.mxu0 0.0
      %526 = vmatprep.subr.mxu0 0.0
      %527 = vmatpush2.msra.mxu0 0.0
      %528 = vmatprep.subr.mxu0 0.0
      %529 = vmatpush2.msra.mxu0 0.0
      %530 = vmatprep.subr.mxu0 0.0
      %531 = vmatpush2.msra.mxu0 0.0
      %532 = vmatprep.subr.mxu0 0.0
      %533 = vmatpush2.msra.mxu0 0.0
      %534 = vmatprep.subr.mxu0 0.0
      %535 = vmatpush2.msra.mxu0 0.0
      %536 = vmatprep.subr.mxu0 0.0
      %537 = vmatpush2.msra.mxu0 0.0
      %538 = vmatprep.subr.mxu0 0.0
      %539 = vmatpush2.msra.mxu0 0.0
      %540 = vmatprep.subr.mxu0 0.0
      %541 = vmatpush2.msra.mxu0 0.0
      %542 = vmatprep.subr.mxu0 0.0
      %543 = vmatpush2.msra.mxu0 0.0
      %544 = vmatprep.subr.mxu0 0.0
      %545 = vmatpush2.msra.mxu0 0.0
      %546 = vmatprep.subr.mxu0 0.0
      %547 = vmatpush2.msra.mxu0 0.0
      %548 = vmatprep.subr.mxu0 0.0
      %549 = vmatpush2.msra.mxu0 0.0
      %550 = vmatprep.subr.mxu0 0.0
      %551 = vmatpush2.msra.mxu0 0.0
      %552 = vmatprep.subr.mxu0 0.0
      %553 = vmatpush2.msra.mxu0 0.0
      %554 = vmatprep.subr.mxu0 0.0
      %555 = vmatpush2.msra.mxu0 0.0
      %556 = vmatprep.mubr.f32.mxu0 0.0
      %557 = vmatmul.mubr.f32.gmra.mxu0 %v490
      %v558 = vpop.f32.mrf.mxu0
      %v559 = vadd.f32 0.0, %v558
      %v560 = vpop.f32.mrf.mxu0
      %561 = vdwg.mxu0
      %562 = vrot.lane.b32.xlu0 %v231, 64
      %v563 = vpop.permute.xlu0 %562
      %564 = vrot.lane.b32.xlu0 %v228, 64
      %v565 = vpop.permute.xlu0 %564
      %v566 = vsel %vm232, %v563, 0
      %v568 = vsel %vm232, %v565, 0
      %570 = vmatprep.subr.mxu0 0.0
      %571 = vmatpush1.xpose.msra.mxu0 0.0
      %572 = vmatprep.subr.mxu0 0.0
      %573 = vmatpush1.xpose.msra.mxu0 0.0
      %574 = vmatprep.subr.mxu0 0.0
      %575 = vmatpush1.xpose.msra.mxu0 0.0
      %576 = vmatprep.subr.mxu0 0.0
      %577 = vmatpush1.xpose.msra.mxu0 0.0
      %578 = vmatprep.subr.mxu0 0.0
      %579 = vmatpush1.xpose.msra.mxu0 0.0
      %580 = vmatprep.subr.mxu0 0.0
      %581 = vmatpush1.xpose.msra.mxu0 0.0
      %582 = vmatprep.subr.mxu0 0.0
      %583 = vmatpush1.xpose.msra.mxu0 0.0
      %584 = vmatprep.subr.mxu0 0.0
      %585 = vmatpush1.xpose.msra.mxu0 0.0
      %586 = vmatprep.subr.mxu0 0.0
      %587 = vmatpush1.xpose.msra.mxu0 0.0
      %588 = vmatprep.subr.mxu0 0.0
      %589 = vmatpush1.xpose.msra.mxu0 0.0
      %590 = vmatprep.subr.mxu0 0.0
      %591 = vmatpush1.xpose.msra.mxu0 0.0
      %592 = vmatprep.subr.mxu0 0.0
      %593 = vmatpush1.xpose.msra.mxu0 0.0
      %594 = vmatprep.subr.mxu0 0.0
      %595 = vmatpush1.xpose.msra.mxu0 0.0
      %596 = vmatprep.subr.mxu0 0.0
      %597 = vmatpush1.xpose.msra.mxu0 0.0
      %598 = vmatprep.subr.mxu0 0.0
      %599 = vmatpush1.xpose.msra.mxu0 0.0
      %600 = vmatprep.subr.mxu0 0.0
      %601 = vmatpush1.xpose.msra.mxu0 %v568
      %602 = vmatprep.subr.mxu0 0.0
      %603 = vmatpush2.xpose.msra.mxu0 0.0
      %604 = vmatprep.subr.mxu0 0.0
      %605 = vmatpush2.xpose.msra.mxu0 0.0
      %606 = vmatprep.subr.mxu0 0.0
      %607 = vmatpush2.xpose.msra.mxu0 0.0
      %608 = vmatprep.subr.mxu0 0.0
      %609 = vmatpush2.xpose.msra.mxu0 0.0
      %610 = vmatprep.subr.mxu0 0.0
      %611 = vmatpush2.xpose.msra.mxu0 0.0
      %612 = vmatprep.subr.mxu0 0.0
      %613 = vmatpush2.xpose.msra.mxu0 0.0
      %614 = vmatprep.subr.mxu0 0.0
      %615 = vmatpush2.xpose.msra.mxu0 0.0
      %616 = vmatprep.subr.mxu0 0.0
      %617 = vmatpush2.xpose.msra.mxu0 0.0
      %618 = vmatprep.subr.mxu0 0.0
      %619 = vmatpush2.xpose.msra.mxu0 0.0
      %620 = vmatprep.subr.mxu0 0.0
      %621 = vmatpush2.xpose.msra.mxu0 0.0
      %622 = vmatprep.subr.mxu0 0.0
      %623 = vmatpush2.xpose.msra.mxu0 0.0
      %624 = vmatprep.subr.mxu0 0.0
      %625 = vmatpush2.xpose.msra.mxu0 0.0
      %626 = vmatprep.subr.mxu0 0.0
      %627 = vmatpush2.xpose.msra.mxu0 0.0
      %628 = vmatprep.subr.mxu0 0.0
      %629 = vmatpush2.xpose.msra.mxu0 0.0
      %630 = vmatprep.subr.mxu0 0.0
      %631 = vmatpush2.xpose.msra.mxu0 0.0
      %632 = vmatprep.subr.mxu0 0.0
      %633 = vmatpush2.xpose.msra.mxu0 0.0
      %634 = vmatprep.mubr.f32.mxu0 0.0
      %635 = vmatmul.mubr.f32.gmra.mxu0 %v566
      %v636 = vpop.f32.mrf.mxu0
      %v637 = vadd.f32 %v230, %v636
      %v638 = vpop.f32.mrf.mxu0
      %639 = vdwg.mxu0
      %v640 = vsel %vm309, %v637, -inf
      %641 = vmax.xlane.f32.xlu0 %v640
      %v642 = vpop.xlane.xlu0 %641
      %v643 = vsub.f32 %v637, %v642
      %v644 = vmul.f32 %v643, 1.442695
      %v645 = vpow.pop %v644
      %v646 = vsel %vm309, %v645, 0.0
      %647 = vadd.xlane.f32.xlu0 %v646
      %v648 = vpop.xlane.xlu0 %647
      %v649 = vrcp.pop %v648
      %v650 = vmul.f32 1.0, %v649
      %v651 = vmul.f32 %v645, %v650
      %652 = vrot.lane.b32.xlu0 %v229, 64
      %v653 = vpop.permute.xlu0 %652
      %v656 = vsel %vm309, %v651, 0
      %658 = vmatprep.subr.mxu0 0.0
      %659 = vmatpush1.msra.mxu0 0.0
      %660 = vmatprep.subr.mxu0 0.0
      %661 = vmatpush1.msra.mxu0 0.0
      %662 = vmatprep.subr.mxu0 0.0
      %663 = vmatpush1.msra.mxu0 0.0
      %664 = vmatprep.subr.mxu0 0.0
      %665 = vmatpush1.msra.mxu0 0.0
      %666 = vmatprep.subr.mxu0 0.0
      %667 = vmatpush1.msra.mxu0 0.0
      %668 = vmatprep.subr.mxu0 0.0
      %669 = vmatpush1.msra.mxu0 0.0
      %670 = vmatprep.subr.mxu0 0.0
      %671 = vmatpush1.msra.mxu0 0.0
      %672 = vmatprep.subr.mxu0 0.0
      %673 = vmatpush1.msra.mxu0 0.0
      %674 = vmatprep.subr.mxu0 0.0
      %675 = vmatpush1.msra.mxu0 0.0
      %676 = vmatprep.subr.mxu0 0.0
      %677 = vmatpush1.msra.mxu0 0.0
      %678 = vmatprep.subr.mxu0 0.0
      %679 = vmatpush1.msra.mxu0 0.0
      %680 = vmatprep.subr.mxu0 0.0
      %681 = vmatpush1.msra.mxu0 0.0
      %682 = vmatprep.subr.mxu0 0.0
      %683 = vmatpush1.msra.mxu0 0.0
      %684 = vmatprep.subr.mxu0 0.0
      %685 = vmatpush1.msra.mxu0 0.0
      %686 = vmatprep.subr.mxu0 0.0
      %687 = vmatpush1.msra.mxu0 0.0
      %688 = vmatprep.subr.mxu0 0.0
      %689 = vmatpush1.msra.mxu0 %v653
      %690 = vmatprep.subr.mxu0 0.0
      %691 = vmatpush2.msra.mxu0 0.0
      %692 = vmatprep.subr.mxu0 0.0
      %693 = vmatpush2.msra.mxu0 0.0
      %694 = vmatprep.subr.mxu0 0.0
      %695 = vmatpush2.msra.mxu0 0.0
      %696 = vmatprep.subr.mxu0 0.0
      %697 = vmatpush2.msra.mxu0 0.0
      %698 = vmatprep.subr.mxu0 0.0
      %699 = vmatpush2.msra.mxu0 0.0
      %700 = vmatprep.subr.mxu0 0.0
      %701 = vmatpush2.msra.mxu0 0.0
      %702 = vmatprep.subr.mxu0 0.0
      %703 = vmatpush2.msra.mxu0 0.0
      %704 = vmatprep.subr.mxu0 0.0
      %705 = vmatpush2.msra.mxu0 0.0
      %706 = vmatprep.subr.mxu0 0.0
      %707 = vmatpush2.msra.mxu0 0.0
      %708 = vmatprep.subr.mxu0 0.0
      %709 = vmatpush2.msra.mxu0 0.0
      %710 = vmatprep.subr.mxu0 0.0
      %711 = vmatpush2.msra.mxu0 0.0
      %712 = vmatprep.subr.mxu0 0.0
      %713 = vmatpush2.msra.mxu0 0.0
      %714 = vmatprep.subr.mxu0 0.0
      %715 = vmatpush2.msra.mxu0 0.0
      %716 = vmatprep.subr.mxu0 0.0
      %717 = vmatpush2.msra.mxu0 0.0
      %718 = vmatprep.subr.mxu0 0.0
      %719 = vmatpush2.msra.mxu0 0.0
      %720 = vmatprep.subr.mxu0 0.0
      %721 = vmatpush2.msra.mxu0 0.0
      %722 = vmatprep.mubr.f32.mxu0 0.0
      %723 = vmatmul.mubr.f32.gmra.mxu0 %v656
      %v724 = vpop.f32.mrf.mxu0
      %v725 = vadd.f32 0.0, %v724
      %v726 = vpop.f32.mrf.mxu0
      %727 = vdwg.mxu0
      %728 = vrot.lane.b32.xlu0 %v231, 32
      %v729 = vpop.permute.xlu0 %728
      %730 = vrot.lane.b32.xlu0 %v228, 32
      %v731 = vpop.permute.xlu0 %730
      %v732 = vsel %vm232, %v729, 0
      %v734 = vsel %vm232, %v731, 0
      %736 = vmatprep.subr.mxu0 0.0
      %737 = vmatpush1.xpose.msra.mxu0 0.0
      %738 = vmatprep.subr.mxu0 0.0
      %739 = vmatpush1.xpose.msra.mxu0 0.0
      %740 = vmatprep.subr.mxu0 0.0
      %741 = vmatpush1.xpose.msra.mxu0 0.0
      %742 = vmatprep.subr.mxu0 0.0
      %743 = vmatpush1.xpose.msra.mxu0 0.0
      %744 = vmatprep.subr.mxu0 0.0
      %745 = vmatpush1.xpose.msra.mxu0 0.0
      %746 = vmatprep.subr.mxu0 0.0
      %747 = vmatpush1.xpose.msra.mxu0 0.0
      %748 = vmatprep.subr.mxu0 0.0
      %749 = vmatpush1.xpose.msra.mxu0 0.0
      %750 = vmatprep.subr.mxu0 0.0
      %751 = vmatpush1.xpose.msra.mxu0 0.0
      %752 = vmatprep.subr.mxu0 0.0
      %753 = vmatpush1.xpose.msra.mxu0 0.0
      %754 = vmatprep.subr.mxu0 0.0
      %755 = vmatpush1.xpose.msra.mxu0 0.0
      %756 = vmatprep.subr.mxu0 0.0
      %757 = vmatpush1.xpose.msra.mxu0 0.0
      %758 = vmatprep.subr.mxu0 0.0
      %759 = vmatpush1.xpose.msra.mxu0 0.0
      %760 = vmatprep.subr.mxu0 0.0
      %761 = vmatpush1.xpose.msra.mxu0 0.0
      %762 = vmatprep.subr.mxu0 0.0
      %763 = vmatpush1.xpose.msra.mxu0 0.0
      %764 = vmatprep.subr.mxu0 0.0
      %765 = vmatpush1.xpose.msra.mxu0 0.0
      %766 = vmatprep.subr.mxu0 0.0
      %767 = vmatpush1.xpose.msra.mxu0 %v734
      %768 = vmatprep.subr.mxu0 0.0
      %769 = vmatpush2.xpose.msra.mxu0 0.0
      %770 = vmatprep.subr.mxu0 0.0
      %771 = vmatpush2.xpose.msra.mxu0 0.0
      %772 = vmatprep.subr.mxu0 0.0
      %773 = vmatpush2.xpose.msra.mxu0 0.0
      %774 = vmatprep.subr.mxu0 0.0
      %775 = vmatpush2.xpose.msra.mxu0 0.0
      %776 = vmatprep.subr.mxu0 0.0
      %777 = vmatpush2.xpose.msra.mxu0 0.0
      %778 = vmatprep.subr.mxu0 0.0
      %779 = vmatpush2.xpose.msra.mxu0 0.0
      %780 = vmatprep.subr.mxu0 0.0
      %781 = vmatpush2.xpose.msra.mxu0 0.0
      %782 = vmatprep.subr.mxu0 0.0
      %783 = vmatpush2.xpose.msra.mxu0 0.0
      %784 = vmatprep.subr.mxu0 0.0
      %785 = vmatpush2.xpose.msra.mxu0 0.0
      %786 = vmatprep.subr.mxu0 0.0
      %787 = vmatpush2.xpose.msra.mxu0 0.0
      %788 = vmatprep.subr.mxu0 0.0
      %789 = vmatpush2.xpose.msra.mxu0 0.0
      %790 = vmatprep.subr.mxu0 0.0
      %791 = vmatpush2.xpose.msra.mxu0 0.0
      %792 = vmatprep.subr.mxu0 0.0
      %793 = vmatpush2.xpose.msra.mxu0 0.0
      %794 = vmatprep.subr.mxu0 0.0
      %795 = vmatpush2.xpose.msra.mxu0 0.0
      %796 = vmatprep.subr.mxu0 0.0
      %797 = vmatpush2.xpose.msra.mxu0 0.0
      %798 = vmatprep.subr.mxu0 0.0
      %799 = vmatpush2.xpose.msra.mxu0 0.0
      %800 = vmatprep.mubr.f32.mxu0 0.0
      %801 = vmatmul.mubr.f32.gmra.mxu0 %v732
      %v802 = vpop.f32.mrf.mxu0
      %v803 = vadd.f32 %v230, %v802
      %v804 = vpop.f32.mrf.mxu0
      %805 = vdwg.mxu0
      %v806 = vsel %vm309, %v803, -inf
      %807 = vmax.xlane.f32.xlu0 %v806
      %v808 = vpop.xlane.xlu0 %807
      %v809 = vsub.f32 %v803, %v808
      %v810 = vmul.f32 %v809, 1.442695
      %v811 = vpow.pop %v810
      %v812 = vsel %vm309, %v811, 0.0
      %813 = vadd.xlane.f32.xlu0 %v812
      %v814 = vpop.xlane.xlu0 %813
      %v815 = vrcp.pop %v814
      %v816 = vmul.f32 1.0, %v815
      %v817 = vmul.f32 %v811, %v816
      %818 = vrot.lane.b32.xlu0 %v229, 32
      %v819 = vpop.permute.xlu0 %818
      %v822 = vsel %vm309, %v817, 0
      %824 = vmatprep.subr.mxu0 0.0
      %825 = vmatpush1.msra.mxu0 0.0
      %826 = vmatprep.subr.mxu0 0.0
      %827 = vmatpush1.msra.mxu0 0.0
      %828 = vmatprep.subr.mxu0 0.0
      %829 = vmatpush1.msra.mxu0 0.0
      %830 = vmatprep.subr.mxu0 0.0
      %831 = vmatpush1.msra.mxu0 0.0
      %832 = vmatprep.subr.mxu0 0.0
      %833 = vmatpush1.msra.mxu0 0.0
      %834 = vmatprep.subr.mxu0 0.0
      %835 = vmatpush1.msra.mxu0 0.0
      %836 = vmatprep.subr.mxu0 0.0
      %837 = vmatpush1.msra.mxu0 0.0
      %838 = vmatprep.subr.mxu0 0.0
      %839 = vmatpush1.msra.mxu0 0.0
      %840 = vmatprep.subr.mxu0 0.0
      %841 = vmatpush1.msra.mxu0 0.0
      %842 = vmatprep.subr.mxu0 0.0
      %843 = vmatpush1.msra.mxu0 0.0
      %844 = vmatprep.subr.mxu0 0.0
      %845 = vmatpush1.msra.mxu0 0.0
      %846 = vmatprep.subr.mxu0 0.0
      %847 = vmatpush1.msra.mxu0 0.0
      %848 = vmatprep.subr.mxu0 0.0
      %849 = vmatpush1.msra.mxu0 0.0
      %850 = vmatprep.subr.mxu0 0.0
      %851 = vmatpush1.msra.mxu0 0.0
      %852 = vmatprep.subr.mxu0 0.0
      %853 = vmatpush1.msra.mxu0 0.0
      %854 = vmatprep.subr.mxu0 0.0
      %855 = vmatpush1.msra.mxu0 %v819
      %856 = vmatprep.subr.mxu0 0.0
      %857 = vmatpush2.msra.mxu0 0.0
      %858 = vmatprep.subr.mxu0 0.0
      %859 = vmatpush2.msra.mxu0 0.0
      %860 = vmatprep.subr.mxu0 0.0
      %861 = vmatpush2.msra.mxu0 0.0
      %862 = vmatprep.subr.mxu0 0.0
      %863 = vmatpush2.msra.mxu0 0.0
      %864 = vmatprep.subr.mxu0 0.0
      %865 = vmatpush2.msra.mxu0 0.0
      %866 = vmatprep.subr.mxu0 0.0
      %867 = vmatpush2.msra.mxu0 0.0
      %868 = vmatprep.subr.mxu0 0.0
      %869 = vmatpush2.msra.mxu0 0.0
      %870 = vmatprep.subr.mxu0 0.0
      %871 = vmatpush2.msra.mxu0 0.0
      %872 = vmatprep.subr.mxu0 0.0
      %873 = vmatpush2.msra.mxu0 0.0
      %874 = vmatprep.subr.mxu0 0.0
      %875 = vmatpush2.msra.mxu0 0.0
      %876 = vmatprep.subr.mxu0 0.0
      %877 = vmatpush2.msra.mxu0 0.0
      %878 = vmatprep.subr.mxu0 0.0
      %879 = vmatpush2.msra.mxu0 0.0
      %880 = vmatprep.subr.mxu0 0.0
      %881 = vmatpush2.msra.mxu0 0.0
      %882 = vmatprep.subr.mxu0 0.0
      %883 = vmatpush2.msra.mxu0 0.0
      %884 = vmatprep.subr.mxu0 0.0
      %885 = vmatpush2.msra.mxu0 0.0
      %886 = vmatprep.subr.mxu0 0.0
      %887 = vmatpush2.msra.mxu0 0.0
      %888 = vmatprep.mubr.f32.mxu0 0.0
      %889 = vmatmul.mubr.f32.gmra.mxu0 %v822
      %v890 = vpop.f32.mrf.mxu0
      %v891 = vadd.f32 0.0, %v890
      %v892 = vpop.f32.mrf.mxu0
      %893 = vdwg.mxu0
      %895 = vrot.lane.b32.xlu0 %v559, 32
      %v896 = vpop.permute.xlu0 %895
      %899 = vrot.lane.b32.xlu0 %v725, 64
      %v900 = vpop.permute.xlu0 %899
      %903 = vrot.lane.b32.xlu0 %v891, 96
      %v904 = vpop.permute.xlu0 %903
      %v906 = vsel %vm232, %v392, %v896
      %vm907 = vcmask 523264
      %v908 = vsel %vm907, %v906, %v900
      %vm909 = vcmask 785408
      %v910 = vsel %vm909, %v908, %v904
      %911 = vst [vmem:[%s226] sm:$0xff] %v910
      %p912 = scmp.lt.s32.totalorder %s15, 1
      %s913 = scalar_select %p912, %s15, 1
      %s914 = smul.addr %s913, 8
      %s915 = scalar_lea.vmem %s4, %s914
      // Predicated region
      $region37: #{full_model_forward.28} parent=35 // pred_check
        %p916 = pneg %p132
      $region38: #{full_model_forward.28} parent=35 // pred_check_branch
        %918 = sbr.rel (%p916) target = $region40
      $region39: #{full_model_forward.28} parent=35 // pred_region
        _
      $region40: #{full_model_forward.28} parent=35 // pred_fallthru
        _
    $region36: #{full_model_forward.28} parent=5 // pred_fallthru
      _
    %p919 = scmp.le.s32.totalorder 2, %s10
    // Predicated region
    $region41: #{full_model_forward.28} parent=5 // pred_check
      %p920 = pneg %p919
    $region42: #{full_model_forward.28} parent=5 // pred_check_branch
      %922 = sbr.rel (%p920) target = $region44
    $region43: #{full_model_forward.28} parent=5 // pred_region
      %s923 = ssub.s32 %s10, 2
      // Predicated region
      $region45: #{full_model_forward.28} parent=43 // pred_check
        %p924 = pneg %p138
      $region46: #{full_model_forward.28} parent=43 // pred_check_branch
        %926 = sbr.rel (%p924) target = $region48
      $region47: #{full_model_forward.28} parent=43 // pred_region
        %p927 = scmp.lt.s32.totalorder %s16, 1
        %s928 = scalar_select %p927, %s16, 1
        %s929 = smul.addr %s928, 8
        %s930 = scalar_lea.vmem %s4, %s929
      $region48: #{full_model_forward.28} parent=43 // pred_fallthru
        _
    $region44: #{full_model_forward.28} parent=5 // pred_fallthru
      _
  $region6: #{full_model_forward.28} parent=0 // loop_footer
    %s14 = sadd.s32 1, %s10
  $region7: #{full_model_forward.28} parent=0 // loop_footer_branch
    %9 = sbr.rel target = $region3
  $region8: #{full_model_forward.28} parent=0 // loop_exit
    _

// kernel: full_model_forward.35
$region0: #{full_model_forward.35}
  #allocation0 [shape = 'u32[]', space=smem, size = 0x4, offset = 0x4, fixed_abs, tag = 'smem constant byte address 0x4 - core index']
  #allocation1 [shape = 'u32[144,128]{1,0:T(1,128)}', space=vmem, size = 0x12000, scoped, tag = 'internal scratch']
  %s0 = inlined_call_operand.vmem [shape: f32[16,128], index: 0, kind: input, shape index: {}]
  %s1 = inlined_call_operand.vmem [shape: f32[1,128], index: 1, kind: input, shape index: {}]
  %s2 = inlined_call_operand.vmem [shape: f32[1,128], index: 2, kind: input, shape index: {}]
  %s3 = inlined_call_operand.vmem [shape: f32[16,128], index: 3, kind: output, shape index: {}]
  %s4 = sld [smem:[#allocation0]]
  $region22: #{full_model_forward.35} parent=0
    _
  %s6 = ssub.s32 1, %s4
  %s7 = scalar_select 0, %s6, %s4
  // Predicated region
  $region2: #{full_model_forward.35} parent=0 // pred_check
    _
  $region3: #{full_model_forward.35} parent=0 // pred_check_branch
    %9 = sbr.rel (0) target = $region5
  $region4: #{full_model_forward.35} parent=0 // pred_region
    _
  $region5: #{full_model_forward.35} parent=0 // pred_fallthru
    _
  // Predicated region
  $region6: #{full_model_forward.35} parent=0 // pred_check
    _
  $region7: #{full_model_forward.35} parent=0 // pred_check_branch
    %11 = sbr.rel (0) target = $region9
  $region8: #{full_model_forward.35} parent=0 // pred_region
    _
  $region9: #{full_model_forward.35} parent=0 // pred_fallthru
    _
  // Predicated region
  $region10: #{full_model_forward.35} parent=0 // pred_check
    _
  $region11: #{full_model_forward.35} parent=0 // pred_check_branch
    %13 = sbr.rel (0) target = $region13
  $region12: #{full_model_forward.35} parent=0 // pred_region
    _
  $region13: #{full_model_forward.35} parent=0 // pred_fallthru
    _
  %v14 = vld [vmem:[%s0] sm:$0xff]
  %v15 = vld [vmem:[%s0 + $0x8] sm:$0xff]
  %v16 = vld [vmem:[%s1] sm:$0x1]
  %v17 = vld [vmem:[%s2] sm:$0x1]
  %18 = vadd.xlane.f32.xlu0 %v14
  %v19 = vpop.xlane.xlu0 %18
  %20 = vadd.xlane.f32.xlu0 %v15
  %v21 = vpop.xlane.xlu0 %20
  %v22 = vrcp.pop 128.0
  %v23 = vmul.f32 %v19, %v22
  %v24 = vmul.f32 %v21, %v22
  %v25 = vsub.f32 %v14, %v23
  %v26 = vsub.f32 %v15, %v24
  %v27 = vmul.f32 %v25, %v25
  %v28 = vmul.f32 %v26, %v26
  %29 = vadd.xlane.f32.xlu0 %v27
  %v30 = vpop.xlane.xlu0 %29
  %31 = vadd.xlane.f32.xlu0 %v28
  %v32 = vpop.xlane.xlu0 %31
  %v33 = vmul.f32 %v30, %v22
  %v34 = vmul.f32 %v32, %v22
  %v35 = vadd.f32 %v33, 1e-05
  %v36 = vadd.f32 %v34, 1e-05
  %v37 = vrsqrt.pop %v35
  %v38 = vrsqrt.pop %v36
  %v39 = vmul.f32 %v25, %v37
  %v40 = vmul.f32 %v26, %v38
  %v42 = vlaneseq
  %v43 = vshrl.u32 %v42, 7
  %v44 = vsub.s32 0, %v43
  %v45 = vrot.slane %v16, %v44
  %v47 = vmul.f32 %v39, %v45
  %v48 = vmul.f32 %v40, %v45
  %v50 = vlaneseq
  %v51 = vshrl.u32 %v50, 7
  %v52 = vsub.s32 0, %v51
  %v53 = vrot.slane %v17, %v52
  %v55 = vadd.f32 %v47, %v53
  %v56 = vadd.f32 %v48, %v53
  %57 = vst [vmem:[%s3] sm:$0xff] %v55
  %58 = vst [vmem:[%s3 + $0x8] sm:$0xff] %v56
  // Predicated region
  $region14: #{full_model_forward.35} parent=0 // pred_check
    _
  $region15: #{full_model_forward.35} parent=0 // pred_check_branch
    %60 = sbr.rel (0) target = $region17
  $region16: #{full_model_forward.35} parent=0 // pred_region
    _
  $region17: #{full_model_forward.35} parent=0 // pred_fallthru
    _
  // Predicated region
  $region18: #{full_model_forward.35} parent=0 // pred_check
    _
  $region19: #{full_model_forward.35} parent=0 // pred_check_branch
    %62 = sbr.rel (0) target = $region21
  $region20: #{full_model_forward.35} parent=0 // pred_region
    _
  $region21: #{full_model_forward.35} parent=0 // pred_fallthru
    _

// kernel: full_model_forward.39
$region0: #{full_model_forward.39}
  #allocation0 [shape = 'u32[]', space=smem, size = 0x4, offset = 0x4, fixed_abs, tag = 'smem constant byte address 0x4 - core index']
  #allocation1 [shape = 'u32[144,128]{1,0:T(1,128)}', space=vmem, size = 0x12000, scoped, tag = 'internal scratch']
  #allocation2 [shape = 'f32[16,128]{1,0:T(8,128)}', space=vmem, size = 0x2000, scoped, tag = 'scratch operand']
  %s0 = inlined_call_operand.vmem [shape: f32[16,128], index: 0, kind: input, shape index: {}]
  %s1 = inlined_call_operand.vmem [shape: f32[128,128], index: 1, kind: input, shape index: {}]
  %s2 = inlined_call_operand.vmem [shape: f32[1,128], index: 2, kind: input, shape index: {}]
  %s3 = inlined_call_operand.vmem [shape: f32[16,128], index: 3, kind: output, shape index: {}]
  %s4 = sld [smem:[#allocation0]]
  $region30: #{full_model_forward.39} parent=0
    _
  %s6 = ssub.s32 1, %s4
  %s7 = scalar_select 0, %s6, %s4
  // Predicated region
  $region2: #{full_model_forward.39} parent=0 // pred_check
    _
  $region3: #{full_model_forward.39} parent=0 // pred_check_branch
    %9 = sbr.rel (0) target = $region5
  $region4: #{full_model_forward.39} parent=0 // pred_region
    _
  $region5: #{full_model_forward.39} parent=0 // pred_fallthru
    _
  // Predicated region
  $region6: #{full_model_forward.39} parent=0 // pred_check
    _
  $region7: #{full_model_forward.39} parent=0 // pred_check_branch
    %11 = sbr.rel (0) target = $region9
  $region8: #{full_model_forward.39} parent=0 // pred_region
    _
  $region9: #{full_model_forward.39} parent=0 // pred_fallthru
    _
  // Predicated region
  $region10: #{full_model_forward.39} parent=0 // pred_check
    _
  $region11: #{full_model_forward.39} parent=0 // pred_check_branch
    %13 = sbr.rel (0) target = $region13
  $region12: #{full_model_forward.39} parent=0 // pred_region
    _
  $region13: #{full_model_forward.39} parent=0 // pred_fallthru
    _
  %p14 = scmp.eq.s32.totalorder 0, 0
  // Predicated region
  $region14: #{full_model_forward.39} parent=0 // pred_check
    %p15 = pneg %p14
  $region15: #{full_model_forward.39} parent=0 // pred_check_branch
    %17 = sbr.rel (%p15) target = $region17
  $region16: #{full_model_forward.39} parent=0 // pred_region
    %18 = vst [vmem:[#allocation2] sm:$0xff] 0.0
    %19 = vst [vmem:[#allocation2 + $0x8] sm:$0xff] 0.0
  $region17: #{full_model_forward.39} parent=0 // pred_fallthru
    _
  %v20 = vld [vmem:[#allocation2] sm:$0xff]
  %v21 = vld [vmem:[#allocation2 + $0x8] sm:$0xff]
  %v22 = vld [vmem:[%s0] sm:$0xff]
  %v23 = vld [vmem:[%s0 + $0x8] sm:$0xff]
  %v24 = vld [vmem:[%s1] sm:$0xff]
  %v25 = vld [vmem:[%s1 + $0x8] sm:$0xff]
  %v26 = vld [vmem:[%s1 + $0x10] sm:$0xff]
  %v27 = vld [vmem:[%s1 + $0x18] sm:$0xff]
  %v28 = vld [vmem:[%s1 + $0x20] sm:$0xff]
  %v29 = vld [vmem:[%s1 + $0x28] sm:$0xff]
  %v30 = vld [vmem:[%s1 + $0x30] sm:$0xff]
  %v31 = vld [vmem:[%s1 + $0x38] sm:$0xff]
  %v32 = vld [vmem:[%s1 + $0x40] sm:$0xff]
  %v33 = vld [vmem:[%s1 + $0x48] sm:$0xff]
  %v34 = vld [vmem:[%s1 + $0x50] sm:$0xff]
  %v35 = vld [vmem:[%s1 + $0x58] sm:$0xff]
  %v36 = vld [vmem:[%s1 + $0x60] sm:$0xff]
  %v37 = vld [vmem:[%s1 + $0x68] sm:$0xff]
  %v38 = vld [vmem:[%s1 + $0x70] sm:$0xff]
  %v39 = vld [vmem:[%s1 + $0x78] sm:$0xff]
  %40 = vmatprep.subr.mxu0 0.0
  %41 = vmatpush1.msra.mxu0 %v39
  %42 = vmatprep.subr.mxu0 0.0
  %43 = vmatpush1.msra.mxu0 %v38
  %44 = vmatprep.subr.mxu0 0.0
  %45 = vmatpush1.msra.mxu0 %v37
  %46 = vmatprep.subr.mxu0 0.0
  %47 = vmatpush1.msra.mxu0 %v36
  %48 = vmatprep.subr.mxu0 0.0
  %49 = vmatpush1.msra.mxu0 %v35
  %50 = vmatprep.subr.mxu0 0.0
  %51 = vmatpush1.msra.mxu0 %v34
  %52 = vmatprep.subr.mxu0 0.0
  %53 = vmatpush1.msra.mxu0 %v33
  %54 = vmatprep.subr.mxu0 0.0
  %55 = vmatpush1.msra.mxu0 %v32
  %56 = vmatprep.subr.mxu0 0.0
  %57 = vmatpush1.msra.mxu0 %v31
  %58 = vmatprep.subr.mxu0 0.0
  %59 = vmatpush1.msra.mxu0 %v30
  %60 = vmatprep.subr.mxu0 0.0
  %61 = vmatpush1.msra.mxu0 %v29
  %62 = vmatprep.subr.mxu0 0.0
  %63 = vmatpush1.msra.mxu0 %v28
  %64 = vmatprep.subr.mxu0 0.0
  %65 = vmatpush1.msra.mxu0 %v27
  %66 = vmatprep.subr.mxu0 0.0
  %67 = vmatpush1.msra.mxu0 %v26
  %68 = vmatprep.subr.mxu0 0.0
  %69 = vmatpush1.msra.mxu0 %v25
  %70 = vmatprep.subr.mxu0 0.0
  %71 = vmatpush1.msra.mxu0 %v24
  %72 = vmatprep.subr.mxu0 0.0
  %73 = vmatpush2.msra.mxu0 0.0
  %74 = vmatprep.subr.mxu0 0.0
  %75 = vmatpush2.msra.mxu0 0.0
  %76 = vmatprep.subr.mxu0 0.0
  %77 = vmatpush2.msra.mxu0 0.0
  %78 = vmatprep.subr.mxu0 0.0
  %79 = vmatpush2.msra.mxu0 0.0
  %80 = vmatprep.subr.mxu0 0.0
  %81 = vmatpush2.msra.mxu0 0.0
  %82 = vmatprep.subr.mxu0 0.0
  %83 = vmatpush2.msra.mxu0 0.0
  %84 = vmatprep.subr.mxu0 0.0
  %85 = vmatpush2.msra.mxu0 0.0
  %86 = vmatprep.subr.mxu0 0.0
  %87 = vmatpush2.msra.mxu0 0.0
  %88 = vmatprep.subr.mxu0 0.0
  %89 = vmatpush2.msra.mxu0 0.0
  %90 = vmatprep.subr.mxu0 0.0
  %91 = vmatpush2.msra.mxu0 0.0
  %92 = vmatprep.subr.mxu0 0.0
  %93 = vmatpush2.msra.mxu0 0.0
  %94 = vmatprep.subr.mxu0 0.0
  %95 = vmatpush2.msra.mxu0 0.0
  %96 = vmatprep.subr.mxu0 0.0
  %97 = vmatpush2.msra.mxu0 0.0
  %98 = vmatprep.subr.mxu0 0.0
  %99 = vmatpush2.msra.mxu0 0.0
  %100 = vmatprep.subr.mxu0 0.0
  %101 = vmatpush2.msra.mxu0 0.0
  %102 = vmatprep.subr.mxu0 0.0
  %103 = vmatpush2.msra.mxu0 0.0
  %104 = vmatprep.mubr.f32.mxu0 0.0
  %105 = vmatmul.mubr.f32.gmra.mxu0 %v22
  %v106 = vpop.f32.mrf.mxu0
  %v107 = vadd.f32 0.0, %v106
  %v108 = vpop.f32.mrf.mxu0
  %109 = vmatprep.mubr.f32.mxu0 0.0
  %110 = vmatmul.mubr.f32.gmra.mxu0 %v23
  %v111 = vpop.f32.mrf.mxu0
  %v112 = vadd.f32 0.0, %v111
  %v113 = vpop.f32.mrf.mxu0
  %114 = vdwg.mxu0
  %v115 = vadd.f32 %v20, %v107
  %v116 = vadd.f32 %v21, %v112
  %117 = vst [vmem:[#allocation2] sm:$0xff] %v115
  %118 = vst [vmem:[#allocation2 + $0x8] sm:$0xff] %v116
  // Predicated region
  $region18: #{full_model_forward.39} parent=0 // pred_check
    %p119 = pneg %p14
  $region19: #{full_model_forward.39} parent=0 // pred_check_branch
    %121 = sbr.rel (%p119) target = $region21
  $region20: #{full_model_forward.39} parent=0 // pred_region
    %v122 = vld [vmem:[#allocation2] sm:$0xff]
    %v123 = vld [vmem:[#allocation2 + $0x8] sm:$0xff]
    %v124 = vld [vmem:[%s2] sm:$0x1]
    %v126 = vlaneseq
    %v127 = vshrl.u32 %v126, 7
    %v128 = vsub.s32 0, %v127
    %v129 = vrot.slane %v124, %v128
    %v131 = vadd.f32 %v122, %v129
    %v132 = vadd.f32 %v123, %v129
    %133 = vst [vmem:[%s3] sm:$0xff] %v131
    %134 = vst [vmem:[%s3 + $0x8] sm:$0xff] %v132
  $region21: #{full_model_forward.39} parent=0 // pred_fallthru
    _
  // Predicated region
  $region22: #{full_model_forward.39} parent=0 // pred_check
    _
  $region23: #{full_model_forward.39} parent=0 // pred_check_branch
    %136 = sbr.rel (0) target = $region25
  $region24: #{full_model_forward.39} parent=0 // pred_region
    _
  $region25: #{full_model_forward.39} parent=0 // pred_fallthru
    _
  // Predicated region
  $region26: #{full_model_forward.39} parent=0 // pred_check
    _
  $region27: #{full_model_forward.39} parent=0 // pred_check_branch
    %138 = sbr.rel (0) target = $region29
  $region28: #{full_model_forward.39} parent=0 // pred_region
    _
  $region29: #{full_model_forward.39} parent=0 // pred_fallthru
    _

// kernel: full_model_forward.40
$region0: #{full_model_forward.40}
  #allocation0 [shape = 'u32[]', space=smem, size = 0x4, offset = 0x4, fixed_abs, tag = 'smem constant byte address 0x4 - core index']
  #allocation1 [shape = 'u32[144,128]{1,0:T(1,128)}', space=vmem, size = 0x12000, scoped, tag = 'internal scratch']
  #allocation2 [shape = 'f32[16,256]{1,0:T(8,128)}', space=vmem, size = 0x4000, scoped, tag = 'scratch operand']
  %s0 = inlined_call_operand.vmem [shape: f32[16,128], index: 0, kind: input, shape index: {}]
  %s1 = inlined_call_operand.vmem [shape: f32[128,256], index: 1, kind: input, shape index: {}]
  %s2 = inlined_call_operand.vmem [shape: f32[1,256], index: 2, kind: input, shape index: {}]
  %s3 = inlined_call_operand.vmem [shape: f32[16,256], index: 3, kind: output, shape index: {}]
  %s4 = sld [smem:[#allocation0]]
  $region30: #{full_model_forward.40} parent=0
    _
  %s6 = ssub.s32 1, %s4
  %s7 = scalar_select 0, %s6, %s4
  // Predicated region
  $region2: #{full_model_forward.40} parent=0 // pred_check
    _
  $region3: #{full_model_forward.40} parent=0 // pred_check_branch
    %9 = sbr.rel (0) target = $region5
  $region4: #{full_model_forward.40} parent=0 // pred_region
    _
  $region5: #{full_model_forward.40} parent=0 // pred_fallthru
    _
  // Predicated region
  $region6: #{full_model_forward.40} parent=0 // pred_check
    _
  $region7: #{full_model_forward.40} parent=0 // pred_check_branch
    %11 = sbr.rel (0) target = $region9
  $region8: #{full_model_forward.40} parent=0 // pred_region
    _
  $region9: #{full_model_forward.40} parent=0 // pred_fallthru
    _
  // Predicated region
  $region10: #{full_model_forward.40} parent=0 // pred_check
    _
  $region11: #{full_model_forward.40} parent=0 // pred_check_branch
    %13 = sbr.rel (0) target = $region13
  $region12: #{full_model_forward.40} parent=0 // pred_region
    _
  $region13: #{full_model_forward.40} parent=0 // pred_fallthru
    _
  %p14 = scmp.eq.s32.totalorder 0, 0
  // Predicated region
  $region14: #{full_model_forward.40} parent=0 // pred_check
    %p15 = pneg %p14
  $region15: #{full_model_forward.40} parent=0 // pred_check_branch
    %17 = sbr.rel (%p15) target = $region17
  $region16: #{full_model_forward.40} parent=0 // pred_region
    %18 = vst [vmem:[#allocation2] sm:$0xff] 0.0
    %19 = vst [vmem:[#allocation2 + $0x8] sm:$0xff] 0.0
    %20 = vst [vmem:[#allocation2 + $0x10] sm:$0xff] 0.0
    %21 = vst [vmem:[#allocation2 + $0x18] sm:$0xff] 0.0
  $region17: #{full_model_forward.40} parent=0 // pred_fallthru
    _
  %v22 = vld [vmem:[#allocation2] sm:$0xff]
  %v23 = vld [vmem:[#allocation2 + $0x8] sm:$0xff]
  %v24 = vld [vmem:[#allocation2 + $0x10] sm:$0xff]
  %v25 = vld [vmem:[#allocation2 + $0x18] sm:$0xff]
  %v26 = vld [vmem:[%s0] sm:$0xff]
  %v27 = vld [vmem:[%s0 + $0x8] sm:$0xff]
  %v28 = vld [vmem:[%s1] sm:$0xff]
  %v29 = vld [vmem:[%s1 + $0x8] sm:$0xff]
  %v30 = vld [vmem:[%s1 + $0x10] sm:$0xff]
  %v31 = vld [vmem:[%s1 + $0x18] sm:$0xff]
  %v32 = vld [vmem:[%s1 + $0x20] sm:$0xff]
  %v33 = vld [vmem:[%s1 + $0x28] sm:$0xff]
  %v34 = vld [vmem:[%s1 + $0x30] sm:$0xff]
  %v35 = vld [vmem:[%s1 + $0x38] sm:$0xff]
  %v36 = vld [vmem:[%s1 + $0x40] sm:$0xff]
  %v37 = vld [vmem:[%s1 + $0x48] sm:$0xff]
  %v38 = vld [vmem:[%s1 + $0x50] sm:$0xff]
  %v39 = vld [vmem:[%s1 + $0x58] sm:$0xff]
  %v40 = vld [vmem:[%s1 + $0x60] sm:$0xff]
  %v41 = vld [vmem:[%s1 + $0x68] sm:$0xff]
  %v42 = vld [vmem:[%s1 + $0x70] sm:$0xff]
  %v43 = vld [vmem:[%s1 + $0x78] sm:$0xff]
  %v44 = vld [vmem:[%s1 + $0x80] sm:$0xff]
  %v45 = vld [vmem:[%s1 + $0x88] sm:$0xff]
  %v46 = vld [vmem:[%s1 + $0x90] sm:$0xff]
  %v47 = vld [vmem:[%s1 + $0x98] sm:$0xff]
  %v48 = vld [vmem:[%s1 + $0xa0] sm:$0xff]
  %v49 = vld [vmem:[%s1 + $0xa8] sm:$0xff]
  %v50 = vld [vmem:[%s1 + $0xb0] sm:$0xff]
  %v51 = vld [vmem:[%s1 + $0xb8] sm:$0xff]
  %v52 = vld [vmem:[%s1 + $0xc0] sm:$0xff]
  %v53 = vld [vmem:[%s1 + $0xc8] sm:$0xff]
  %v54 = vld [vmem:[%s1 + $0xd0] sm:$0xff]
  %v55 = vld [vmem:[%s1 + $0xd8] sm:$0xff]
  %v56 = vld [vmem:[%s1 + $0xe0] sm:$0xff]
  %v57 = vld [vmem:[%s1 + $0xe8] sm:$0xff]
  %v58 = vld [vmem:[%s1 + $0xf0] sm:$0xff]
  %v59 = vld [vmem:[%s1 + $0xf8] sm:$0xff]
  %60 = vmatprep.subr.mxu0 %v59
  %61 = vmatpush1.msra.mxu0 %v58
  %62 = vmatprep.subr.mxu0 %v57
  %63 = vmatpush1.msra.mxu0 %v56
  %64 = vmatprep.subr.mxu0 %v55
  %65 = vmatpush1.msra.mxu0 %v54
  %66 = vmatprep.subr.mxu0 %v53
  %67 = vmatpush1.msra.mxu0 %v52
  %68 = vmatprep.subr.mxu0 %v51
  %69 = vmatpush1.msra.mxu0 %v50
  %70 = vmatprep.subr.mxu0 %v49
  %71 = vmatpush1.msra.mxu0 %v48
  %72 = vmatprep.subr.mxu0 %v47
  %73 = vmatpush1.msra.mxu0 %v46
  %74 = vmatprep.subr.mxu0 %v45
  %75 = vmatpush1.msra.mxu0 %v44
  %76 = vmatprep.subr.mxu0 %v43
  %77 = vmatpush1.msra.mxu0 %v42
  %78 = vmatprep.subr.mxu0 %v41
  %79 = vmatpush1.msra.mxu0 %v40
  %80 = vmatprep.subr.mxu0 %v39
  %81 = vmatpush1.msra.mxu0 %v38
  %82 = vmatprep.subr.mxu0 %v37
  %83 = vmatpush1.msra.mxu0 %v36
  %84 = vmatprep.subr.mxu0 %v35
  %85 = vmatpush1.msra.mxu0 %v34
  %86 = vmatprep.subr.mxu0 %v33
  %87 = vmatpush1.msra.mxu0 %v32
  %88 = vmatprep.subr.mxu0 %v31
  %89 = vmatpush1.msra.mxu0 %v30
  %90 = vmatprep.subr.mxu0 %v29
  %91 = vmatpush1.msra.mxu0 %v28
  %92 = vmatprep.subr.mxu0 0.0
  %93 = vmatpush2.msra.mxu0 0.0
  %94 = vmatprep.subr.mxu0 0.0
  %95 = vmatpush2.msra.mxu0 0.0
  %96 = vmatprep.subr.mxu0 0.0
  %97 = vmatpush2.msra.mxu0 0.0
  %98 = vmatprep.subr.mxu0 0.0
  %99 = vmatpush2.msra.mxu0 0.0
  %100 = vmatprep.subr.mxu0 0.0
  %101 = vmatpush2.msra.mxu0 0.0
  %102 = vmatprep.subr.mxu0 0.0
  %103 = vmatpush2.msra.mxu0 0.0
  %104 = vmatprep.subr.mxu0 0.0
  %105 = vmatpush2.msra.mxu0 0.0
  %106 = vmatprep.subr.mxu0 0.0
  %107 = vmatpush2.msra.mxu0 0.0
  %108 = vmatprep.subr.mxu0 0.0
  %109 = vmatpush2.msra.mxu0 0.0
  %110 = vmatprep.subr.mxu0 0.0
  %111 = vmatpush2.msra.mxu0 0.0
  %112 = vmatprep.subr.mxu0 0.0
  %113 = vmatpush2.msra.mxu0 0.0
  %114 = vmatprep.subr.mxu0 0.0
  %115 = vmatpush2.msra.mxu0 0.0
  %116 = vmatprep.subr.mxu0 0.0
  %117 = vmatpush2.msra.mxu0 0.0
  %118 = vmatprep.subr.mxu0 0.0
  %119 = vmatpush2.msra.mxu0 0.0
  %120 = vmatprep.subr.mxu0 0.0
  %121 = vmatpush2.msra.mxu0 0.0
  %122 = vmatprep.subr.mxu0 0.0
  %123 = vmatpush2.msra.mxu0 0.0
  %124 = vmatprep.mubr.f32.mxu0 0.0
  %125 = vmatmul.mubr.f32.gmra.mxu0 %v26
  %v126 = vpop.f32.mrf.mxu0
  %v127 = vadd.f32 0.0, %v126
  %v128 = vpop.f32.mrf.mxu0
  %v129 = vadd.f32 0.0, %v128
  %130 = vmatprep.mubr.f32.mxu0 0.0
  %131 = vmatmul.mubr.f32.gmra.mxu0 %v27
  %v132 = vpop.f32.mrf.mxu0
  %v133 = vadd.f32 0.0, %v132
  %v134 = vpop.f32.mrf.mxu0
  %v135 = vadd.f32 0.0, %v134
  %136 = vdwg.mxu0
  %v137 = vadd.f32 %v22, %v127
  %v138 = vadd.f32 %v23, %v129
  %v139 = vadd.f32 %v24, %v133
  %v140 = vadd.f32 %v25, %v135
  %141 = vst [vmem:[#allocation2] sm:$0xff] %v137
  %142 = vst [vmem:[#allocation2 + $0x8] sm:$0xff] %v138
  %143 = vst [vmem:[#allocation2 + $0x10] sm:$0xff] %v139
  %144 = vst [vmem:[#allocation2 + $0x18] sm:$0xff] %v140
  // Predicated region
  $region18: #{full_model_forward.40} parent=0 // pred_check
    %p145 = pneg %p14
  $region19: #{full_model_forward.40} parent=0 // pred_check_branch
    %147 = sbr.rel (%p145) target = $region21
  $region20: #{full_model_forward.40} parent=0 // pred_region
    %v148 = vld [vmem:[#allocation2] sm:$0xff]
    %v149 = vld [vmem:[#allocation2 + $0x8] sm:$0xff]
    %v150 = vld [vmem:[#allocation2 + $0x10] sm:$0xff]
    %v151 = vld [vmem:[#allocation2 + $0x18] sm:$0xff]
    %v152 = vld [vmem:[%s2] sm:$0x3]
    %v154 = vlaneseq
    %v155 = vshrl.u32 %v154, 7
    %v156 = vsub.s32 0, %v155
    %v157 = vrot.slane %v152, %v156
    %v158 = vlaneseq
    %v159 = vshrl.u32 %v158, 7
    %v160 = vsub.s32 1, %v159
    %v161 = vrot.slane %v152, %v160
    %v164 = vadd.f32 %v148, %v157
    %v165 = vadd.f32 %v149, %v161
    %v166 = vadd.f32 %v150, %v157
    %v167 = vadd.f32 %v151, %v161
    %168 = vst [vmem:[%s3] sm:$0xff] %v164
    %169 = vst [vmem:[%s3 + $0x8] sm:$0xff] %v165
    %170 = vst [vmem:[%s3 + $0x10] sm:$0xff] %v166
    %171 = vst [vmem:[%s3 + $0x18] sm:$0xff] %v167
  $region21: #{full_model_forward.40} parent=0 // pred_fallthru
    _
  // Predicated region
  $region22: #{full_model_forward.40} parent=0 // pred_check
    _
  $region23: #{full_model_forward.40} parent=0 // pred_check_branch
    %173 = sbr.rel (0) target = $region25
  $region24: #{full_model_forward.40} parent=0 // pred_region
    _
  $region25: #{full_model_forward.40} parent=0 // pred_fallthru
    _
  // Predicated region
  $region26: #{full_model_forward.40} parent=0 // pred_check
    _
  $region27: #{full_model_forward.40} parent=0 // pred_check_branch
    %175 = sbr.rel (0) target = $region29
  $region28: #{full_model_forward.40} parent=0 // pred_region
    _
  $region29: #{full_model_forward.40} parent=0 // pred_fallthru
    _

// kernel: full_model_forward.53
$region0: #{full_model_forward.53}
  #allocation0 [shape = 'u32[]', space=smem, size = 0x4, offset = 0x4, fixed_abs, tag = 'smem constant byte address 0x4 - core index']
  #allocation1 [shape = 'u32[144,128]{1,0:T(1,128)}', space=vmem, size = 0x12000, scoped, tag = 'internal scratch']
  %s0 = inlined_call_operand.vmem [shape: f32[16,128], index: 0, kind: input, shape index: {}]
  %s1 = inlined_call_operand.vmem [shape: f32[128,128], index: 1, kind: input, shape index: {}]
  %s2 = inlined_call_operand.vmem [shape: f32[1,128], index: 2, kind: input, shape index: {}]
  %s3 = inlined_call_operand.vmem [shape: f32[16,128], index: 3, kind: output, shape index: {}]
  %s4 = sld [smem:[#allocation0]]
  $region22: #{full_model_forward.53} parent=0
    _
  %s6 = ssub.s32 1, %s4
  %s7 = scalar_select 0, %s6, %s4
  // Predicated region
  $region2: #{full_model_forward.53} parent=0 // pred_check
    _
  $region3: #{full_model_forward.53} parent=0 // pred_check_branch
    %9 = sbr.rel (0) target = $region5
  $region4: #{full_model_forward.53} parent=0 // pred_region
    _
  $region5: #{full_model_forward.53} parent=0 // pred_fallthru
    _
  // Predicated region
  $region6: #{full_model_forward.53} parent=0 // pred_check
    _
  $region7: #{full_model_forward.53} parent=0 // pred_check_branch
    %11 = sbr.rel (0) target = $region9
  $region8: #{full_model_forward.53} parent=0 // pred_region
    _
  $region9: #{full_model_forward.53} parent=0 // pred_fallthru
    _
  // Predicated region
  $region10: #{full_model_forward.53} parent=0 // pred_check
    _
  $region11: #{full_model_forward.53} parent=0 // pred_check_branch
    %13 = sbr.rel (0) target = $region13
  $region12: #{full_model_forward.53} parent=0 // pred_region
    _
  $region13: #{full_model_forward.53} parent=0 // pred_fallthru
    _
  %v14 = vld [vmem:[%s0] sm:$0xff]
  %v15 = vld [vmem:[%s0 + $0x8] sm:$0xff]
  %v16 = vld [vmem:[%s1] sm:$0xff]
  %v17 = vld [vmem:[%s1 + $0x8] sm:$0xff]
  %v18 = vld [vmem:[%s1 + $0x10] sm:$0xff]
  %v19 = vld [vmem:[%s1 + $0x18] sm:$0xff]
  %v20 = vld [vmem:[%s1 + $0x20] sm:$0xff]
  %v21 = vld [vmem:[%s1 + $0x28] sm:$0xff]
  %v22 = vld [vmem:[%s1 + $0x30] sm:$0xff]
  %v23 = vld [vmem:[%s1 + $0x38] sm:$0xff]
  %v24 = vld [vmem:[%s1 + $0x40] sm:$0xff]
  %v25 = vld [vmem:[%s1 + $0x48] sm:$0xff]
  %v26 = vld [vmem:[%s1 + $0x50] sm:$0xff]
  %v27 = vld [vmem:[%s1 + $0x58] sm:$0xff]
  %v28 = vld [vmem:[%s1 + $0x60] sm:$0xff]
  %v29 = vld [vmem:[%s1 + $0x68] sm:$0xff]
  %v30 = vld [vmem:[%s1 + $0x70] sm:$0xff]
  %v31 = vld [vmem:[%s1 + $0x78] sm:$0xff]
  %v32 = vld [vmem:[%s2] sm:$0x1]
  %v34 = vlaneseq
  %v35 = vshrl.u32 %v34, 7
  %v36 = vsub.s32 0, %v35
  %v37 = vrot.slane %v32, %v36
  %39 = vmatprep.subr.mxu0 0.0
  %40 = vmatpush1.msra.mxu0 %v31
  %41 = vmatprep.subr.mxu0 0.0
  %42 = vmatpush1.msra.mxu0 %v30
  %43 = vmatprep.subr.mxu0 0.0
  %44 = vmatpush1.msra.mxu0 %v29
  %45 = vmatprep.subr.mxu0 0.0
  %46 = vmatpush1.msra.mxu0 %v28
  %47 = vmatprep.subr.mxu0 0.0
  %48 = vmatpush1.msra.mxu0 %v27
  %49 = vmatprep.subr.mxu0 0.0
  %50 = vmatpush1.msra.mxu0 %v26
  %51 = vmatprep.subr.mxu0 0.0
  %52 = vmatpush1.msra.mxu0 %v25
  %53 = vmatprep.subr.mxu0 0.0
  %54 = vmatpush1.msra.mxu0 %v24
  %55 = vmatprep.subr.mxu0 0.0
  %56 = vmatpush1.msra.mxu0 %v23
  %57 = vmatprep.subr.mxu0 0.0
  %58 = vmatpush1.msra.mxu0 %v22
  %59 = vmatprep.subr.mxu0 0.0
  %60 = vmatpush1.msra.mxu0 %v21
  %61 = vmatprep.subr.mxu0 0.0
  %62 = vmatpush1.msra.mxu0 %v20
  %63 = vmatprep.subr.mxu0 0.0
  %64 = vmatpush1.msra.mxu0 %v19
  %65 = vmatprep.subr.mxu0 0.0
  %66 = vmatpush1.msra.mxu0 %v18
  %67 = vmatprep.subr.mxu0 0.0
  %68 = vmatpush1.msra.mxu0 %v17
  %69 = vmatprep.subr.mxu0 0.0
  %70 = vmatpush1.msra.mxu0 %v16
  %71 = vmatprep.subr.mxu0 0.0
  %72 = vmatpush2.msra.mxu0 0.0
  %73 = vmatprep.subr.mxu0 0.0
  %74 = vmatpush2.msra.mxu0 0.0
  %75 = vmatprep.subr.mxu0 0.0
  %76 = vmatpush2.msra.mxu0 0.0
  %77 = vmatprep.subr.mxu0 0.0
  %78 = vmatpush2.msra.mxu0 0.0
  %79 = vmatprep.subr.mxu0 0.0
  %80 = vmatpush2.msra.mxu0 0.0
  %81 = vmatprep.subr.mxu0 0.0
  %82 = vmatpush2.msra.mxu0 0.0
  %83 = vmatprep.subr.mxu0 0.0
  %84 = vmatpush2.msra.mxu0 0.0
  %85 = vmatprep.subr.mxu0 0.0
  %86 = vmatpush2.msra.mxu0 0.0
  %87 = vmatprep.subr.mxu0 0.0
  %88 = vmatpush2.msra.mxu0 0.0
  %89 = vmatprep.subr.mxu0 0.0
  %90 = vmatpush2.msra.mxu0 0.0
  %91 = vmatprep.subr.mxu0 0.0
  %92 = vmatpush2.msra.mxu0 0.0
  %93 = vmatprep.subr.mxu0 0.0
  %94 = vmatpush2.msra.mxu0 0.0
  %95 = vmatprep.subr.mxu0 0.0
  %96 = vmatpush2.msra.mxu0 0.0
  %97 = vmatprep.subr.mxu0 0.0
  %98 = vmatpush2.msra.mxu0 0.0
  %99 = vmatprep.subr.mxu0 0.0
  %100 = vmatpush2.msra.mxu0 0.0
  %101 = vmatprep.subr.mxu0 0.0
  %102 = vmatpush2.msra.mxu0 0.0
  %103 = vmatprep.mubr.f32.mxu0 0.0
  %104 = vmatmul.mubr.f32.gmra.mxu0 %v14
  %v105 = vpop.f32.mrf.mxu0
  %v106 = vadd.f32 %v37, %v105
  %v107 = vpop.f32.mrf.mxu0
  %108 = vmatprep.mubr.f32.mxu0 0.0
  %109 = vmatmul.mubr.f32.gmra.mxu0 %v15
  %v110 = vpop.f32.mrf.mxu0
  %v111 = vadd.f32 %v37, %v110
  %v112 = vpop.f32.mrf.mxu0
  %113 = vdwg.mxu0
  %114 = vmax.xlane.f32.xlu0 %v106
  %v115 = vpop.xlane.xlu0 %114
  %116 = vmax.xlane.f32.xlu0 %v111
  %v117 = vpop.xlane.xlu0 %116
  %v118 = vsub.f32 %v106, %v115
  %v119 = vsub.f32 %v111, %v117
  %v120 = vmul.f32 %v118, 1.442695
  %v121 = vpow.pop %v120
  %v122 = vmul.f32 %v119, 1.442695
  %v123 = vpow.pop %v122
  %124 = vadd.xlane.f32.xlu0 %v121
  %v125 = vpop.xlane.xlu0 %124
  %126 = vadd.xlane.f32.xlu0 %v123
  %v127 = vpop.xlane.xlu0 %126
  %v128 = vlog2.pop %v125
  %v129 = vmul.f32 %v128, 0.6931472
  %v130 = vlog2.pop %v127
  %v131 = vmul.f32 %v130, 0.6931472
  %v132 = vsub.f32 %v118, %v129
  %v133 = vsub.f32 %v119, %v131
  %134 = vst [vmem:[%s3] sm:$0xff] %v132
  %135 = vst [vmem:[%s3 + $0x8] sm:$0xff] %v133
  // Predicated region
  $region14: #{full_model_forward.53} parent=0 // pred_check
    _
  $region15: #{full_model_forward.53} parent=0 // pred_check_branch
    %137 = sbr.rel (0) target = $region17
  $region16: #{full_model_forward.53} parent=0 // pred_region
    _
  $region17: #{full_model_forward.53} parent=0 // pred_fallthru
    _
  // Predicated region
  $region18: #{full_model_forward.53} parent=0 // pred_check
    _
  $region19: #{full_model_forward.53} parent=0 // pred_check_branch
    %139 = sbr.rel (0) target = $region21
  $region20: #{full_model_forward.53} parent=0 // pred_region
    _
  $region21: #{full_model_forward.53} parent=0 // pred_fallthru
    _

</llo_original>
